<compile_context>
chip_gen: v5e
topology: v5e:2x2
jax: 0.10.0
libtpu: 0.0.40
codegen_flags: <defaults>
</compile_context>

<pallas_src>
import jax
import jax.numpy as jnp
from jax.experimental import pallas as pl
from jax.experimental.pallas import tpu as pltpu

LN_EPS = 1e-5          # PyTorch nn.LayerNorm default
H1, H2 = 512, 256      # hidden sizes from the module
NC_PAD = 128           # fc3 output padded to a full lane width

# Packed vector layout:
#   [b1, g1, be1, rb1, rg1, rbe1]  (H1 each)
#   [b2, g2, be2, rb2, rg2, rbe2]  (H2 each)
#   [b3_padded]                    (NC_PAD)
_VEC_SIZES = [H1] * 6 + [H2] * 6 + [NC_PAD]
_VEC_OFFS = [0]
for _s in _VEC_SIZES[:-1]:
    _VEC_OFFS.append(_VEC_OFFS[-1] + _s)
VEC_TOTAL = _VEC_OFFS[-1] + _VEC_SIZES[-1]


def _layernorm(h, g, b):
    """One-pass LayerNorm: var = E[h^2] - mu^2 (single pair of lane reductions)."""
    n = h.shape[-1]
    s = jnp.sum(h, axis=-1, keepdims=True)
    s2 = jnp.sum(h * h, axis=-1, keepdims=True)
    mu = s / n
    var = jnp.maximum(s2 / n - mu * mu, 0.0)
    return (h - mu) * jax.lax.rsqrt(var + LN_EPS) * g + b


def legal_classifier_kernel(x_ref, w1_ref, rw1_ref, w2_ref, rw2_ref, w3_ref,
                            vec_ref, out_ref):
    def vs(i):  # static slice of the packed bias/gamma/beta vector -> (1, n)
        off, sz = _VEC_OFFS[i], _VEC_SIZES[i]
        return vec_ref[:, off:off + sz]

    b1, g1, be1, rb1, rg1, rbe1 = (vs(i) for i in range(6))
    b2, g2, be2, rb2, rg2, rbe2 = (vs(i) for i in range(6, 12))
    b3 = vs(12)

    def mm(a, w_ref):
        # bf16 operands on the MXU, f32 accumulation.
        return jnp.dot(a.astype(jnp.bfloat16), w_ref[...],
                       preferred_element_type=jnp.float32)

    x = x_ref[...].astype(jnp.float32)

    # x = relu(norm1(fc1(x)))
    h1 = jnp.maximum(_layernorm(mm(x, w1_ref) + b1, g1, be1), 0.0)
    # x = residual1(x) + x   (Linear -> ReLU -> LayerNorm -> Dropout[identity])
    r1 = _layernorm(jnp.maximum(mm(h1, rw1_ref) + rb1, 0.0), rg1, rbe1)
    h1 = r1 + h1
    # x = relu(norm2(fc2(x)))
    h2 = jnp.maximum(_layernorm(mm(h1, w2_ref) + b2, g2, be2), 0.0)
    # x = residual2(x) + x
    r2 = _layernorm(jnp.maximum(mm(h2, rw2_ref) + rb2, 0.0), rg2, rbe2)
    h2 = r2 + h2
    # x = dropout(x) -> identity; fc3 (padded to 128 lanes)
    out_ref[...] = (mm(h2, w3_ref) + b3).astype(out_ref.dtype)


def legal_classifier_forward(x, params, num_classes, *, tb=128):
    """x: (B, input_dim) float32. Returns (B, num_classes) float32."""
    B, input_dim = x.shape
    tb = min(tb, B)
    grid_b = pl.cdiv(B, tb)

    args = (x, params["w1"], params["rw1"], params["w2"], params["rw2"],
            params["w3"], params["vec"])

    in_specs = [pl.BlockSpec((tb, input_dim), lambda i: (i, 0))]
    # Weights / packed vector: full block, constant index_map -> resident in VMEM.
    in_specs += [pl.BlockSpec(a.shape, lambda i: (0, 0)) for a in args[1:]]
    out_specs = pl.BlockSpec((tb, NC_PAD), lambda i: (i, 0))

    flops = 2 * B * (input_dim * H1 + H1 * H1 + H1 * H2 + H2 * H2 + H2 * NC_PAD)
    bytes_accessed = (x.size * x.dtype.itemsize
                      + sum(a.size * a.dtype.itemsize for a in args[1:])
                      + B * NC_PAD * 4)

    out = pl.pallas_call(
        legal_classifier_kernel,
        out_shape=jax.ShapeDtypeStruct((B, NC_PAD), jnp.float32),
        grid=(grid_b,),
        in_specs=in_specs,
        out_specs=out_specs,
        compiler_params=pltpu.CompilerParams(dimension_semantics=("parallel",)),
        cost_estimate=pl.CostEstimate(flops=flops,
                                      transcendentals=4 * B,
                                      bytes_accessed=bytes_accessed),
    )(*args)
    return out[:, :num_classes]


def init_params(key, input_dim, num_classes):
    """Deterministic synthetic init matching the PyTorch module's shapes."""
    ks = jax.random.split(key, 5)

    def lin(k, fan_in, fan_out):
        scale = 1.0 / jnp.sqrt(jnp.float32(fan_in))
        kw, kb = jax.random.split(k)
        w = jax.random.uniform(kw, (fan_in, fan_out), jnp.float32, -scale, scale)
        b = jax.random.uniform(kb, (fan_out,), jnp.float32, -scale, scale)
        return w, b

    w1, b1 = lin(ks[0], input_dim, H1)
    rw1, rb1 = lin(ks[1], H1, H1)
    w2, b2 = lin(ks[2], H1, H2)
    rw2, rb2 = lin(ks[3], H2, H2)
    w3, b3 = lin(ks[4], H2, num_classes)

    # Pad fc3 to a lane-dense 128-wide output.
    w3p = jnp.zeros((H2, NC_PAD), jnp.float32).at[:, :num_classes].set(w3)
    b3p = jnp.zeros((NC_PAD,), jnp.float32).at[:num_classes].set(b3)

    ones1, zeros1 = jnp.ones((H1,), jnp.float32), jnp.zeros((H1,), jnp.float32)
    ones2, zeros2 = jnp.ones((H2,), jnp.float32), jnp.zeros((H2,), jnp.float32)

    vec = jnp.concatenate([
        b1, ones1, zeros1, rb1, ones1, zeros1,      # fc1/norm1 + residual1
        b2, ones2, zeros2, rb2, ones2, zeros2,      # fc2/norm2 + residual2
        b3p,                                        # fc3 bias (padded)
    ])[None, :].astype(jnp.float32)
    assert vec.shape == (1, VEC_TOTAL)

    return {
        "w1": w1.astype(jnp.bfloat16),
        "rw1": rw1.astype(jnp.bfloat16),
        "w2": w2.astype(jnp.bfloat16),
        "rw2": rw2.astype(jnp.bfloat16),
        "w3": w3p.astype(jnp.bfloat16),
        "vec": vec,
    }


def reference_forward(x, p, num_classes):
    """Pure-JAX reference mirroring the kernel math (bf16 matmuls, f32 accum)."""
    vec = p["vec"][0]

    def vs(i):
        return vec[_VEC_OFFS[i]:_VEC_OFFS[i] + _VEC_SIZES[i]]

    def mm(a, w):
        return jnp.dot(a.astype(jnp.bfloat16), w,
                       preferred_element_type=jnp.float32)

    def ln(h, g, b):
        mu = jnp.mean(h, axis=-1, keepdims=True)
        var = jnp.maximum(jnp.mean(h * h, axis=-1, keepdims=True) - mu * mu, 0.0)
        return (h - mu) * jax.lax.rsqrt(var + LN_EPS) * g + b

    h1 = jnp.maximum(ln(mm(x, p["w1"]) + vs(0), vs(1), vs(2)), 0.0)
    r1 = ln(jnp.maximum(mm(h1, p["rw1"]) + vs(3), 0.0), vs(4), vs(5))
    h1 = r1 + h1
    h2 = jnp.maximum(ln(mm(h1, p["w2"]) + vs(6), vs(7), vs(8)), 0.0)
    r2 = ln(jnp.maximum(mm(h2, p["rw2"]) + vs(9), 0.0), vs(10), vs(11))
    h2 = r2 + h2
    return (mm(h2, p["w3"]) + vs(12))[:, :num_classes]


if __name__ == "__main__":
    B, INPUT_DIM, NUM_CLASSES = 256, 128, 10   # 2 batch tiles of 128 rows

    key = jax.random.PRNGKey(0)
    kx, kp = jax.random.split(key)
    x = jax.random.normal(kx, (B, INPUT_DIM), jnp.float32)
    params = init_params(kp, INPUT_DIM, NUM_CLASSES)

    out = legal_classifier_forward(x, params, NUM_CLASSES, tb=128)
    out = jax.block_until_ready(out)

    ref = reference_forward(x, params, NUM_CLASSES)
    assert out.shape == (B, NUM_CLASSES)
    assert jnp.allclose(out, ref, atol=2e-2, rtol=2e-2), "mismatch vs reference"

    print("KERNEL_OK")
</pallas_src>

<mosaic_0001>
module attributes {stable_mosaic.version = 11 : i64} {
  func.func @legal_classifier_kernel(%arg0: i32, %arg1: memref<128x128xf32, #tpu.memory_space<vmem>>, %arg2: memref<128x512xbf16, #tpu.memory_space<vmem>>, %arg3: memref<512x512xbf16, #tpu.memory_space<vmem>>, %arg4: memref<512x256xbf16, #tpu.memory_space<vmem>>, %arg5: memref<256x256xbf16, #tpu.memory_space<vmem>>, %arg6: memref<256x128xbf16, #tpu.memory_space<vmem>>, %arg7: memref<1x4736xf32, #tpu.memory_space<vmem>>, %arg8: memref<128x128xf32, #tpu.memory_space<vmem>>) attributes {dimension_semantics = [#tpu.dimension_semantics<parallel>], iteration_bounds = array<i64: 2>, scalar_prefetch = 0 : i64, scratch_operands = 0 : i64, tpu.core_type = #tpu.core_type<tc>, window_params = [{transform_indices = @transform_0, window_bounds = array<i64: 128, 128>}, {pipeline_mode = #tpu.pipeline_mode<synchronous>, transform_indices = @transform_1, window_bounds = array<i64: 128, 512>}, {pipeline_mode = #tpu.pipeline_mode<synchronous>, transform_indices = @transform_2, window_bounds = array<i64: 512, 512>}, {pipeline_mode = #tpu.pipeline_mode<synchronous>, transform_indices = @transform_3, window_bounds = array<i64: 512, 256>}, {pipeline_mode = #tpu.pipeline_mode<synchronous>, transform_indices = @transform_4, window_bounds = array<i64: 256, 256>}, {pipeline_mode = #tpu.pipeline_mode<synchronous>, transform_indices = @transform_5, window_bounds = array<i64: 256, 128>}, {pipeline_mode = #tpu.pipeline_mode<synchronous>, transform_indices = @transform_6, window_bounds = array<i64: 1, 4736>}, {transform_indices = @transform_7, window_bounds = array<i64: 128, 128>}]} {
    %c0 = arith.constant 0 : index
    %c0_0 = arith.constant 0 : index
    %0 = vector.load %arg7[%c0, %c0_0] : memref<1x4736xf32, #tpu.memory_space<vmem>>, vector<1x512xf32>
    %c0_1 = arith.constant 0 : index
    %c512 = arith.constant 512 : index
    %1 = vector.load %arg7[%c0_1, %c512] : memref<1x4736xf32, #tpu.memory_space<vmem>>, vector<1x512xf32>
    %c0_2 = arith.constant 0 : index
    %c1024 = arith.constant 1024 : index
    %2 = vector.load %arg7[%c0_2, %c1024] : memref<1x4736xf32, #tpu.memory_space<vmem>>, vector<1x512xf32>
    %c0_3 = arith.constant 0 : index
    %c1536 = arith.constant 1536 : index
    %3 = vector.load %arg7[%c0_3, %c1536] : memref<1x4736xf32, #tpu.memory_space<vmem>>, vector<1x512xf32>
    %c0_4 = arith.constant 0 : index
    %c2048 = arith.constant 2048 : index
    %4 = vector.load %arg7[%c0_4, %c2048] : memref<1x4736xf32, #tpu.memory_space<vmem>>, vector<1x512xf32>
    %c0_5 = arith.constant 0 : index
    %c2560 = arith.constant 2560 : index
    %5 = vector.load %arg7[%c0_5, %c2560] : memref<1x4736xf32, #tpu.memory_space<vmem>>, vector<1x512xf32>
    %c0_6 = arith.constant 0 : index
    %c3072 = arith.constant 3072 : index
    %6 = vector.load %arg7[%c0_6, %c3072] : memref<1x4736xf32, #tpu.memory_space<vmem>>, vector<1x256xf32>
    %c0_7 = arith.constant 0 : index
    %c3328 = arith.constant 3328 : index
    %7 = vector.load %arg7[%c0_7, %c3328] : memref<1x4736xf32, #tpu.memory_space<vmem>>, vector<1x256xf32>
    %c0_8 = arith.constant 0 : index
    %c3584 = arith.constant 3584 : index
    %8 = vector.load %arg7[%c0_8, %c3584] : memref<1x4736xf32, #tpu.memory_space<vmem>>, vector<1x256xf32>
    %c0_9 = arith.constant 0 : index
    %c3840 = arith.constant 3840 : index
    %9 = vector.load %arg7[%c0_9, %c3840] : memref<1x4736xf32, #tpu.memory_space<vmem>>, vector<1x256xf32>
    %c0_10 = arith.constant 0 : index
    %c4096 = arith.constant 4096 : index
    %10 = vector.load %arg7[%c0_10, %c4096] : memref<1x4736xf32, #tpu.memory_space<vmem>>, vector<1x256xf32>
    %c0_11 = arith.constant 0 : index
    %c4352 = arith.constant 4352 : index
    %11 = vector.load %arg7[%c0_11, %c4352] : memref<1x4736xf32, #tpu.memory_space<vmem>>, vector<1x256xf32>
    %c0_12 = arith.constant 0 : index
    %c4608 = arith.constant 4608 : index
    %12 = vector.load %arg7[%c0_12, %c4608] : memref<1x4736xf32, #tpu.memory_space<vmem>>, vector<1x128xf32>
    %c0_13 = arith.constant 0 : index
    %c0_14 = arith.constant 0 : index
    %13 = vector.load %arg1[%c0_13, %c0_14] : memref<128x128xf32, #tpu.memory_space<vmem>>, vector<128x128xf32>
    %14 = arith.truncf %13 : vector<128x128xf32> to vector<128x128xbf16>
    %c0_15 = arith.constant 0 : index
    %c0_16 = arith.constant 0 : index
    %15 = vector.load %arg2[%c0_15, %c0_16] : memref<128x512xbf16, #tpu.memory_space<vmem>>, vector<128x512xbf16>
    %cst = arith.constant dense<0.000000e+00> : vector<128x512xf32>
    %16 = tpu.matmul %14, %15, %cst {dimension_numbers = #tpu.dot_dimension_numbers<[1], [0], [0], [1], [0, 0, 1, 1], [], []>} : vector<128x128xbf16>, vector<128x512xbf16>, vector<128x512xf32> -> vector<128x512xf32>
    %17 = vector.broadcast %0 : vector<1x512xf32> to vector<128x512xf32>
    %18 = arith.addf %16, %17 : vector<128x512xf32>
    %cst_17 = arith.constant dense<0.000000e+00> : vector<128xf32>
    %19 = vector.multi_reduction <add>, %18, %cst_17 [1] : vector<128x512xf32> to vector<128xf32>
    %20 = vector.shape_cast %19 : vector<128xf32> to vector<128x1xf32>
    %21 = arith.mulf %18, %18 : vector<128x512xf32>
    %cst_18 = arith.constant dense<0.000000e+00> : vector<128xf32>
    %22 = vector.multi_reduction <add>, %21, %cst_18 [1] : vector<128x512xf32> to vector<128xf32>
    %23 = vector.shape_cast %22 : vector<128xf32> to vector<128x1xf32>
    %cst_19 = arith.constant 5.120000e+02 : f32
    %24 = vector.broadcast %cst_19 : f32 to vector<128x1xf32>
    %25 = arith.divf %20, %24 : vector<128x1xf32>
    %cst_20 = arith.constant 5.120000e+02 : f32
    %26 = vector.broadcast %cst_20 : f32 to vector<128x1xf32>
    %27 = arith.divf %23, %26 : vector<128x1xf32>
    %28 = arith.mulf %25, %25 : vector<128x1xf32>
    %29 = arith.subf %27, %28 : vector<128x1xf32>
    %cst_21 = arith.constant 0.000000e+00 : f32
    %30 = vector.broadcast %cst_21 : f32 to vector<128x1xf32>
    %31 = arith.maximumf %29, %30 : vector<128x1xf32>
    %32 = vector.broadcast %25 : vector<128x1xf32> to vector<128x512xf32>
    %33 = arith.subf %18, %32 : vector<128x512xf32>
    %cst_22 = arith.constant 9.99999974E-6 : f32
    %34 = vector.broadcast %cst_22 : f32 to vector<128x1xf32>
    %35 = arith.addf %31, %34 : vector<128x1xf32>
    %36 = math.rsqrt %35 : vector<128x1xf32>
    %37 = vector.broadcast %36 : vector<128x1xf32> to vector<128x512xf32>
    %38 = arith.mulf %33, %37 : vector<128x512xf32>
    %39 = vector.broadcast %1 : vector<1x512xf32> to vector<128x512xf32>
    %40 = arith.mulf %38, %39 : vector<128x512xf32>
    %41 = vector.broadcast %2 : vector<1x512xf32> to vector<128x512xf32>
    %42 = arith.addf %40, %41 : vector<128x512xf32>
    %cst_23 = arith.constant 0.000000e+00 : f32
    %43 = vector.broadcast %cst_23 : f32 to vector<128x512xf32>
    %44 = arith.maximumf %42, %43 : vector<128x512xf32>
    %45 = arith.truncf %44 : vector<128x512xf32> to vector<128x512xbf16>
    %c0_24 = arith.constant 0 : index
    %c0_25 = arith.constant 0 : index
    %46 = vector.load %arg3[%c0_24, %c0_25] : memref<512x512xbf16, #tpu.memory_space<vmem>>, vector<512x512xbf16>
    %cst_26 = arith.constant dense<0.000000e+00> : vector<128x512xf32>
    %47 = tpu.matmul %45, %46, %cst_26 {dimension_numbers = #tpu.dot_dimension_numbers<[1], [0], [0], [1], [0, 0, 1, 1], [], []>} : vector<128x512xbf16>, vector<512x512xbf16>, vector<128x512xf32> -> vector<128x512xf32>
    %48 = vector.broadcast %3 : vector<1x512xf32> to vector<128x512xf32>
    %49 = arith.addf %47, %48 : vector<128x512xf32>
    %cst_27 = arith.constant 0.000000e+00 : f32
    %50 = vector.broadcast %cst_27 : f32 to vector<128x512xf32>
    %51 = arith.maximumf %49, %50 : vector<128x512xf32>
    %cst_28 = arith.constant dense<0.000000e+00> : vector<128xf32>
    %52 = vector.multi_reduction <add>, %51, %cst_28 [1] : vector<128x512xf32> to vector<128xf32>
    %53 = vector.shape_cast %52 : vector<128xf32> to vector<128x1xf32>
    %54 = arith.mulf %51, %51 : vector<128x512xf32>
    %cst_29 = arith.constant dense<0.000000e+00> : vector<128xf32>
    %55 = vector.multi_reduction <add>, %54, %cst_29 [1] : vector<128x512xf32> to vector<128xf32>
    %56 = vector.shape_cast %55 : vector<128xf32> to vector<128x1xf32>
    %cst_30 = arith.constant 5.120000e+02 : f32
    %57 = vector.broadcast %cst_30 : f32 to vector<128x1xf32>
    %58 = arith.divf %53, %57 : vector<128x1xf32>
    %cst_31 = arith.constant 5.120000e+02 : f32
    %59 = vector.broadcast %cst_31 : f32 to vector<128x1xf32>
    %60 = arith.divf %56, %59 : vector<128x1xf32>
    %61 = arith.mulf %58, %58 : vector<128x1xf32>
    %62 = arith.subf %60, %61 : vector<128x1xf32>
    %cst_32 = arith.constant 0.000000e+00 : f32
    %63 = vector.broadcast %cst_32 : f32 to vector<128x1xf32>
    %64 = arith.maximumf %62, %63 : vector<128x1xf32>
    %65 = vector.broadcast %58 : vector<128x1xf32> to vector<128x512xf32>
    %66 = arith.subf %51, %65 : vector<128x512xf32>
    %cst_33 = arith.constant 9.99999974E-6 : f32
    %67 = vector.broadcast %cst_33 : f32 to vector<128x1xf32>
    %68 = arith.addf %64, %67 : vector<128x1xf32>
    %69 = math.rsqrt %68 : vector<128x1xf32>
    %70 = vector.broadcast %69 : vector<128x1xf32> to vector<128x512xf32>
    %71 = arith.mulf %66, %70 : vector<128x512xf32>
    %72 = vector.broadcast %4 : vector<1x512xf32> to vector<128x512xf32>
    %73 = arith.mulf %71, %72 : vector<128x512xf32>
    %74 = vector.broadcast %5 : vector<1x512xf32> to vector<128x512xf32>
    %75 = arith.addf %73, %74 : vector<128x512xf32>
    %76 = arith.addf %75, %44 : vector<128x512xf32>
    %77 = arith.truncf %76 : vector<128x512xf32> to vector<128x512xbf16>
    %c0_34 = arith.constant 0 : index
    %c0_35 = arith.constant 0 : index
    %78 = vector.load %arg4[%c0_34, %c0_35] : memref<512x256xbf16, #tpu.memory_space<vmem>>, vector<512x256xbf16>
    %cst_36 = arith.constant dense<0.000000e+00> : vector<128x256xf32>
    %79 = tpu.matmul %77, %78, %cst_36 {dimension_numbers = #tpu.dot_dimension_numbers<[1], [0], [0], [1], [0, 0, 1, 1], [], []>} : vector<128x512xbf16>, vector<512x256xbf16>, vector<128x256xf32> -> vector<128x256xf32>
    %80 = vector.broadcast %6 : vector<1x256xf32> to vector<128x256xf32>
    %81 = arith.addf %79, %80 : vector<128x256xf32>
    %cst_37 = arith.constant dense<0.000000e+00> : vector<128xf32>
    %82 = vector.multi_reduction <add>, %81, %cst_37 [1] : vector<128x256xf32> to vector<128xf32>
    %83 = vector.shape_cast %82 : vector<128xf32> to vector<128x1xf32>
    %84 = arith.mulf %81, %81 : vector<128x256xf32>
    %cst_38 = arith.constant dense<0.000000e+00> : vector<128xf32>
    %85 = vector.multi_reduction <add>, %84, %cst_38 [1] : vector<128x256xf32> to vector<128xf32>
    %86 = vector.shape_cast %85 : vector<128xf32> to vector<128x1xf32>
    %cst_39 = arith.constant 2.560000e+02 : f32
    %87 = vector.broadcast %cst_39 : f32 to vector<128x1xf32>
    %88 = arith.divf %83, %87 : vector<128x1xf32>
    %cst_40 = arith.constant 2.560000e+02 : f32
    %89 = vector.broadcast %cst_40 : f32 to vector<128x1xf32>
    %90 = arith.divf %86, %89 : vector<128x1xf32>
    %91 = arith.mulf %88, %88 : vector<128x1xf32>
    %92 = arith.subf %90, %91 : vector<128x1xf32>
    %cst_41 = arith.constant 0.000000e+00 : f32
    %93 = vector.broadcast %cst_41 : f32 to vector<128x1xf32>
    %94 = arith.maximumf %92, %93 : vector<128x1xf32>
    %95 = vector.broadcast %88 : vector<128x1xf32> to vector<128x256xf32>
    %96 = arith.subf %81, %95 : vector<128x256xf32>
    %cst_42 = arith.constant 9.99999974E-6 : f32
    %97 = vector.broadcast %cst_42 : f32 to vector<128x1xf32>
    %98 = arith.addf %94, %97 : vector<128x1xf32>
    %99 = math.rsqrt %98 : vector<128x1xf32>
    %100 = vector.broadcast %99 : vector<128x1xf32> to vector<128x256xf32>
    %101 = arith.mulf %96, %100 : vector<128x256xf32>
    %102 = vector.broadcast %7 : vector<1x256xf32> to vector<128x256xf32>
    %103 = arith.mulf %101, %102 : vector<128x256xf32>
    %104 = vector.broadcast %8 : vector<1x256xf32> to vector<128x256xf32>
    %105 = arith.addf %103, %104 : vector<128x256xf32>
    %cst_43 = arith.constant 0.000000e+00 : f32
    %106 = vector.broadcast %cst_43 : f32 to vector<128x256xf32>
    %107 = arith.maximumf %105, %106 : vector<128x256xf32>
    %108 = arith.truncf %107 : vector<128x256xf32> to vector<128x256xbf16>
    %c0_44 = arith.constant 0 : index
    %c0_45 = arith.constant 0 : index
    %109 = vector.load %arg5[%c0_44, %c0_45] : memref<256x256xbf16, #tpu.memory_space<vmem>>, vector<256x256xbf16>
    %cst_46 = arith.constant dense<0.000000e+00> : vector<128x256xf32>
    %110 = tpu.matmul %108, %109, %cst_46 {dimension_numbers = #tpu.dot_dimension_numbers<[1], [0], [0], [1], [0, 0, 1, 1], [], []>} : vector<128x256xbf16>, vector<256x256xbf16>, vector<128x256xf32> -> vector<128x256xf32>
    %111 = vector.broadcast %9 : vector<1x256xf32> to vector<128x256xf32>
    %112 = arith.addf %110, %111 : vector<128x256xf32>
    %cst_47 = arith.constant 0.000000e+00 : f32
    %113 = vector.broadcast %cst_47 : f32 to vector<128x256xf32>
    %114 = arith.maximumf %112, %113 : vector<128x256xf32>
    %cst_48 = arith.constant dense<0.000000e+00> : vector<128xf32>
    %115 = vector.multi_reduction <add>, %114, %cst_48 [1] : vector<128x256xf32> to vector<128xf32>
    %116 = vector.shape_cast %115 : vector<128xf32> to vector<128x1xf32>
    %117 = arith.mulf %114, %114 : vector<128x256xf32>
    %cst_49 = arith.constant dense<0.000000e+00> : vector<128xf32>
    %118 = vector.multi_reduction <add>, %117, %cst_49 [1] : vector<128x256xf32> to vector<128xf32>
    %119 = vector.shape_cast %118 : vector<128xf32> to vector<128x1xf32>
    %cst_50 = arith.constant 2.560000e+02 : f32
    %120 = vector.broadcast %cst_50 : f32 to vector<128x1xf32>
    %121 = arith.divf %116, %120 : vector<128x1xf32>
    %cst_51 = arith.constant 2.560000e+02 : f32
    %122 = vector.broadcast %cst_51 : f32 to vector<128x1xf32>
    %123 = arith.divf %119, %122 : vector<128x1xf32>
    %124 = arith.mulf %121, %121 : vector<128x1xf32>
    %125 = arith.subf %123, %124 : vector<128x1xf32>
    %cst_52 = arith.constant 0.000000e+00 : f32
    %126 = vector.broadcast %cst_52 : f32 to vector<128x1xf32>
    %127 = arith.maximumf %125, %126 : vector<128x1xf32>
    %128 = vector.broadcast %121 : vector<128x1xf32> to vector<128x256xf32>
    %129 = arith.subf %114, %128 : vector<128x256xf32>
    %cst_53 = arith.constant 9.99999974E-6 : f32
    %130 = vector.broadcast %cst_53 : f32 to vector<128x1xf32>
    %131 = arith.addf %127, %130 : vector<128x1xf32>
    %132 = math.rsqrt %131 : vector<128x1xf32>
    %133 = vector.broadcast %132 : vector<128x1xf32> to vector<128x256xf32>
    %134 = arith.mulf %129, %133 : vector<128x256xf32>
    %135 = vector.broadcast %10 : vector<1x256xf32> to vector<128x256xf32>
    %136 = arith.mulf %134, %135 : vector<128x256xf32>
    %137 = vector.broadcast %11 : vector<1x256xf32> to vector<128x256xf32>
    %138 = arith.addf %136, %137 : vector<128x256xf32>
    %139 = arith.addf %138, %107 : vector<128x256xf32>
    %140 = arith.truncf %139 : vector<128x256xf32> to vector<128x256xbf16>
    %c0_54 = arith.constant 0 : index
    %c0_55 = arith.constant 0 : index
    %141 = vector.load %arg6[%c0_54, %c0_55] : memref<256x128xbf16, #tpu.memory_space<vmem>>, vector<256x128xbf16>
    %cst_56 = arith.constant dense<0.000000e+00> : vector<128x128xf32>
    %142 = tpu.matmul %140, %141, %cst_56 {dimension_numbers = #tpu.dot_dimension_numbers<[1], [0], [0], [1], [0, 0, 1, 1], [], []>} : vector<128x256xbf16>, vector<256x128xbf16>, vector<128x128xf32> -> vector<128x128xf32>
    %143 = vector.broadcast %12 : vector<1x128xf32> to vector<128x128xf32>
    %144 = arith.addf %142, %143 : vector<128x128xf32>
    %c0_57 = arith.constant 0 : index
    %c0_58 = arith.constant 0 : index
    %145 = vector.load %arg8[%c0_57, %c0_58] : memref<128x128xf32, #tpu.memory_space<vmem>>, vector<128x128xf32>
    tpu.vector_store %arg8[%c0_57, %c0_58], %144 {strides = array<i32>} : memref<128x128xf32, #tpu.memory_space<vmem>>, vector<128x128xf32>,
    return
  }
  func.func @transform_0(%arg0: i32) -> (i32, i32) {
    %c0_i32 = arith.constant 0 : i32
    %c0_i32_0 = arith.constant 0 : i32
    return %arg0, %c0_i32 : i32, i32
  }
  func.func @transform_1(%arg0: i32) -> (i32, i32) {
    %c0_i32 = arith.constant 0 : i32
    %c0_i32_0 = arith.constant 0 : i32
    %c0_i32_1 = arith.constant 0 : i32
    return %c0_i32, %c0_i32_0 : i32, i32
  }
  func.func @transform_2(%arg0: i32) -> (i32, i32) {
    %c0_i32 = arith.constant 0 : i32
    %c0_i32_0 = arith.constant 0 : i32
    %c0_i32_1 = arith.constant 0 : i32
    return %c0_i32, %c0_i32_0 : i32, i32
  }
  func.func @transform_3(%arg0: i32) -> (i32, i32) {
    %c0_i32 = arith.constant 0 : i32
    %c0_i32_0 = arith.constant 0 : i32
    %c0_i32_1 = arith.constant 0 : i32
    return %c0_i32, %c0_i32_0 : i32, i32
  }
  func.func @transform_4(%arg0: i32) -> (i32, i32) {
    %c0_i32 = arith.constant 0 : i32
    %c0_i32_0 = arith.constant 0 : i32
    %c0_i32_1 = arith.constant 0 : i32
    return %c0_i32, %c0_i32_0 : i32, i32
  }
  func.func @transform_5(%arg0: i32) -> (i32, i32) {
    %c0_i32 = arith.constant 0 : i32
    %c0_i32_0 = arith.constant 0 : i32
    %c0_i32_1 = arith.constant 0 : i32
    return %c0_i32, %c0_i32_0 : i32, i32
  }
  func.func @transform_6(%arg0: i32) -> (i32, i32) {
    %c0_i32 = arith.constant 0 : i32
    %c0_i32_0 = arith.constant 0 : i32
    %c0_i32_1 = arith.constant 0 : i32
    return %c0_i32, %c0_i32_0 : i32, i32
  }
  func.func @transform_7(%arg0: i32) -> (i32, i32) {
    %c0_i32 = arith.constant 0 : i32
    %c0_i32_0 = arith.constant 0 : i32
    return %arg0, %c0_i32 : i32, i32
  }
}

</mosaic_0001>

<llo_original>
// kernel: tpu_custom_call.1
$region0: #{tpu_custom_call.1}
  #allocation0 [shape = 'u32[]', space=smem, size = 0x4, offset = 0x4, fixed_abs, tag = 'smem constant byte address 0x4 - core index']
  #allocation1 [shape = 'u32[72,128]{1,0:T(1,128)}', space=vmem, size = 0x9000, scoped, tag = 'internal scratch']
  %s0 = inlined_call_operand.hbm [shape: f32[256,128], index: 0, kind: input, shape index: {}]
  %s1 = inlined_call_operand.hbm [shape: bf16[128,512], index: 1, kind: input, shape index: {}]
  %s2 = inlined_call_operand.hbm [shape: bf16[512,512], index: 2, kind: input, shape index: {}]
  %s3 = inlined_call_operand.hbm [shape: bf16[512,256], index: 3, kind: input, shape index: {}]
  %s4 = inlined_call_operand.hbm [shape: bf16[256,256], index: 4, kind: input, shape index: {}]
  %s5 = inlined_call_operand.hbm [shape: bf16[256,128], index: 5, kind: input, shape index: {}]
  %s6 = inlined_call_operand.hbm [shape: f32[1,4736], index: 6, kind: input, shape index: {}]
  %s7 = inlined_call_operand.hbm [shape: f32[256,128], index: 7, kind: output, shape index: {}]
  %s8 = sld [smem:[#allocation0]]
  $region89: #{tpu_custom_call.1} parent=0
    _
  %s10 = ssub.s32 1, %s8
  %s11 = scalar_select 0, %s10, %s8
  $region1: #{tpu_custom_call.1} parent=0
    #allocation2 [shape = 'u8[131072]{0}', space=vmem, size = 0x20000, scoped, tag = 'input window, operand 0']
    #allocation3 [shape = 's32[2]{0}', space=sflag, size = 0x8, scoped, tag = 'scoped memory for tpu_custom_call.1']
    #allocation4 [shape = 's32[2]{0}', space=sflag, size = 0x8, scoped, tag = 'scoped memory for tpu_custom_call.1']
    #allocation5 [shape = 'u8[131072]{0}', space=vmem, size = 0x20000, scoped, tag = 'input window, operand 1, single buffered']
    #allocation6 [shape = 's32[1]{0}', space=sflag, size = 0x4, scoped, tag = 'scoped memory for tpu_custom_call.1']
    #allocation7 [shape = 'u8[524288]{0}', space=vmem, size = 0x80000, scoped, tag = 'input window, operand 2, single buffered']
    #allocation8 [shape = 'u8[262144]{0}', space=vmem, size = 0x40000, scoped, tag = 'input window, operand 3, single buffered']
    #allocation9 [shape = 's32[1]{0}', space=sflag, size = 0x4, scoped, tag = 'scoped memory for tpu_custom_call.1']
    #allocation10 [shape = 'u8[131072]{0}', space=vmem, size = 0x20000, scoped, tag = 'input window, operand 4, single buffered']
    #allocation11 [shape = 'u8[65536]{0}', space=vmem, size = 0x10000, scoped, tag = 'input window, operand 5, single buffered']
    #allocation12 [shape = 's32[1]{0}', space=sflag, size = 0x4, scoped, tag = 'scoped memory for tpu_custom_call.1']
    #allocation13 [shape = 'u8[18944]{0}', space=vmem, size = 0x4c00, scoped, tag = 'input window, operand 6, single buffered']
    #allocation14 [shape = 'u8[131072]{0}', space=vmem, size = 0x20000, scoped, tag = 'output window, operand 0']
    %12 = vsyncpa [#allocation3], 0
    %s13 = scalar_lea.sflag [#allocation3], 1
    %14 = vsyncpa %s13, 0
    %15 = vsyncpa [#allocation6], 0
    %16 = vsyncpa [#allocation9], 0
    %17 = vsyncpa [#allocation12], 0
    %18 = vsyncpa [#allocation4], 0
    %s19 = scalar_lea.sflag [#allocation4], 1
    %20 = vsyncpa %s19, 0
    loop: start=0, step=1, limit=4
    $region2: #{tpu_custom_call.1} parent=1 // loop_pre_header
      _
    $region3: #{tpu_custom_call.1} parent=1 // loop_header
      %s22 = sphi 0, %s26
      %p23 = scmp.ge.s32.totalorder %s22, 4
      %s32 = sphi 0, %s34
      %s35 = sphi 0, %s32
      %s36 = sphi 0, %s35
      %s52 = sphi 0, %s36
      %s56 = sphi 0, %s56
      %s58 = sphi 0, %s56
      %s59 = sphi 0, %s58
      %s73 = sphi 0, %s59
      %s77 = sphi 0, %s77
      %s79 = sphi 0, %s77
      %s80 = sphi 0, %s79
      %s94 = sphi 0, %s80
      %s98 = sphi 0, %s98
      %s100 = sphi 0, %s98
      %s101 = sphi 0, %s100
      %s115 = sphi 0, %s101
      %s119 = sphi 0, %s119
      %s121 = sphi 0, %s119
      %s122 = sphi 0, %s121
      %s136 = sphi 0, %s122
      %s140 = sphi 0, %s140
      %s142 = sphi 0, %s140
      %s143 = sphi 0, %s142
      %s157 = sphi 0, %s143
      %s161 = sphi 0, %s161
      %s163 = sphi 0, %s161
      %s164 = sphi 0, %s163
      %s178 = sphi 0, %s164
      %s184 = sphi 0, %s186
      %s187 = sphi 0, %s184
      %s188 = sphi 0, %s187
      %s204 = sphi 0, %s188
    $region4: #{tpu_custom_call.1} parent=1 // loop_header_branch
      %25 = sbr.rel (%p23) target = $region8
    $region5: #{tpu_custom_call.1} parent=1 // loop_body
      %s27 = ssub.s32 %s22, 1
      %s28 = ssub.s32 %s22, 2
      %s29 = sadd.s32 %s22, 1
      %s30 = ssub.s32 %s22, %s29
      %p31 = scmp.eq.s32.totalorder %s30, 0
      %s33 = sadd.s32 %s32, 1
      %s34 = scalar_select %p31, %s32, %s33
      %p37 = pneg %p31
      %p38 = scmp.eq.s32.totalorder %s22, 1
      %p39 = por %p37, %p38
      %p40 = scmp.ne.s32.totalorder %s32, %s35
      %p41 = scmp.eq.s32.totalorder %s22, 0
      %p42 = por %p40, %p41
      %p43 = scmp.ne.s32.totalorder %s32, %s35
      %p44 = scmp.eq.s32.totalorder %s27, 1
      %p45 = por %p43, %p44
      %p46 = scmp.ne.s32.totalorder %s35, %s36
      %p47 = scmp.eq.s32.totalorder %s27, 0
      %p48 = por %p46, %p47
      %p49 = scmp.ne.s32.totalorder %s35, %s36
      %p50 = scmp.eq.s32.totalorder %s28, 1
      %p51 = por %p49, %p50
      %p53 = scmp.ne.s32.totalorder %s36, %s52
      %p54 = scmp.eq.s32.totalorder %s28, 0
      %p55 = por %p53, %p54
      %s57 = sadd.s32 %s56, 1
      %p60 = scmp.eq.s32.totalorder %s22, 1
      %p61 = scmp.ne.s32.totalorder %s56, %s58
      %p62 = scmp.eq.s32.totalorder %s22, 0
      %p63 = por %p61, %p62
      %p64 = scmp.ne.s32.totalorder %s56, %s58
      %p65 = scmp.eq.s32.totalorder %s27, 1
      %p66 = por %p64, %p65
      %p67 = scmp.ne.s32.totalorder %s58, %s59
      %p68 = scmp.eq.s32.totalorder %s27, 0
      %p69 = por %p67, %p68
      %p70 = scmp.ne.s32.totalorder %s58, %s59
      %p71 = scmp.eq.s32.totalorder %s28, 1
      %p72 = por %p70, %p71
      %p74 = scmp.ne.s32.totalorder %s59, %s73
      %p75 = scmp.eq.s32.totalorder %s28, 0
      %p76 = por %p74, %p75
      %s78 = sadd.s32 %s77, 1
      %p81 = scmp.eq.s32.totalorder %s22, 1
      %p82 = scmp.ne.s32.totalorder %s77, %s79
      %p83 = scmp.eq.s32.totalorder %s22, 0
      %p84 = por %p82, %p83
      %p85 = scmp.ne.s32.totalorder %s77, %s79
      %p86 = scmp.eq.s32.totalorder %s27, 1
      %p87 = por %p85, %p86
      %p88 = scmp.ne.s32.totalorder %s79, %s80
      %p89 = scmp.eq.s32.totalorder %s27, 0
      %p90 = por %p88, %p89
      %p91 = scmp.ne.s32.totalorder %s79, %s80
      %p92 = scmp.eq.s32.totalorder %s28, 1
      %p93 = por %p91, %p92
      %p95 = scmp.ne.s32.totalorder %s80, %s94
      %p96 = scmp.eq.s32.totalorder %s28, 0
      %p97 = por %p95, %p96
      %s99 = sadd.s32 %s98, 1
      %p102 = scmp.eq.s32.totalorder %s22, 1
      %p103 = scmp.ne.s32.totalorder %s98, %s100
      %p104 = scmp.eq.s32.totalorder %s22, 0
      %p105 = por %p103, %p104
      %p106 = scmp.ne.s32.totalorder %s98, %s100
      %p107 = scmp.eq.s32.totalorder %s27, 1
      %p108 = por %p106, %p107
      %p109 = scmp.ne.s32.totalorder %s100, %s101
      %p110 = scmp.eq.s32.totalorder %s27, 0
      %p111 = por %p109, %p110
      %p112 = scmp.ne.s32.totalorder %s100, %s101
      %p113 = scmp.eq.s32.totalorder %s28, 1
      %p114 = por %p112, %p113
      %p116 = scmp.ne.s32.totalorder %s101, %s115
      %p117 = scmp.eq.s32.totalorder %s28, 0
      %p118 = por %p116, %p117
      %s120 = sadd.s32 %s119, 1
      %p123 = scmp.eq.s32.totalorder %s22, 1
      %p124 = scmp.ne.s32.totalorder %s119, %s121
      %p125 = scmp.eq.s32.totalorder %s22, 0
      %p126 = por %p124, %p125
      %p127 = scmp.ne.s32.totalorder %s119, %s121
      %p128 = scmp.eq.s32.totalorder %s27, 1
      %p129 = por %p127, %p128
      %p130 = scmp.ne.s32.totalorder %s121, %s122
      %p131 = scmp.eq.s32.totalorder %s27, 0
      %p132 = por %p130, %p131
      %p133 = scmp.ne.s32.totalorder %s121, %s122
      %p134 = scmp.eq.s32.totalorder %s28, 1
      %p135 = por %p133, %p134
      %p137 = scmp.ne.s32.totalorder %s122, %s136
      %p138 = scmp.eq.s32.totalorder %s28, 0
      %p139 = por %p137, %p138
      %s141 = sadd.s32 %s140, 1
      %p144 = scmp.eq.s32.totalorder %s22, 1
      %p145 = scmp.ne.s32.totalorder %s140, %s142
      %p146 = scmp.eq.s32.totalorder %s22, 0
      %p147 = por %p145, %p146
      %p148 = scmp.ne.s32.totalorder %s140, %s142
      %p149 = scmp.eq.s32.totalorder %s27, 1
      %p150 = por %p148, %p149
      %p151 = scmp.ne.s32.totalorder %s142, %s143
      %p152 = scmp.eq.s32.totalorder %s27, 0
      %p153 = por %p151, %p152
      %p154 = scmp.ne.s32.totalorder %s142, %s143
      %p155 = scmp.eq.s32.totalorder %s28, 1
      %p156 = por %p154, %p155
      %p158 = scmp.ne.s32.totalorder %s143, %s157
      %p159 = scmp.eq.s32.totalorder %s28, 0
      %p160 = por %p158, %p159
      %s162 = sadd.s32 %s161, 1
      %p165 = scmp.eq.s32.totalorder %s22, 1
      %p166 = scmp.ne.s32.totalorder %s161, %s163
      %p167 = scmp.eq.s32.totalorder %s22, 0
      %p168 = por %p166, %p167
      %p169 = scmp.ne.s32.totalorder %s161, %s163
      %p170 = scmp.eq.s32.totalorder %s27, 1
      %p171 = por %p169, %p170
      %p172 = scmp.ne.s32.totalorder %s163, %s164
      %p173 = scmp.eq.s32.totalorder %s27, 0
      %p174 = por %p172, %p173
      %p175 = scmp.ne.s32.totalorder %s163, %s164
      %p176 = scmp.eq.s32.totalorder %s28, 1
      %p177 = por %p175, %p176
      %p179 = scmp.ne.s32.totalorder %s164, %s178
      %p180 = scmp.eq.s32.totalorder %s28, 0
      %p181 = por %p179, %p180
      %s182 = ssub.s32 %s22, %s29
      %p183 = scmp.eq.s32.totalorder %s182, 0
      %s185 = sadd.s32 %s184, 1
      %s186 = scalar_select %p183, %s184, %s185
      %p189 = pneg %p183
      %p190 = scmp.eq.s32.totalorder %s22, 1
      %p191 = por %p189, %p190
      %p192 = scmp.ne.s32.totalorder %s184, %s187
      %p193 = scmp.eq.s32.totalorder %s22, 0
      %p194 = por %p192, %p193
      %p195 = scmp.ne.s32.totalorder %s184, %s187
      %p196 = scmp.eq.s32.totalorder %s27, 1
      %p197 = por %p195, %p196
      %p198 = scmp.ne.s32.totalorder %s187, %s188
      %p199 = scmp.eq.s32.totalorder %s27, 0
      %p200 = por %p198, %p199
      %p201 = scmp.ne.s32.totalorder %s187, %s188
      %p202 = scmp.eq.s32.totalorder %s28, 1
      %p203 = por %p201, %p202
      %p205 = scmp.ne.s32.totalorder %s188, %s204
      %p206 = scmp.eq.s32.totalorder %s28, 0
      %p207 = por %p205, %p206
      %p208 = scmp.le.s32.totalorder 1, %s22
      %p209 = scmp.lt.s32.totalorder %s22, 3
      %p210 = pnand %p208, %p209
      %p211 = pneg %p210
      // Predicated region
      $region9: #{tpu_custom_call.1} parent=5 // pred_check
        _
      $region10: #{tpu_custom_call.1} parent=5 // pred_check_branch
        %213 = sbr.rel (%p210) target = $region12
      $region11: #{tpu_custom_call.1} parent=5 // pred_region
        %s214 = ssub.s32 %s22, 1
        // Predicated region
        $region13: #{tpu_custom_call.1} parent=11 // pred_check
          %p215 = pneg %p69
        $region14: #{tpu_custom_call.1} parent=11 // pred_check_branch
          %217 = sbr.rel (%p215) target = $region16
        $region15: #{tpu_custom_call.1} parent=11 // pred_region
          %219 = vsyncadd [#allocation6], 0
          %s220 = sshll.u32 %s1, 4
          %s221 = int_to_ptr.hbm [resolvable:$true] %s220
          %s222 = sshll.u32 [#allocation5], 4
          %s223 = int_to_ptr.vmem [resolvable:$true] %s222
          %228 = dma.hbm_to_vmem [thread:$0]  %s221, 4096, %s223, [#allocation6], 256, 256, 16
        $region16: #{tpu_custom_call.1} parent=11 // pred_fallthru
          _
        // Predicated region
        $region17: #{tpu_custom_call.1} parent=11 // pred_check
          %p229 = pneg %p90
        $region18: #{tpu_custom_call.1} parent=11 // pred_check_branch
          %231 = sbr.rel (%p229) target = $region20
        $region19: #{tpu_custom_call.1} parent=11 // pred_region
          %233 = vsyncadd [#allocation6], 0
          %s234 = sshll.u32 %s2, 4
          %s235 = int_to_ptr.hbm [resolvable:$true] %s234
          %s236 = sshll.u32 [#allocation7], 4
          %s237 = int_to_ptr.vmem [resolvable:$true] %s236
          %242 = dma.hbm_to_vmem [thread:$0]  %s235, 16384, %s237, [#allocation6], 256, 256, 16
        $region20: #{tpu_custom_call.1} parent=11 // pred_fallthru
          _
        // Predicated region
        $region21: #{tpu_custom_call.1} parent=11 // pred_check
          %p243 = pneg %p111
        $region22: #{tpu_custom_call.1} parent=11 // pred_check_branch
          %245 = sbr.rel (%p243) target = $region24
        $region23: #{tpu_custom_call.1} parent=11 // pred_region
          %247 = vsyncadd [#allocation9], 0
          %s248 = sshll.u32 %s3, 4
          %s249 = int_to_ptr.hbm [resolvable:$true] %s248
          %s250 = sshll.u32 [#allocation8], 4
          %s251 = int_to_ptr.vmem [resolvable:$true] %s250
          %256 = dma.hbm_to_vmem [thread:$0]  %s249, 8192, %s251, [#allocation9], 128, 128, 8
        $region24: #{tpu_custom_call.1} parent=11 // pred_fallthru
          _
        // Predicated region
        $region25: #{tpu_custom_call.1} parent=11 // pred_check
          %p257 = pneg %p132
        $region26: #{tpu_custom_call.1} parent=11 // pred_check_branch
          %259 = sbr.rel (%p257) target = $region28
        $region27: #{tpu_custom_call.1} parent=11 // pred_region
          %261 = vsyncadd [#allocation9], 0
          %s262 = sshll.u32 %s4, 4
          %s263 = int_to_ptr.hbm [resolvable:$true] %s262
          %s264 = sshll.u32 [#allocation10], 4
          %s265 = int_to_ptr.vmem [resolvable:$true] %s264
          %270 = dma.hbm_to_vmem [thread:$0]  %s263, 4096, %s265, [#allocation9], 128, 128, 8
        $region28: #{tpu_custom_call.1} parent=11 // pred_fallthru
          _
        // Predicated region
        $region29: #{tpu_custom_call.1} parent=11 // pred_check
          %p271 = pneg %p153
        $region30: #{tpu_custom_call.1} parent=11 // pred_check_branch
          %273 = sbr.rel (%p271) target = $region32
        $region31: #{tpu_custom_call.1} parent=11 // pred_region
          %275 = vsyncadd [#allocation12], 0
          %s276 = sshll.u32 %s5, 4
          %s277 = int_to_ptr.hbm [resolvable:$true] %s276
          %s278 = sshll.u32 [#allocation11], 4
          %s279 = int_to_ptr.vmem [resolvable:$true] %s278
          %284 = dma.hbm_to_vmem [thread:$0]  %s277, 2048, %s279, [#allocation12], 64, 64, 4
        $region32: #{tpu_custom_call.1} parent=11 // pred_fallthru
          _
        // Predicated region
        $region33: #{tpu_custom_call.1} parent=11 // pred_check
          %p285 = pneg %p174
        $region34: #{tpu_custom_call.1} parent=11 // pred_check_branch
          %287 = sbr.rel (%p285) target = $region36
        $region35: #{tpu_custom_call.1} parent=11 // pred_region
          %289 = vsyncadd [#allocation12], 0
          %s291 = sshll.u32 %s6, 4
          %s292 = int_to_ptr.hbm [resolvable:$true] %s291
          %s293 = sshll.u32 [#allocation13], 4
          %s294 = int_to_ptr.vmem [resolvable:$true] %s293
          %296 = dma.hbm_to_vmem [thread:$0]  %s292, 592, %s294, [#allocation12]
        $region36: #{tpu_custom_call.1} parent=11 // pred_fallthru
          _
      $region12: #{tpu_custom_call.1} parent=5 // pred_fallthru
        _
      %p297 = scmp.lt.s32.totalorder %s22, 2
      // Predicated region
      $region37: #{tpu_custom_call.1} parent=5 // pred_check
        %p298 = pneg %p297
      $region38: #{tpu_custom_call.1} parent=5 // pred_check_branch
        %300 = sbr.rel (%p298) target = $region40
      $region39: #{tpu_custom_call.1} parent=5 // pred_region
        // Predicated region
        $region41: #{tpu_custom_call.1} parent=39 // pred_check
          %p301 = pneg %p42
        $region42: #{tpu_custom_call.1} parent=39 // pred_check_branch
          %303 = sbr.rel (%p301) target = $region44
        $region43: #{tpu_custom_call.1} parent=39 // pred_region
          %s304 = sand.u32 %s32, 1
          %s305 = scalar_lea.sflag [#allocation3], %s304
          %s306 = sand.u32 %s32, 1
          %s307 = smul.addr %s306, 128
          %s308 = scalar_lea.vmem [#allocation2], %s307
          %s309 = smul.u32 16, %s22
          %311 = vsyncadd %s305, 0
          %s312 = smul.addr %s309, 8
          %s313 = scalar_lea.hbm %s0, %s312
          %s314 = sshll.u32 %s313, 4
          %s315 = int_to_ptr.hbm [resolvable:$true] %s314
          %s316 = sshll.u32 %s308, 4
          %s317 = int_to_ptr.vmem [resolvable:$true] %s316
          %322 = dma.hbm_to_vmem [thread:$0]  %s315, 2048, %s317, %s305, 128, 128, 8
        $region44: #{tpu_custom_call.1} parent=39 // pred_fallthru
          _
      $region40: #{tpu_custom_call.1} parent=5 // pred_fallthru
        _
      %p323 = scmp.le.s32.totalorder 1, %s22
      %p324 = scmp.lt.s32.totalorder %s22, 3
      %p325 = pnand %p323, %p324
      %p326 = pneg %p325
      // Predicated region
      $region45: #{tpu_custom_call.1} parent=5 // pred_check
        _
      $region46: #{tpu_custom_call.1} parent=5 // pred_check_branch
        %328 = sbr.rel (%p325) target = $region48
      $region47: #{tpu_custom_call.1} parent=5 // pred_region
        %s329 = ssub.s32 %s22, 1
        %s330 = sand.u32 %s35, 1
        %s331 = scalar_lea.sflag [#allocation3], %s330
        %s332 = sand.u32 %s35, 1
        %s333 = smul.addr %s332, 128
        %s334 = scalar_lea.vmem [#allocation2], %s333
        // Predicated region
        $region49: #{tpu_custom_call.1} parent=47 // pred_check
          %p335 = pneg %p48
        $region50: #{tpu_custom_call.1} parent=47 // pred_check_branch
          %337 = sbr.rel (%p335) target = $region52
        $region51: #{tpu_custom_call.1} parent=47 // pred_region
          %339 = dma.done %s331, 2048
        $region52: #{tpu_custom_call.1} parent=47 // pred_fallthru
          _
        // Predicated region
        $region53: #{tpu_custom_call.1} parent=47 // pred_check
          %p340 = pneg %p69
        $region54: #{tpu_custom_call.1} parent=47 // pred_check_branch
          %342 = sbr.rel (%p340) target = $region56
        $region55: #{tpu_custom_call.1} parent=47 // pred_region
          %344 = dma.done [#allocation6], 4096
        $region56: #{tpu_custom_call.1} parent=47 // pred_fallthru
          _
        // Predicated region
        $region57: #{tpu_custom_call.1} parent=47 // pred_check
          %p345 = pneg %p90
        $region58: #{tpu_custom_call.1} parent=47 // pred_check_branch
          %347 = sbr.rel (%p345) target = $region60
        $region59: #{tpu_custom_call.1} parent=47 // pred_region
          %349 = dma.done [#allocation6], 16384
        $region60: #{tpu_custom_call.1} parent=47 // pred_fallthru
          _
        // Predicated region
        $region61: #{tpu_custom_call.1} parent=47 // pred_check
          %p350 = pneg %p111
        $region62: #{tpu_custom_call.1} parent=47 // pred_check_branch
          %352 = sbr.rel (%p350) target = $region64
        $region63: #{tpu_custom_call.1} parent=47 // pred_region
          %354 = dma.done [#allocation9], 8192
        $region64: #{tpu_custom_call.1} parent=47 // pred_fallthru
          _
        // Predicated region
        $region65: #{tpu_custom_call.1} parent=47 // pred_check
          %p355 = pneg %p132
        $region66: #{tpu_custom_call.1} parent=47 // pred_check_branch
          %357 = sbr.rel (%p355) target = $region68
        $region67: #{tpu_custom_call.1} parent=47 // pred_region
          %359 = dma.done [#allocation9], 4096
        $region68: #{tpu_custom_call.1} parent=47 // pred_fallthru
          _
        // Predicated region
        $region69: #{tpu_custom_call.1} parent=47 // pred_check
          %p360 = pneg %p153
        $region70: #{tpu_custom_call.1} parent=47 // pred_check_branch
          %362 = sbr.rel (%p360) target = $region72
        $region71: #{tpu_custom_call.1} parent=47 // pred_region
          %364 = dma.done [#allocation12], 2048
        $region72: #{tpu_custom_call.1} parent=47 // pred_fallthru
          _
        // Predicated region
        $region73: #{tpu_custom_call.1} parent=47 // pred_check
          %p365 = pneg %p174
        $region74: #{tpu_custom_call.1} parent=47 // pred_check_branch
          %367 = sbr.rel (%p365) target = $region76
        $region75: #{tpu_custom_call.1} parent=47 // pred_region
          %369 = dma.done [#allocation12], 592
        $region76: #{tpu_custom_call.1} parent=47 // pred_fallthru
          _
        %s370 = sand.u32 %s35, 1
        %s371 = scalar_lea.sflag [#allocation3], %s370
        %s372 = sand.u32 %s35, 1
        %s373 = smul.addr %s372, 128
        %s374 = scalar_lea.vmem [#allocation2], %s373
        %p375 = pneg %p48
        %p376 = pneg %p45
        %p377 = pneg %p69
        %p378 = pneg %p66
        %p379 = pneg %p90
        %p380 = pneg %p87
        %p381 = pneg %p111
        %p382 = pneg %p108
        %p383 = pneg %p132
        %p384 = pneg %p129
        %p385 = pneg %p153
        %p386 = pneg %p150
        %p387 = pneg %p174
        %p388 = pneg %p171
        %p389 = pneg %p200
        %p390 = pneg %p197
        %s391 = sand.u32 %s187, 1
        %s392 = scalar_lea.sflag [#allocation4], %s391
        %s393 = sand.u32 %s187, 1
        %s394 = smul.addr %s393, 128
        %s395 = scalar_lea.vmem [#allocation14], %s394
        %s396 = smul.u32 16, %s27
        %s397 = smul.u32 16, %s27
        %v398 = vld [vmem:[#allocation13] sm:$0xf]
        %v399 = vld [vmem:[#allocation13 + $0x4] sm:$0xf]
        %v400 = vld [vmem:[#allocation13 + $0x8] sm:$0xf]
        %v401 = vld [vmem:[#allocation13 + $0xc] sm:$0xf]
        %v402 = vld [vmem:[#allocation13 + $0x10] sm:$0xf]
        %v403 = vld [vmem:[#allocation13 + $0x14] sm:$0xf]
        %v404 = vld [vmem:[#allocation13 + $0x18] sm:$0x3]
        %v405 = vld [vmem:[#allocation13 + $0x1a] sm:$0x3]
        %v406 = vld [vmem:[#allocation13 + $0x1c] sm:$0x3]
        %v407 = vld [vmem:[#allocation13 + $0x1e] sm:$0x3]
        %v408 = vld [vmem:[#allocation13 + $0x20] sm:$0x3]
        %v409 = vld [vmem:[#allocation13 + $0x22] sm:$0x3]
        %v410 = vld [vmem:[#allocation13 + $0x24] sm:$0x1]
        %v411 = vld [vmem:[%s334] sm:$0xff]
        %v412 = vld [vmem:[%s334 + $0x8] sm:$0xff]
        %v413 = vld [vmem:[%s334 + $0x10] sm:$0xff]
        %v414 = vld [vmem:[%s334 + $0x18] sm:$0xff]
        %v415 = vld [vmem:[%s334 + $0x20] sm:$0xff]
        %v416 = vld [vmem:[%s334 + $0x28] sm:$0xff]
        %v417 = vld [vmem:[%s334 + $0x30] sm:$0xff]
        %v418 = vld [vmem:[%s334 + $0x38] sm:$0xff]
        %v419 = vld [vmem:[%s334 + $0x40] sm:$0xff]
        %v420 = vld [vmem:[%s334 + $0x48] sm:$0xff]
        %v421 = vld [vmem:[%s334 + $0x50] sm:$0xff]
        %v422 = vld [vmem:[%s334 + $0x58] sm:$0xff]
        %v423 = vld [vmem:[%s334 + $0x60] sm:$0xff]
        %v424 = vld [vmem:[%s334 + $0x68] sm:$0xff]
        %v425 = vld [vmem:[%s334 + $0x70] sm:$0xff]
        %v426 = vld [vmem:[%s334 + $0x78] sm:$0xff]
        %v427 = vpack.c.bf16 %v412, %v411
        %v428 = vpack.c.bf16 %v414, %v413
        %v429 = vpack.c.bf16 %v416, %v415
        %v430 = vpack.c.bf16 %v418, %v417
        %v431 = vpack.c.bf16 %v420, %v419
        %v432 = vpack.c.bf16 %v422, %v421
        %v433 = vpack.c.bf16 %v424, %v423
        %v434 = vpack.c.bf16 %v426, %v425
        %v435 = vld [vmem:[#allocation5] sm:$0xff]
        %v436 = vld [vmem:[#allocation5 + $0x8] sm:$0xff]
        %v437 = vld [vmem:[#allocation5 + $0x10] sm:$0xff]
        %v438 = vld [vmem:[#allocation5 + $0x18] sm:$0xff]
        %v439 = vld [vmem:[#allocation5 + $0x20] sm:$0xff]
        %v440 = vld [vmem:[#allocation5 + $0x28] sm:$0xff]
        %v441 = vld [vmem:[#allocation5 + $0x30] sm:$0xff]
        %v442 = vld [vmem:[#allocation5 + $0x38] sm:$0xff]
        %v443 = vld [vmem:[#allocation5 + $0x40] sm:$0xff]
        %v444 = vld [vmem:[#allocation5 + $0x48] sm:$0xff]
        %v445 = vld [vmem:[#allocation5 + $0x50] sm:$0xff]
        %v446 = vld [vmem:[#allocation5 + $0x58] sm:$0xff]
        %v447 = vld [vmem:[#allocation5 + $0x60] sm:$0xff]
        %v448 = vld [vmem:[#allocation5 + $0x68] sm:$0xff]
        %v449 = vld [vmem:[#allocation5 + $0x70] sm:$0xff]
        %v450 = vld [vmem:[#allocation5 + $0x78] sm:$0xff]
        %v451 = vld [vmem:[#allocation5 + $0x80] sm:$0xff]
        %v452 = vld [vmem:[#allocation5 + $0x88] sm:$0xff]
        %v453 = vld [vmem:[#allocation5 + $0x90] sm:$0xff]
        %v454 = vld [vmem:[#allocation5 + $0x98] sm:$0xff]
        %v455 = vld [vmem:[#allocation5 + $0xa0] sm:$0xff]
        %v456 = vld [vmem:[#allocation5 + $0xa8] sm:$0xff]
        %v457 = vld [vmem:[#allocation5 + $0xb0] sm:$0xff]
        %v458 = vld [vmem:[#allocation5 + $0xb8] sm:$0xff]
        %v459 = vld [vmem:[#allocation5 + $0xc0] sm:$0xff]
        %v460 = vld [vmem:[#allocation5 + $0xc8] sm:$0xff]
        %v461 = vld [vmem:[#allocation5 + $0xd0] sm:$0xff]
        %v462 = vld [vmem:[#allocation5 + $0xd8] sm:$0xff]
        %v463 = vld [vmem:[#allocation5 + $0xe0] sm:$0xff]
        %v464 = vld [vmem:[#allocation5 + $0xe8] sm:$0xff]
        %v465 = vld [vmem:[#allocation5 + $0xf0] sm:$0xff]
        %v466 = vld [vmem:[#allocation5 + $0xf8] sm:$0xff]
        %v468 = vperm.slane %v398, 0
        %v469 = vperm.slane %v398, 1
        %v470 = vperm.slane %v398, 2
        %v471 = vperm.slane %v398, 3
        %v508 = vunpack.c.l.b16 %v435
        %v509 = vunpack.c.h.b16 %v435
        %v510 = vunpack.c.l.b16 %v436
        %v511 = vunpack.c.h.b16 %v436
        %v512 = vunpack.c.l.b16 %v437
        %v513 = vunpack.c.h.b16 %v437
        %v514 = vunpack.c.l.b16 %v438
        %v515 = vunpack.c.h.b16 %v438
        %v516 = vunpack.c.l.b16 %v439
        %v517 = vunpack.c.h.b16 %v439
        %v518 = vunpack.c.l.b16 %v440
        %v519 = vunpack.c.h.b16 %v440
        %v520 = vunpack.c.l.b16 %v441
        %v521 = vunpack.c.h.b16 %v441
        %v522 = vunpack.c.l.b16 %v442
        %v523 = vunpack.c.h.b16 %v442
        %v524 = vunpack.c.l.b16 %v443
        %v525 = vunpack.c.h.b16 %v443
        %v526 = vunpack.c.l.b16 %v444
        %v527 = vunpack.c.h.b16 %v444
        %v528 = vunpack.c.l.b16 %v445
        %v529 = vunpack.c.h.b16 %v445
        %v530 = vunpack.c.l.b16 %v446
        %v531 = vunpack.c.h.b16 %v446
        %v532 = vunpack.c.l.b16 %v447
        %v533 = vunpack.c.h.b16 %v447
        %v534 = vunpack.c.l.b16 %v448
        %v535 = vunpack.c.h.b16 %v448
        %v536 = vunpack.c.l.b16 %v449
        %v537 = vunpack.c.h.b16 %v449
        %v538 = vunpack.c.l.b16 %v450
        %v539 = vunpack.c.h.b16 %v450
        %v540 = vunpack.c.l.b16 %v451
        %v541 = vunpack.c.h.b16 %v451
        %v542 = vunpack.c.l.b16 %v452
        %v543 = vunpack.c.h.b16 %v452
        %v544 = vunpack.c.l.b16 %v453
        %v545 = vunpack.c.h.b16 %v453
        %v546 = vunpack.c.l.b16 %v454
        %v547 = vunpack.c.h.b16 %v454
        %v548 = vunpack.c.l.b16 %v455
        %v549 = vunpack.c.h.b16 %v455
        %v550 = vunpack.c.l.b16 %v456
        %v551 = vunpack.c.h.b16 %v456
        %v552 = vunpack.c.l.b16 %v457
        %v553 = vunpack.c.h.b16 %v457
        %v554 = vunpack.c.l.b16 %v458
        %v555 = vunpack.c.h.b16 %v458
        %v556 = vunpack.c.l.b16 %v459
        %v557 = vunpack.c.h.b16 %v459
        %v558 = vunpack.c.l.b16 %v460
        %v559 = vunpack.c.h.b16 %v460
        %v560 = vunpack.c.l.b16 %v461
        %v561 = vunpack.c.h.b16 %v461
        %v562 = vunpack.c.l.b16 %v462
        %v563 = vunpack.c.h.b16 %v462
        %v564 = vunpack.c.l.b16 %v463
        %v565 = vunpack.c.h.b16 %v463
        %v566 = vunpack.c.l.b16 %v464
        %v567 = vunpack.c.h.b16 %v464
        %v568 = vunpack.c.l.b16 %v465
        %v569 = vunpack.c.h.b16 %v465
        %v570 = vunpack.c.l.b16 %v466
        %v571 = vunpack.c.h.b16 %v466
        %v572 = vpack.c.b16 %v512, %v508
        %v573 = vpack.c.b16 %v513, %v509
        %v574 = vpack.c.b16 %v514, %v510
        %v575 = vpack.c.b16 %v515, %v511
        %v576 = vpack.c.b16 %v520, %v516
        %v577 = vpack.c.b16 %v521, %v517
        %v578 = vpack.c.b16 %v522, %v518
        %v579 = vpack.c.b16 %v523, %v519
        %v580 = vpack.c.b16 %v528, %v524
        %v581 = vpack.c.b16 %v529, %v525
        %v582 = vpack.c.b16 %v530, %v526
        %v583 = vpack.c.b16 %v531, %v527
        %v584 = vpack.c.b16 %v536, %v532
        %v585 = vpack.c.b16 %v537, %v533
        %v586 = vpack.c.b16 %v538, %v534
        %v587 = vpack.c.b16 %v539, %v535
        %v588 = vpack.c.b16 %v544, %v540
        %v589 = vpack.c.b16 %v545, %v541
        %v590 = vpack.c.b16 %v546, %v542
        %v591 = vpack.c.b16 %v547, %v543
        %v592 = vpack.c.b16 %v552, %v548
        %v593 = vpack.c.b16 %v553, %v549
        %v594 = vpack.c.b16 %v554, %v550
        %v595 = vpack.c.b16 %v555, %v551
        %v596 = vpack.c.b16 %v560, %v556
        %v597 = vpack.c.b16 %v561, %v557
        %v598 = vpack.c.b16 %v562, %v558
        %v599 = vpack.c.b16 %v563, %v559
        %v600 = vpack.c.b16 %v568, %v564
        %v601 = vpack.c.b16 %v569, %v565
        %v602 = vpack.c.b16 %v570, %v566
        %v603 = vpack.c.b16 %v571, %v567
        %636 = vmatpush.bf16.msra.mxu0 %v600
        %637 = vmatpush.bf16.msra.mxu0 %v596
        %638 = vmatpush.bf16.msra.mxu0 %v592
        %639 = vmatpush.bf16.msra.mxu0 %v588
        %640 = vmatpush.bf16.msra.mxu0 %v584
        %641 = vmatpush.bf16.msra.mxu0 %v580
        %642 = vmatpush.bf16.msra.mxu0 %v576
        %643 = vmatpush.bf16.msra.mxu0 %v572
        %644 = vmatmul.bf16.gmra.mxu0 %v427
        %v645 = vpop.f32.mrf.mxu0
        %v646 = vadd.f32 %v468, %v645
        %v647 = vpop.f32.mrf.mxu0
        %v648 = vadd.f32 %v468, %v647
        %649 = vmatmul.bf16.gmra.mxu0 %v428
        %v650 = vpop.f32.mrf.mxu0
        %v651 = vadd.f32 %v468, %v650
        %v652 = vpop.f32.mrf.mxu0
        %v653 = vadd.f32 %v468, %v652
        %654 = vmatmul.bf16.gmra.mxu0 %v429
        %v655 = vpop.f32.mrf.mxu0
        %v656 = vadd.f32 %v468, %v655
        %v657 = vpop.f32.mrf.mxu0
        %v658 = vadd.f32 %v468, %v657
        %659 = vmatmul.bf16.gmra.mxu0 %v430
        %v660 = vpop.f32.mrf.mxu0
        %v661 = vadd.f32 %v468, %v660
        %v662 = vpop.f32.mrf.mxu0
        %v663 = vadd.f32 %v468, %v662
        %664 = vmatmul.bf16.gmra.mxu0 %v431
        %v665 = vpop.f32.mrf.mxu0
        %v666 = vadd.f32 %v468, %v665
        %v667 = vpop.f32.mrf.mxu0
        %v668 = vadd.f32 %v468, %v667
        %669 = vmatmul.bf16.gmra.mxu0 %v432
        %v670 = vpop.f32.mrf.mxu0
        %v671 = vadd.f32 %v468, %v670
        %v672 = vpop.f32.mrf.mxu0
        %v673 = vadd.f32 %v468, %v672
        %674 = vmatmul.bf16.gmra.mxu0 %v433
        %v675 = vpop.f32.mrf.mxu0
        %v676 = vadd.f32 %v468, %v675
        %v677 = vpop.f32.mrf.mxu0
        %v678 = vadd.f32 %v468, %v677
        %679 = vmatmul.bf16.gmra.mxu0 %v434
        %v680 = vpop.f32.mrf.mxu0
        %v681 = vadd.f32 %v468, %v680
        %v682 = vpop.f32.mrf.mxu0
        %v683 = vadd.f32 %v468, %v682
        %684 = vdwg.mxu0
        %685 = vmatpush.bf16.msra.mxu0 %v601
        %686 = vmatpush.bf16.msra.mxu0 %v597
        %687 = vmatpush.bf16.msra.mxu0 %v593
        %688 = vmatpush.bf16.msra.mxu0 %v589
        %689 = vmatpush.bf16.msra.mxu0 %v585
        %690 = vmatpush.bf16.msra.mxu0 %v581
        %691 = vmatpush.bf16.msra.mxu0 %v577
        %692 = vmatpush.bf16.msra.mxu0 %v573
        %693 = vmatmul.bf16.gmra.mxu0 %v427
        %v694 = vpop.f32.mrf.mxu0
        %v695 = vadd.f32 %v469, %v694
        %v696 = vpop.f32.mrf.mxu0
        %v697 = vadd.f32 %v469, %v696
        %698 = vmatmul.bf16.gmra.mxu0 %v428
        %v699 = vpop.f32.mrf.mxu0
        %v700 = vadd.f32 %v469, %v699
        %v701 = vpop.f32.mrf.mxu0
        %v702 = vadd.f32 %v469, %v701
        %703 = vmatmul.bf16.gmra.mxu0 %v429
        %v704 = vpop.f32.mrf.mxu0
        %v705 = vadd.f32 %v469, %v704
        %v706 = vpop.f32.mrf.mxu0
        %v707 = vadd.f32 %v469, %v706
        %708 = vmatmul.bf16.gmra.mxu0 %v430
        %v709 = vpop.f32.mrf.mxu0
        %v710 = vadd.f32 %v469, %v709
        %v711 = vpop.f32.mrf.mxu0
        %v712 = vadd.f32 %v469, %v711
        %713 = vmatmul.bf16.gmra.mxu0 %v431
        %v714 = vpop.f32.mrf.mxu0
        %v715 = vadd.f32 %v469, %v714
        %v716 = vpop.f32.mrf.mxu0
        %v717 = vadd.f32 %v469, %v716
        %718 = vmatmul.bf16.gmra.mxu0 %v432
        %v719 = vpop.f32.mrf.mxu0
        %v720 = vadd.f32 %v469, %v719
        %v721 = vpop.f32.mrf.mxu0
        %v722 = vadd.f32 %v469, %v721
        %723 = vmatmul.bf16.gmra.mxu0 %v433
        %v724 = vpop.f32.mrf.mxu0
        %v725 = vadd.f32 %v469, %v724
        %v726 = vpop.f32.mrf.mxu0
        %v727 = vadd.f32 %v469, %v726
        %728 = vmatmul.bf16.gmra.mxu0 %v434
        %v729 = vpop.f32.mrf.mxu0
        %v730 = vadd.f32 %v469, %v729
        %v731 = vpop.f32.mrf.mxu0
        %v732 = vadd.f32 %v469, %v731
        %733 = vdwg.mxu0
        %734 = vmatpush.bf16.msra.mxu0 %v602
        %735 = vmatpush.bf16.msra.mxu0 %v598
        %736 = vmatpush.bf16.msra.mxu0 %v594
        %737 = vmatpush.bf16.msra.mxu0 %v590
        %738 = vmatpush.bf16.msra.mxu0 %v586
        %739 = vmatpush.bf16.msra.mxu0 %v582
        %740 = vmatpush.bf16.msra.mxu0 %v578
        %741 = vmatpush.bf16.msra.mxu0 %v574
        %742 = vmatmul.bf16.gmra.mxu0 %v427
        %v743 = vpop.f32.mrf.mxu0
        %v744 = vadd.f32 %v470, %v743
        %v745 = vpop.f32.mrf.mxu0
        %v746 = vadd.f32 %v470, %v745
        %747 = vmatmul.bf16.gmra.mxu0 %v428
        %v748 = vpop.f32.mrf.mxu0
        %v749 = vadd.f32 %v470, %v748
        %v750 = vpop.f32.mrf.mxu0
        %v751 = vadd.f32 %v470, %v750
        %752 = vmatmul.bf16.gmra.mxu0 %v429
        %v753 = vpop.f32.mrf.mxu0
        %v754 = vadd.f32 %v470, %v753
        %v755 = vpop.f32.mrf.mxu0
        %v756 = vadd.f32 %v470, %v755
        %757 = vmatmul.bf16.gmra.mxu0 %v430
        %v758 = vpop.f32.mrf.mxu0
        %v759 = vadd.f32 %v470, %v758
        %v760 = vpop.f32.mrf.mxu0
        %v761 = vadd.f32 %v470, %v760
        %762 = vmatmul.bf16.gmra.mxu0 %v431
        %v763 = vpop.f32.mrf.mxu0
        %v764 = vadd.f32 %v470, %v763
        %v765 = vpop.f32.mrf.mxu0
        %v766 = vadd.f32 %v470, %v765
        %767 = vmatmul.bf16.gmra.mxu0 %v432
        %v768 = vpop.f32.mrf.mxu0
        %v769 = vadd.f32 %v470, %v768
        %v770 = vpop.f32.mrf.mxu0
        %v771 = vadd.f32 %v470, %v770
        %772 = vmatmul.bf16.gmra.mxu0 %v433
        %v773 = vpop.f32.mrf.mxu0
        %v774 = vadd.f32 %v470, %v773
        %v775 = vpop.f32.mrf.mxu0
        %v776 = vadd.f32 %v470, %v775
        %777 = vmatmul.bf16.gmra.mxu0 %v434
        %v778 = vpop.f32.mrf.mxu0
        %v779 = vadd.f32 %v470, %v778
        %v780 = vpop.f32.mrf.mxu0
        %v781 = vadd.f32 %v470, %v780
        %782 = vdwg.mxu0
        %783 = vmatpush.bf16.msra.mxu0 %v603
        %784 = vmatpush.bf16.msra.mxu0 %v599
        %785 = vmatpush.bf16.msra.mxu0 %v595
        %786 = vmatpush.bf16.msra.mxu0 %v591
        %787 = vmatpush.bf16.msra.mxu0 %v587
        %788 = vmatpush.bf16.msra.mxu0 %v583
        %789 = vmatpush.bf16.msra.mxu0 %v579
        %790 = vmatpush.bf16.msra.mxu0 %v575
        %791 = vmatmul.bf16.gmra.mxu0 %v427
        %v792 = vpop.f32.mrf.mxu0
        %v793 = vadd.f32 %v471, %v792
        %v794 = vpop.f32.mrf.mxu0
        %v795 = vadd.f32 %v471, %v794
        %796 = vmatmul.bf16.gmra.mxu0 %v428
        %v797 = vpop.f32.mrf.mxu0
        %v798 = vadd.f32 %v471, %v797
        %v799 = vpop.f32.mrf.mxu0
        %v800 = vadd.f32 %v471, %v799
        %801 = vmatmul.bf16.gmra.mxu0 %v429
        %v802 = vpop.f32.mrf.mxu0
        %v803 = vadd.f32 %v471, %v802
        %v804 = vpop.f32.mrf.mxu0
        %v805 = vadd.f32 %v471, %v804
        %806 = vmatmul.bf16.gmra.mxu0 %v430
        %v807 = vpop.f32.mrf.mxu0
        %v808 = vadd.f32 %v471, %v807
        %v809 = vpop.f32.mrf.mxu0
        %v810 = vadd.f32 %v471, %v809
        %811 = vmatmul.bf16.gmra.mxu0 %v431
        %v812 = vpop.f32.mrf.mxu0
        %v813 = vadd.f32 %v471, %v812
        %v814 = vpop.f32.mrf.mxu0
        %v815 = vadd.f32 %v471, %v814
        %816 = vmatmul.bf16.gmra.mxu0 %v432
        %v817 = vpop.f32.mrf.mxu0
        %v818 = vadd.f32 %v471, %v817
        %v819 = vpop.f32.mrf.mxu0
        %v820 = vadd.f32 %v471, %v819
        %821 = vmatmul.bf16.gmra.mxu0 %v433
        %v822 = vpop.f32.mrf.mxu0
        %v823 = vadd.f32 %v471, %v822
        %v824 = vpop.f32.mrf.mxu0
        %v825 = vadd.f32 %v471, %v824
        %826 = vmatmul.bf16.gmra.mxu0 %v434
        %v827 = vpop.f32.mrf.mxu0
        %v828 = vadd.f32 %v471, %v827
        %v829 = vpop.f32.mrf.mxu0
        %v830 = vadd.f32 %v471, %v829
        %831 = vdwg.mxu0
        %v832 = vadd.f32 %v646, %v695
        %v833 = vadd.f32 %v832, %v744
        %v834 = vadd.f32 %v833, %v793
        %835 = vadd.xlane.f32.xlu0 %v834
        %v836 = vpop.xlane.xlu0 %835
        %v837 = vadd.f32 %v648, %v697
        %v838 = vadd.f32 %v837, %v746
        %v839 = vadd.f32 %v838, %v795
        %840 = vadd.xlane.f32.xlu0 %v839
        %v841 = vpop.xlane.xlu0 %840
        %v842 = vadd.f32 %v651, %v700
        %v843 = vadd.f32 %v842, %v749
        %v844 = vadd.f32 %v843, %v798
        %845 = vadd.xlane.f32.xlu0 %v844
        %v846 = vpop.xlane.xlu0 %845
        %v847 = vadd.f32 %v653, %v702
        %v848 = vadd.f32 %v847, %v751
        %v849 = vadd.f32 %v848, %v800
        %850 = vadd.xlane.f32.xlu0 %v849
        %v851 = vpop.xlane.xlu0 %850
        %v852 = vadd.f32 %v656, %v705
        %v853 = vadd.f32 %v852, %v754
        %v854 = vadd.f32 %v853, %v803
        %855 = vadd.xlane.f32.xlu0 %v854
        %v856 = vpop.xlane.xlu0 %855
        %v857 = vadd.f32 %v658, %v707
        %v858 = vadd.f32 %v857, %v756
        %v859 = vadd.f32 %v858, %v805
        %860 = vadd.xlane.f32.xlu0 %v859
        %v861 = vpop.xlane.xlu0 %860
        %v862 = vadd.f32 %v661, %v710
        %v863 = vadd.f32 %v862, %v759
        %v864 = vadd.f32 %v863, %v808
        %865 = vadd.xlane.f32.xlu0 %v864
        %v866 = vpop.xlane.xlu0 %865
        %v867 = vadd.f32 %v663, %v712
        %v868 = vadd.f32 %v867, %v761
        %v869 = vadd.f32 %v868, %v810
        %870 = vadd.xlane.f32.xlu0 %v869
        %v871 = vpop.xlane.xlu0 %870
        %v872 = vadd.f32 %v666, %v715
        %v873 = vadd.f32 %v872, %v764
        %v874 = vadd.f32 %v873, %v813
        %875 = vadd.xlane.f32.xlu0 %v874
        %v876 = vpop.xlane.xlu0 %875
        %v877 = vadd.f32 %v668, %v717
        %v878 = vadd.f32 %v877, %v766
        %v879 = vadd.f32 %v878, %v815
        %880 = vadd.xlane.f32.xlu0 %v879
        %v881 = vpop.xlane.xlu0 %880
        %v882 = vadd.f32 %v671, %v720
        %v883 = vadd.f32 %v882, %v769
        %v884 = vadd.f32 %v883, %v818
        %885 = vadd.xlane.f32.xlu0 %v884
        %v886 = vpop.xlane.xlu0 %885
        %v887 = vadd.f32 %v673, %v722
        %v888 = vadd.f32 %v887, %v771
        %v889 = vadd.f32 %v888, %v820
        %890 = vadd.xlane.f32.xlu0 %v889
        %v891 = vpop.xlane.xlu0 %890
        %v892 = vadd.f32 %v676, %v725
        %v893 = vadd.f32 %v892, %v774
        %v894 = vadd.f32 %v893, %v823
        %895 = vadd.xlane.f32.xlu0 %v894
        %v896 = vpop.xlane.xlu0 %895
        %v897 = vadd.f32 %v678, %v727
        %v898 = vadd.f32 %v897, %v776
        %v899 = vadd.f32 %v898, %v825
        %900 = vadd.xlane.f32.xlu0 %v899
        %v901 = vpop.xlane.xlu0 %900
        %v902 = vadd.f32 %v681, %v730
        %v903 = vadd.f32 %v902, %v779
        %v904 = vadd.f32 %v903, %v828
        %905 = vadd.xlane.f32.xlu0 %v904
        %v906 = vpop.xlane.xlu0 %905
        %v907 = vadd.f32 %v683, %v732
        %v908 = vadd.f32 %v907, %v781
        %v909 = vadd.f32 %v908, %v830
        %910 = vadd.xlane.f32.xlu0 %v909
        %v911 = vpop.xlane.xlu0 %910
        %v912 = vmul.f32 %v646, %v646
        %v913 = vmul.f32 %v695, %v695
        %v914 = vmul.f32 %v744, %v744
        %v915 = vmul.f32 %v793, %v793
        %v916 = vmul.f32 %v648, %v648
        %v917 = vmul.f32 %v697, %v697
        %v918 = vmul.f32 %v746, %v746
        %v919 = vmul.f32 %v795, %v795
        %v920 = vmul.f32 %v651, %v651
        %v921 = vmul.f32 %v700, %v700
        %v922 = vmul.f32 %v749, %v749
        %v923 = vmul.f32 %v798, %v798
        %v924 = vmul.f32 %v653, %v653
        %v925 = vmul.f32 %v702, %v702
        %v926 = vmul.f32 %v751, %v751
        %v927 = vmul.f32 %v800, %v800
        %v928 = vmul.f32 %v656, %v656
        %v929 = vmul.f32 %v705, %v705
        %v930 = vmul.f32 %v754, %v754
        %v931 = vmul.f32 %v803, %v803
        %v932 = vmul.f32 %v658, %v658
        %v933 = vmul.f32 %v707, %v707
        %v934 = vmul.f32 %v756, %v756
        %v935 = vmul.f32 %v805, %v805
        %v936 = vmul.f32 %v661, %v661
        %v937 = vmul.f32 %v710, %v710
        %v938 = vmul.f32 %v759, %v759
        %v939 = vmul.f32 %v808, %v808
        %v940 = vmul.f32 %v663, %v663
        %v941 = vmul.f32 %v712, %v712
        %v942 = vmul.f32 %v761, %v761
        %v943 = vmul.f32 %v810, %v810
        %v944 = vmul.f32 %v666, %v666
        %v945 = vmul.f32 %v715, %v715
        %v946 = vmul.f32 %v764, %v764
        %v947 = vmul.f32 %v813, %v813
        %v948 = vmul.f32 %v668, %v668
        %v949 = vmul.f32 %v717, %v717
        %v950 = vmul.f32 %v766, %v766
        %v951 = vmul.f32 %v815, %v815
        %v952 = vmul.f32 %v671, %v671
        %v953 = vmul.f32 %v720, %v720
        %v954 = vmul.f32 %v769, %v769
        %v955 = vmul.f32 %v818, %v818
        %v956 = vmul.f32 %v673, %v673
        %v957 = vmul.f32 %v722, %v722
        %v958 = vmul.f32 %v771, %v771
        %v959 = vmul.f32 %v820, %v820
        %v960 = vmul.f32 %v676, %v676
        %v961 = vmul.f32 %v725, %v725
        %v962 = vmul.f32 %v774, %v774
        %v963 = vmul.f32 %v823, %v823
        %v964 = vmul.f32 %v678, %v678
        %v965 = vmul.f32 %v727, %v727
        %v966 = vmul.f32 %v776, %v776
        %v967 = vmul.f32 %v825, %v825
        %v968 = vmul.f32 %v681, %v681
        %v969 = vmul.f32 %v730, %v730
        %v970 = vmul.f32 %v779, %v779
        %v971 = vmul.f32 %v828, %v828
        %v972 = vmul.f32 %v683, %v683
        %v973 = vmul.f32 %v732, %v732
        %v974 = vmul.f32 %v781, %v781
        %v975 = vmul.f32 %v830, %v830
        %v976 = vadd.f32 %v912, %v913
        %v977 = vadd.f32 %v976, %v914
        %v978 = vadd.f32 %v977, %v915
        %979 = vadd.xlane.f32.xlu0 %v978
        %v980 = vpop.xlane.xlu0 %979
        %v981 = vadd.f32 %v916, %v917
        %v982 = vadd.f32 %v981, %v918
        %v983 = vadd.f32 %v982, %v919
        %984 = vadd.xlane.f32.xlu0 %v983
        %v985 = vpop.xlane.xlu0 %984
        %v986 = vadd.f32 %v920, %v921
        %v987 = vadd.f32 %v986, %v922
        %v988 = vadd.f32 %v987, %v923
        %989 = vadd.xlane.f32.xlu0 %v988
        %v990 = vpop.xlane.xlu0 %989
        %v991 = vadd.f32 %v924, %v925
        %v992 = vadd.f32 %v991, %v926
        %v993 = vadd.f32 %v992, %v927
        %994 = vadd.xlane.f32.xlu0 %v993
        %v995 = vpop.xlane.xlu0 %994
        %v996 = vadd.f32 %v928, %v929
        %v997 = vadd.f32 %v996, %v930
        %v998 = vadd.f32 %v997, %v931
        %999 = vadd.xlane.f32.xlu0 %v998
        %v1000 = vpop.xlane.xlu0 %999
        %v1001 = vadd.f32 %v932, %v933
        %v1002 = vadd.f32 %v1001, %v934
        %v1003 = vadd.f32 %v1002, %v935
        %1004 = vadd.xlane.f32.xlu0 %v1003
        %v1005 = vpop.xlane.xlu0 %1004
        %v1006 = vadd.f32 %v936, %v937
        %v1007 = vadd.f32 %v1006, %v938
        %v1008 = vadd.f32 %v1007, %v939
        %1009 = vadd.xlane.f32.xlu0 %v1008
        %v1010 = vpop.xlane.xlu0 %1009
        %v1011 = vadd.f32 %v940, %v941
        %v1012 = vadd.f32 %v1011, %v942
        %v1013 = vadd.f32 %v1012, %v943
        %1014 = vadd.xlane.f32.xlu0 %v1013
        %v1015 = vpop.xlane.xlu0 %1014
        %v1016 = vadd.f32 %v944, %v945
        %v1017 = vadd.f32 %v1016, %v946
        %v1018 = vadd.f32 %v1017, %v947
        %1019 = vadd.xlane.f32.xlu0 %v1018
        %v1020 = vpop.xlane.xlu0 %1019
        %v1021 = vadd.f32 %v948, %v949
        %v1022 = vadd.f32 %v1021, %v950
        %v1023 = vadd.f32 %v1022, %v951
        %1024 = vadd.xlane.f32.xlu0 %v1023
        %v1025 = vpop.xlane.xlu0 %1024
        %v1026 = vadd.f32 %v952, %v953
        %v1027 = vadd.f32 %v1026, %v954
        %v1028 = vadd.f32 %v1027, %v955
        %1029 = vadd.xlane.f32.xlu0 %v1028
        %v1030 = vpop.xlane.xlu0 %1029
        %v1031 = vadd.f32 %v956, %v957
        %v1032 = vadd.f32 %v1031, %v958
        %v1033 = vadd.f32 %v1032, %v959
        %1034 = vadd.xlane.f32.xlu0 %v1033
        %v1035 = vpop.xlane.xlu0 %1034
        %v1036 = vadd.f32 %v960, %v961
        %v1037 = vadd.f32 %v1036, %v962
        %v1038 = vadd.f32 %v1037, %v963
        %1039 = vadd.xlane.f32.xlu0 %v1038
        %v1040 = vpop.xlane.xlu0 %1039
        %v1041 = vadd.f32 %v964, %v965
        %v1042 = vadd.f32 %v1041, %v966
        %v1043 = vadd.f32 %v1042, %v967
        %1044 = vadd.xlane.f32.xlu0 %v1043
        %v1045 = vpop.xlane.xlu0 %1044
        %v1046 = vadd.f32 %v968, %v969
        %v1047 = vadd.f32 %v1046, %v970
        %v1048 = vadd.f32 %v1047, %v971
        %1049 = vadd.xlane.f32.xlu0 %v1048
        %v1050 = vpop.xlane.xlu0 %1049
        %v1051 = vadd.f32 %v972, %v973
        %v1052 = vadd.f32 %v1051, %v974
        %v1053 = vadd.f32 %v1052, %v975
        %1054 = vadd.xlane.f32.xlu0 %v1053
        %v1055 = vpop.xlane.xlu0 %1054
        %v1056 = vrcp.pop 512.0
        %v1057 = vmul.f32 512.0, %v1056
        %v1058 = vsub.f32 1.0, %v1057
        %v1059 = vmul.f32 %v1056, %v1058
        %v1060 = vadd.f32 %v1056, %v1059
        %vm1061 = vweird.f32 %v1056
        %v1062 = vsel %vm1061, %v1056, %v1060
        %v1063 = vmul.f32 %v836, %v1062
        %v1064 = vmul.f32 %v841, %v1062
        %v1065 = vmul.f32 %v846, %v1062
        %v1066 = vmul.f32 %v851, %v1062
        %v1067 = vmul.f32 %v856, %v1062
        %v1068 = vmul.f32 %v861, %v1062
        %v1069 = vmul.f32 %v866, %v1062
        %v1070 = vmul.f32 %v871, %v1062
        %v1071 = vmul.f32 %v876, %v1062
        %v1072 = vmul.f32 %v881, %v1062
        %v1073 = vmul.f32 %v886, %v1062
        %v1074 = vmul.f32 %v891, %v1062
        %v1075 = vmul.f32 %v896, %v1062
        %v1076 = vmul.f32 %v901, %v1062
        %v1077 = vmul.f32 %v906, %v1062
        %v1078 = vmul.f32 %v911, %v1062
        %v1079 = vmul.f32 %v980, %v1062
        %v1080 = vmul.f32 %v985, %v1062
        %v1081 = vmul.f32 %v990, %v1062
        %v1082 = vmul.f32 %v995, %v1062
        %v1083 = vmul.f32 %v1000, %v1062
        %v1084 = vmul.f32 %v1005, %v1062
        %v1085 = vmul.f32 %v1010, %v1062
        %v1086 = vmul.f32 %v1015, %v1062
        %v1087 = vmul.f32 %v1020, %v1062
        %v1088 = vmul.f32 %v1025, %v1062
        %v1089 = vmul.f32 %v1030, %v1062
        %v1090 = vmul.f32 %v1035, %v1062
        %v1091 = vmul.f32 %v1040, %v1062
        %v1092 = vmul.f32 %v1045, %v1062
        %v1093 = vmul.f32 %v1050, %v1062
        %v1094 = vmul.f32 %v1055, %v1062
        %v1095 = vmul.f32 %v1063, %v1063
        %v1096 = vmul.f32 %v1064, %v1064
        %v1097 = vmul.f32 %v1065, %v1065
        %v1098 = vmul.f32 %v1066, %v1066
        %v1099 = vmul.f32 %v1067, %v1067
        %v1100 = vmul.f32 %v1068, %v1068
        %v1101 = vmul.f32 %v1069, %v1069
        %v1102 = vmul.f32 %v1070, %v1070
        %v1103 = vmul.f32 %v1071, %v1071
        %v1104 = vmul.f32 %v1072, %v1072
        %v1105 = vmul.f32 %v1073, %v1073
        %v1106 = vmul.f32 %v1074, %v1074
        %v1107 = vmul.f32 %v1075, %v1075
        %v1108 = vmul.f32 %v1076, %v1076
        %v1109 = vmul.f32 %v1077, %v1077
        %v1110 = vmul.f32 %v1078, %v1078
        %v1111 = vsub.f32 %v1079, %v1095
        %v1112 = vsub.f32 %v1080, %v1096
        %v1113 = vsub.f32 %v1081, %v1097
        %v1114 = vsub.f32 %v1082, %v1098
        %v1115 = vsub.f32 %v1083, %v1099
        %v1116 = vsub.f32 %v1084, %v1100
        %v1117 = vsub.f32 %v1085, %v1101
        %v1118 = vsub.f32 %v1086, %v1102
        %v1119 = vsub.f32 %v1087, %v1103
        %v1120 = vsub.f32 %v1088, %v1104
        %v1121 = vsub.f32 %v1089, %v1105
        %v1122 = vsub.f32 %v1090, %v1106
        %v1123 = vsub.f32 %v1091, %v1107
        %v1124 = vsub.f32 %v1092, %v1108
        %v1125 = vsub.f32 %v1093, %v1109
        %v1126 = vsub.f32 %v1094, %v1110
        %v1127 = vmax.f32 %v1111, 0.0
        %v1128 = vmax.f32 %v1112, 0.0
        %v1129 = vmax.f32 %v1113, 0.0
        %v1130 = vmax.f32 %v1114, 0.0
        %v1131 = vmax.f32 %v1115, 0.0
        %v1132 = vmax.f32 %v1116, 0.0
        %v1133 = vmax.f32 %v1117, 0.0
        %v1134 = vmax.f32 %v1118, 0.0
        %v1135 = vmax.f32 %v1119, 0.0
        %v1136 = vmax.f32 %v1120, 0.0
        %v1137 = vmax.f32 %v1121, 0.0
        %v1138 = vmax.f32 %v1122, 0.0
        %v1139 = vmax.f32 %v1123, 0.0
        %v1140 = vmax.f32 %v1124, 0.0
        %v1141 = vmax.f32 %v1125, 0.0
        %v1142 = vmax.f32 %v1126, 0.0
        %v1143 = vsub.f32 %v646, %v1063
        %v1144 = vsub.f32 %v695, %v1063
        %v1145 = vsub.f32 %v744, %v1063
        %v1146 = vsub.f32 %v793, %v1063
        %v1147 = vsub.f32 %v648, %v1064
        %v1148 = vsub.f32 %v697, %v1064
        %v1149 = vsub.f32 %v746, %v1064
        %v1150 = vsub.f32 %v795, %v1064
        %v1151 = vsub.f32 %v651, %v1065
        %v1152 = vsub.f32 %v700, %v1065
        %v1153 = vsub.f32 %v749, %v1065
        %v1154 = vsub.f32 %v798, %v1065
        %v1155 = vsub.f32 %v653, %v1066
        %v1156 = vsub.f32 %v702, %v1066
        %v1157 = vsub.f32 %v751, %v1066
        %v1158 = vsub.f32 %v800, %v1066
        %v1159 = vsub.f32 %v656, %v1067
        %v1160 = vsub.f32 %v705, %v1067
        %v1161 = vsub.f32 %v754, %v1067
        %v1162 = vsub.f32 %v803, %v1067
        %v1163 = vsub.f32 %v658, %v1068
        %v1164 = vsub.f32 %v707, %v1068
        %v1165 = vsub.f32 %v756, %v1068
        %v1166 = vsub.f32 %v805, %v1068
        %v1167 = vsub.f32 %v661, %v1069
        %v1168 = vsub.f32 %v710, %v1069
        %v1169 = vsub.f32 %v759, %v1069
        %v1170 = vsub.f32 %v808, %v1069
        %v1171 = vsub.f32 %v663, %v1070
        %v1172 = vsub.f32 %v712, %v1070
        %v1173 = vsub.f32 %v761, %v1070
        %v1174 = vsub.f32 %v810, %v1070
        %v1175 = vsub.f32 %v666, %v1071
        %v1176 = vsub.f32 %v715, %v1071
        %v1177 = vsub.f32 %v764, %v1071
        %v1178 = vsub.f32 %v813, %v1071
        %v1179 = vsub.f32 %v668, %v1072
        %v1180 = vsub.f32 %v717, %v1072
        %v1181 = vsub.f32 %v766, %v1072
        %v1182 = vsub.f32 %v815, %v1072
        %v1183 = vsub.f32 %v671, %v1073
        %v1184 = vsub.f32 %v720, %v1073
        %v1185 = vsub.f32 %v769, %v1073
        %v1186 = vsub.f32 %v818, %v1073
        %v1187 = vsub.f32 %v673, %v1074
        %v1188 = vsub.f32 %v722, %v1074
        %v1189 = vsub.f32 %v771, %v1074
        %v1190 = vsub.f32 %v820, %v1074
        %v1191 = vsub.f32 %v676, %v1075
        %v1192 = vsub.f32 %v725, %v1075
        %v1193 = vsub.f32 %v774, %v1075
        %v1194 = vsub.f32 %v823, %v1075
        %v1195 = vsub.f32 %v678, %v1076
        %v1196 = vsub.f32 %v727, %v1076
        %v1197 = vsub.f32 %v776, %v1076
        %v1198 = vsub.f32 %v825, %v1076
        %v1199 = vsub.f32 %v681, %v1077
        %v1200 = vsub.f32 %v730, %v1077
        %v1201 = vsub.f32 %v779, %v1077
        %v1202 = vsub.f32 %v828, %v1077
        %v1203 = vsub.f32 %v683, %v1078
        %v1204 = vsub.f32 %v732, %v1078
        %v1205 = vsub.f32 %v781, %v1078
        %v1206 = vsub.f32 %v830, %v1078
        %v1207 = vadd.f32 %v1127, 1e-05
        %v1208 = vadd.f32 %v1128, 1e-05
        %v1209 = vadd.f32 %v1129, 1e-05
        %v1210 = vadd.f32 %v1130, 1e-05
        %v1211 = vadd.f32 %v1131, 1e-05
        %v1212 = vadd.f32 %v1132, 1e-05
        %v1213 = vadd.f32 %v1133, 1e-05
        %v1214 = vadd.f32 %v1134, 1e-05
        %v1215 = vadd.f32 %v1135, 1e-05
        %v1216 = vadd.f32 %v1136, 1e-05
        %v1217 = vadd.f32 %v1137, 1e-05
        %v1218 = vadd.f32 %v1138, 1e-05
        %v1219 = vadd.f32 %v1139, 1e-05
        %v1220 = vadd.f32 %v1140, 1e-05
        %v1221 = vadd.f32 %v1141, 1e-05
        %v1222 = vadd.f32 %v1142, 1e-05
        %v1223 = vrsqrt.pop %v1207
        %v1224 = vmul.f32 %v1223, %v1207
        %v1225 = vmul.f32 %v1224, %v1223
        %v1226 = vmul.f32 0.5, %v1225
        %v1227 = vsub.f32 1.5, %v1226
        %v1228 = vmul.f32 %v1223, %v1227
        %vm1229 = vweird.f32 %v1207
        %vm1230 = vweird.f32 %v1223
        %vm1231 = vmor %vm1229, %vm1230
        %v1232 = vsel %vm1231, %v1223, %v1228
        %v1233 = vrsqrt.pop %v1208
        %v1234 = vmul.f32 %v1233, %v1208
        %v1235 = vmul.f32 %v1234, %v1233
        %v1236 = vmul.f32 0.5, %v1235
        %v1237 = vsub.f32 1.5, %v1236
        %v1238 = vmul.f32 %v1233, %v1237
        %vm1239 = vweird.f32 %v1208
        %vm1240 = vweird.f32 %v1233
        %vm1241 = vmor %vm1239, %vm1240
        %v1242 = vsel %vm1241, %v1233, %v1238
        %v1243 = vrsqrt.pop %v1209
        %v1244 = vmul.f32 %v1243, %v1209
        %v1245 = vmul.f32 %v1244, %v1243
        %v1246 = vmul.f32 0.5, %v1245
        %v1247 = vsub.f32 1.5, %v1246
        %v1248 = vmul.f32 %v1243, %v1247
        %vm1249 = vweird.f32 %v1209
        %vm1250 = vweird.f32 %v1243
        %vm1251 = vmor %vm1249, %vm1250
        %v1252 = vsel %vm1251, %v1243, %v1248
        %v1253 = vrsqrt.pop %v1210
        %v1254 = vmul.f32 %v1253, %v1210
        %v1255 = vmul.f32 %v1254, %v1253
        %v1256 = vmul.f32 0.5, %v1255
        %v1257 = vsub.f32 1.5, %v1256
        %v1258 = vmul.f32 %v1253, %v1257
        %vm1259 = vweird.f32 %v1210
        %vm1260 = vweird.f32 %v1253
        %vm1261 = vmor %vm1259, %vm1260
        %v1262 = vsel %vm1261, %v1253, %v1258
        %v1263 = vrsqrt.pop %v1211
        %v1264 = vmul.f32 %v1263, %v1211
        %v1265 = vmul.f32 %v1264, %v1263
        %v1266 = vmul.f32 0.5, %v1265
        %v1267 = vsub.f32 1.5, %v1266
        %v1268 = vmul.f32 %v1263, %v1267
        %vm1269 = vweird.f32 %v1211
        %vm1270 = vweird.f32 %v1263
        %vm1271 = vmor %vm1269, %vm1270
        %v1272 = vsel %vm1271, %v1263, %v1268
        %v1273 = vrsqrt.pop %v1212
        %v1274 = vmul.f32 %v1273, %v1212
        %v1275 = vmul.f32 %v1274, %v1273
        %v1276 = vmul.f32 0.5, %v1275
        %v1277 = vsub.f32 1.5, %v1276
        %v1278 = vmul.f32 %v1273, %v1277
        %vm1279 = vweird.f32 %v1212
        %vm1280 = vweird.f32 %v1273
        %vm1281 = vmor %vm1279, %vm1280
        %v1282 = vsel %vm1281, %v1273, %v1278
        %v1283 = vrsqrt.pop %v1213
        %v1284 = vmul.f32 %v1283, %v1213
        %v1285 = vmul.f32 %v1284, %v1283
        %v1286 = vmul.f32 0.5, %v1285
        %v1287 = vsub.f32 1.5, %v1286
        %v1288 = vmul.f32 %v1283, %v1287
        %vm1289 = vweird.f32 %v1213
        %vm1290 = vweird.f32 %v1283
        %vm1291 = vmor %vm1289, %vm1290
        %v1292 = vsel %vm1291, %v1283, %v1288
        %v1293 = vrsqrt.pop %v1214
        %v1294 = vmul.f32 %v1293, %v1214
        %v1295 = vmul.f32 %v1294, %v1293
        %v1296 = vmul.f32 0.5, %v1295
        %v1297 = vsub.f32 1.5, %v1296
        %v1298 = vmul.f32 %v1293, %v1297
        %vm1299 = vweird.f32 %v1214
        %vm1300 = vweird.f32 %v1293
        %vm1301 = vmor %vm1299, %vm1300
        %v1302 = vsel %vm1301, %v1293, %v1298
        %v1303 = vrsqrt.pop %v1215
        %v1304 = vmul.f32 %v1303, %v1215
        %v1305 = vmul.f32 %v1304, %v1303
        %v1306 = vmul.f32 0.5, %v1305
        %v1307 = vsub.f32 1.5, %v1306
        %v1308 = vmul.f32 %v1303, %v1307
        %vm1309 = vweird.f32 %v1215
        %vm1310 = vweird.f32 %v1303
        %vm1311 = vmor %vm1309, %vm1310
        %v1312 = vsel %vm1311, %v1303, %v1308
        %v1313 = vrsqrt.pop %v1216
        %v1314 = vmul.f32 %v1313, %v1216
        %v1315 = vmul.f32 %v1314, %v1313
        %v1316 = vmul.f32 0.5, %v1315
        %v1317 = vsub.f32 1.5, %v1316
        %v1318 = vmul.f32 %v1313, %v1317
        %vm1319 = vweird.f32 %v1216
        %vm1320 = vweird.f32 %v1313
        %vm1321 = vmor %vm1319, %vm1320
        %v1322 = vsel %vm1321, %v1313, %v1318
        %v1323 = vrsqrt.pop %v1217
        %v1324 = vmul.f32 %v1323, %v1217
        %v1325 = vmul.f32 %v1324, %v1323
        %v1326 = vmul.f32 0.5, %v1325
        %v1327 = vsub.f32 1.5, %v1326
        %v1328 = vmul.f32 %v1323, %v1327
        %vm1329 = vweird.f32 %v1217
        %vm1330 = vweird.f32 %v1323
        %vm1331 = vmor %vm1329, %vm1330
        %v1332 = vsel %vm1331, %v1323, %v1328
        %v1333 = vrsqrt.pop %v1218
        %v1334 = vmul.f32 %v1333, %v1218
        %v1335 = vmul.f32 %v1334, %v1333
        %v1336 = vmul.f32 0.5, %v1335
        %v1337 = vsub.f32 1.5, %v1336
        %v1338 = vmul.f32 %v1333, %v1337
        %vm1339 = vweird.f32 %v1218
        %vm1340 = vweird.f32 %v1333
        %vm1341 = vmor %vm1339, %vm1340
        %v1342 = vsel %vm1341, %v1333, %v1338
        %v1343 = vrsqrt.pop %v1219
        %v1344 = vmul.f32 %v1343, %v1219
        %v1345 = vmul.f32 %v1344, %v1343
        %v1346 = vmul.f32 0.5, %v1345
        %v1347 = vsub.f32 1.5, %v1346
        %v1348 = vmul.f32 %v1343, %v1347
        %vm1349 = vweird.f32 %v1219
        %vm1350 = vweird.f32 %v1343
        %vm1351 = vmor %vm1349, %vm1350
        %v1352 = vsel %vm1351, %v1343, %v1348
        %v1353 = vrsqrt.pop %v1220
        %v1354 = vmul.f32 %v1353, %v1220
        %v1355 = vmul.f32 %v1354, %v1353
        %v1356 = vmul.f32 0.5, %v1355
        %v1357 = vsub.f32 1.5, %v1356
        %v1358 = vmul.f32 %v1353, %v1357
        %vm1359 = vweird.f32 %v1220
        %vm1360 = vweird.f32 %v1353
        %vm1361 = vmor %vm1359, %vm1360
        %v1362 = vsel %vm1361, %v1353, %v1358
        %v1363 = vrsqrt.pop %v1221
        %v1364 = vmul.f32 %v1363, %v1221
        %v1365 = vmul.f32 %v1364, %v1363
        %v1366 = vmul.f32 0.5, %v1365
        %v1367 = vsub.f32 1.5, %v1366
        %v1368 = vmul.f32 %v1363, %v1367
        %vm1369 = vweird.f32 %v1221
        %vm1370 = vweird.f32 %v1363
        %vm1371 = vmor %vm1369, %vm1370
        %v1372 = vsel %vm1371, %v1363, %v1368
        %v1373 = vrsqrt.pop %v1222
        %v1374 = vmul.f32 %v1373, %v1222
        %v1375 = vmul.f32 %v1374, %v1373
        %v1376 = vmul.f32 0.5, %v1375
        %v1377 = vsub.f32 1.5, %v1376
        %v1378 = vmul.f32 %v1373, %v1377
        %vm1379 = vweird.f32 %v1222
        %vm1380 = vweird.f32 %v1373
        %vm1381 = vmor %vm1379, %vm1380
        %v1382 = vsel %vm1381, %v1373, %v1378
        %v1383 = vmul.f32 %v1143, %v1232
        %v1384 = vmul.f32 %v1144, %v1232
        %v1385 = vmul.f32 %v1145, %v1232
        %v1386 = vmul.f32 %v1146, %v1232
        %v1387 = vmul.f32 %v1147, %v1242
        %v1388 = vmul.f32 %v1148, %v1242
        %v1389 = vmul.f32 %v1149, %v1242
        %v1390 = vmul.f32 %v1150, %v1242
        %v1391 = vmul.f32 %v1151, %v1252
        %v1392 = vmul.f32 %v1152, %v1252
        %v1393 = vmul.f32 %v1153, %v1252
        %v1394 = vmul.f32 %v1154, %v1252
        %v1395 = vmul.f32 %v1155, %v1262
        %v1396 = vmul.f32 %v1156, %v1262
        %v1397 = vmul.f32 %v1157, %v1262
        %v1398 = vmul.f32 %v1158, %v1262
        %v1399 = vmul.f32 %v1159, %v1272
        %v1400 = vmul.f32 %v1160, %v1272
        %v1401 = vmul.f32 %v1161, %v1272
        %v1402 = vmul.f32 %v1162, %v1272
        %v1403 = vmul.f32 %v1163, %v1282
        %v1404 = vmul.f32 %v1164, %v1282
        %v1405 = vmul.f32 %v1165, %v1282
        %v1406 = vmul.f32 %v1166, %v1282
        %v1407 = vmul.f32 %v1167, %v1292
        %v1408 = vmul.f32 %v1168, %v1292
        %v1409 = vmul.f32 %v1169, %v1292
        %v1410 = vmul.f32 %v1170, %v1292
        %v1411 = vmul.f32 %v1171, %v1302
        %v1412 = vmul.f32 %v1172, %v1302
        %v1413 = vmul.f32 %v1173, %v1302
        %v1414 = vmul.f32 %v1174, %v1302
        %v1415 = vmul.f32 %v1175, %v1312
        %v1416 = vmul.f32 %v1176, %v1312
        %v1417 = vmul.f32 %v1177, %v1312
        %v1418 = vmul.f32 %v1178, %v1312
        %v1419 = vmul.f32 %v1179, %v1322
        %v1420 = vmul.f32 %v1180, %v1322
        %v1421 = vmul.f32 %v1181, %v1322
        %v1422 = vmul.f32 %v1182, %v1322
        %v1423 = vmul.f32 %v1183, %v1332
        %v1424 = vmul.f32 %v1184, %v1332
        %v1425 = vmul.f32 %v1185, %v1332
        %v1426 = vmul.f32 %v1186, %v1332
        %v1427 = vmul.f32 %v1187, %v1342
        %v1428 = vmul.f32 %v1188, %v1342
        %v1429 = vmul.f32 %v1189, %v1342
        %v1430 = vmul.f32 %v1190, %v1342
        %v1431 = vmul.f32 %v1191, %v1352
        %v1432 = vmul.f32 %v1192, %v1352
        %v1433 = vmul.f32 %v1193, %v1352
        %v1434 = vmul.f32 %v1194, %v1352
        %v1435 = vmul.f32 %v1195, %v1362
        %v1436 = vmul.f32 %v1196, %v1362
        %v1437 = vmul.f32 %v1197, %v1362
        %v1438 = vmul.f32 %v1198, %v1362
        %v1439 = vmul.f32 %v1199, %v1372
        %v1440 = vmul.f32 %v1200, %v1372
        %v1441 = vmul.f32 %v1201, %v1372
        %v1442 = vmul.f32 %v1202, %v1372
        %v1443 = vmul.f32 %v1203, %v1382
        %v1444 = vmul.f32 %v1204, %v1382
        %v1445 = vmul.f32 %v1205, %v1382
        %v1446 = vmul.f32 %v1206, %v1382
        %v1448 = vperm.slane %v399, 0
        %v1449 = vperm.slane %v399, 1
        %v1450 = vperm.slane %v399, 2
        %v1451 = vperm.slane %v399, 3
        %v1456 = vmul.f32 %v1383, %v1448
        %v1457 = vmul.f32 %v1384, %v1449
        %v1458 = vmul.f32 %v1385, %v1450
        %v1459 = vmul.f32 %v1386, %v1451
        %v1460 = vmul.f32 %v1387, %v1448
        %v1461 = vmul.f32 %v1388, %v1449
        %v1462 = vmul.f32 %v1389, %v1450
        %v1463 = vmul.f32 %v1390, %v1451
        %v1464 = vmul.f32 %v1391, %v1448
        %v1465 = vmul.f32 %v1392, %v1449
        %v1466 = vmul.f32 %v1393, %v1450
        %v1467 = vmul.f32 %v1394, %v1451
        %v1468 = vmul.f32 %v1395, %v1448
        %v1469 = vmul.f32 %v1396, %v1449
        %v1470 = vmul.f32 %v1397, %v1450
        %v1471 = vmul.f32 %v1398, %v1451
        %v1472 = vmul.f32 %v1399, %v1448
        %v1473 = vmul.f32 %v1400, %v1449
        %v1474 = vmul.f32 %v1401, %v1450
        %v1475 = vmul.f32 %v1402, %v1451
        %v1476 = vmul.f32 %v1403, %v1448
        %v1477 = vmul.f32 %v1404, %v1449
        %v1478 = vmul.f32 %v1405, %v1450
        %v1479 = vmul.f32 %v1406, %v1451
        %v1480 = vmul.f32 %v1407, %v1448
        %v1481 = vmul.f32 %v1408, %v1449
        %v1482 = vmul.f32 %v1409, %v1450
        %v1483 = vmul.f32 %v1410, %v1451
        %v1484 = vmul.f32 %v1411, %v1448
        %v1485 = vmul.f32 %v1412, %v1449
        %v1486 = vmul.f32 %v1413, %v1450
        %v1487 = vmul.f32 %v1414, %v1451
        %v1488 = vmul.f32 %v1415, %v1448
        %v1489 = vmul.f32 %v1416, %v1449
        %v1490 = vmul.f32 %v1417, %v1450
        %v1491 = vmul.f32 %v1418, %v1451
        %v1492 = vmul.f32 %v1419, %v1448
        %v1493 = vmul.f32 %v1420, %v1449
        %v1494 = vmul.f32 %v1421, %v1450
        %v1495 = vmul.f32 %v1422, %v1451
        %v1496 = vmul.f32 %v1423, %v1448
        %v1497 = vmul.f32 %v1424, %v1449
        %v1498 = vmul.f32 %v1425, %v1450
        %v1499 = vmul.f32 %v1426, %v1451
        %v1500 = vmul.f32 %v1427, %v1448
        %v1501 = vmul.f32 %v1428, %v1449
        %v1502 = vmul.f32 %v1429, %v1450
        %v1503 = vmul.f32 %v1430, %v1451
        %v1504 = vmul.f32 %v1431, %v1448
        %v1505 = vmul.f32 %v1432, %v1449
        %v1506 = vmul.f32 %v1433, %v1450
        %v1507 = vmul.f32 %v1434, %v1451
        %v1508 = vmul.f32 %v1435, %v1448
        %v1509 = vmul.f32 %v1436, %v1449
        %v1510 = vmul.f32 %v1437, %v1450
        %v1511 = vmul.f32 %v1438, %v1451
        %v1512 = vmul.f32 %v1439, %v1448
        %v1513 = vmul.f32 %v1440, %v1449
        %v1514 = vmul.f32 %v1441, %v1450
        %v1515 = vmul.f32 %v1442, %v1451
        %v1516 = vmul.f32 %v1443, %v1448
        %v1517 = vmul.f32 %v1444, %v1449
        %v1518 = vmul.f32 %v1445, %v1450
        %v1519 = vmul.f32 %v1446, %v1451
        %v1521 = vperm.slane %v400, 0
        %v1522 = vperm.slane %v400, 1
        %v1523 = vperm.slane %v400, 2
        %v1524 = vperm.slane %v400, 3
        %v1529 = vadd.f32 %v1456, %v1521
        %v1530 = vadd.f32 %v1457, %v1522
        %v1531 = vadd.f32 %v1458, %v1523
        %v1532 = vadd.f32 %v1459, %v1524
        %v1533 = vadd.f32 %v1460, %v1521
        %v1534 = vadd.f32 %v1461, %v1522
        %v1535 = vadd.f32 %v1462, %v1523
        %v1536 = vadd.f32 %v1463, %v1524
        %v1537 = vadd.f32 %v1464, %v1521
        %v1538 = vadd.f32 %v1465, %v1522
        %v1539 = vadd.f32 %v1466, %v1523
        %v1540 = vadd.f32 %v1467, %v1524
        %v1541 = vadd.f32 %v1468, %v1521
        %v1542 = vadd.f32 %v1469, %v1522
        %v1543 = vadd.f32 %v1470, %v1523
        %v1544 = vadd.f32 %v1471, %v1524
        %v1545 = vadd.f32 %v1472, %v1521
        %v1546 = vadd.f32 %v1473, %v1522
        %v1547 = vadd.f32 %v1474, %v1523
        %v1548 = vadd.f32 %v1475, %v1524
        %v1549 = vadd.f32 %v1476, %v1521
        %v1550 = vadd.f32 %v1477, %v1522
        %v1551 = vadd.f32 %v1478, %v1523
        %v1552 = vadd.f32 %v1479, %v1524
        %v1553 = vadd.f32 %v1480, %v1521
        %v1554 = vadd.f32 %v1481, %v1522
        %v1555 = vadd.f32 %v1482, %v1523
        %v1556 = vadd.f32 %v1483, %v1524
        %v1557 = vadd.f32 %v1484, %v1521
        %v1558 = vadd.f32 %v1485, %v1522
        %v1559 = vadd.f32 %v1486, %v1523
        %v1560 = vadd.f32 %v1487, %v1524
        %v1561 = vadd.f32 %v1488, %v1521
        %v1562 = vadd.f32 %v1489, %v1522
        %v1563 = vadd.f32 %v1490, %v1523
        %v1564 = vadd.f32 %v1491, %v1524
        %v1565 = vadd.f32 %v1492, %v1521
        %v1566 = vadd.f32 %v1493, %v1522
        %v1567 = vadd.f32 %v1494, %v1523
        %v1568 = vadd.f32 %v1495, %v1524
        %v1569 = vadd.f32 %v1496, %v1521
        %v1570 = vadd.f32 %v1497, %v1522
        %v1571 = vadd.f32 %v1498, %v1523
        %v1572 = vadd.f32 %v1499, %v1524
        %v1573 = vadd.f32 %v1500, %v1521
        %v1574 = vadd.f32 %v1501, %v1522
        %v1575 = vadd.f32 %v1502, %v1523
        %v1576 = vadd.f32 %v1503, %v1524
        %v1577 = vadd.f32 %v1504, %v1521
        %v1578 = vadd.f32 %v1505, %v1522
        %v1579 = vadd.f32 %v1506, %v1523
        %v1580 = vadd.f32 %v1507, %v1524
        %v1581 = vadd.f32 %v1508, %v1521
        %v1582 = vadd.f32 %v1509, %v1522
        %v1583 = vadd.f32 %v1510, %v1523
        %v1584 = vadd.f32 %v1511, %v1524
        %v1585 = vadd.f32 %v1512, %v1521
        %v1586 = vadd.f32 %v1513, %v1522
        %v1587 = vadd.f32 %v1514, %v1523
        %v1588 = vadd.f32 %v1515, %v1524
        %v1589 = vadd.f32 %v1516, %v1521
        %v1590 = vadd.f32 %v1517, %v1522
        %v1591 = vadd.f32 %v1518, %v1523
        %v1592 = vadd.f32 %v1519, %v1524
        %v1593 = vmax.f32 %v1529, 0.0
        %v1594 = vmax.f32 %v1530, 0.0
        %v1595 = vmax.f32 %v1531, 0.0
        %v1596 = vmax.f32 %v1532, 0.0
        %v1597 = vmax.f32 %v1533, 0.0
        %v1598 = vmax.f32 %v1534, 0.0
        %v1599 = vmax.f32 %v1535, 0.0
        %v1600 = vmax.f32 %v1536, 0.0
        %v1601 = vmax.f32 %v1537, 0.0
        %v1602 = vmax.f32 %v1538, 0.0
        %v1603 = vmax.f32 %v1539, 0.0
        %v1604 = vmax.f32 %v1540, 0.0
        %v1605 = vmax.f32 %v1541, 0.0
        %v1606 = vmax.f32 %v1542, 0.0
        %v1607 = vmax.f32 %v1543, 0.0
        %v1608 = vmax.f32 %v1544, 0.0
        %v1609 = vmax.f32 %v1545, 0.0
        %v1610 = vmax.f32 %v1546, 0.0
        %v1611 = vmax.f32 %v1547, 0.0
        %v1612 = vmax.f32 %v1548, 0.0
        %v1613 = vmax.f32 %v1549, 0.0
        %v1614 = vmax.f32 %v1550, 0.0
        %v1615 = vmax.f32 %v1551, 0.0
        %v1616 = vmax.f32 %v1552, 0.0
        %v1617 = vmax.f32 %v1553, 0.0
        %v1618 = vmax.f32 %v1554, 0.0
        %v1619 = vmax.f32 %v1555, 0.0
        %v1620 = vmax.f32 %v1556, 0.0
        %v1621 = vmax.f32 %v1557, 0.0
        %v1622 = vmax.f32 %v1558, 0.0
        %v1623 = vmax.f32 %v1559, 0.0
        %v1624 = vmax.f32 %v1560, 0.0
        %v1625 = vmax.f32 %v1561, 0.0
        %v1626 = vmax.f32 %v1562, 0.0
        %v1627 = vmax.f32 %v1563, 0.0
        %v1628 = vmax.f32 %v1564, 0.0
        %v1629 = vmax.f32 %v1565, 0.0
        %v1630 = vmax.f32 %v1566, 0.0
        %v1631 = vmax.f32 %v1567, 0.0
        %v1632 = vmax.f32 %v1568, 0.0
        %v1633 = vmax.f32 %v1569, 0.0
        %v1634 = vmax.f32 %v1570, 0.0
        %v1635 = vmax.f32 %v1571, 0.0
        %v1636 = vmax.f32 %v1572, 0.0
        %v1637 = vmax.f32 %v1573, 0.0
        %v1638 = vmax.f32 %v1574, 0.0
        %v1639 = vmax.f32 %v1575, 0.0
        %v1640 = vmax.f32 %v1576, 0.0
        %v1641 = vmax.f32 %v1577, 0.0
        %v1642 = vmax.f32 %v1578, 0.0
        %v1643 = vmax.f32 %v1579, 0.0
        %v1644 = vmax.f32 %v1580, 0.0
        %v1645 = vmax.f32 %v1581, 0.0
        %v1646 = vmax.f32 %v1582, 0.0
        %v1647 = vmax.f32 %v1583, 0.0
        %v1648 = vmax.f32 %v1584, 0.0
        %v1649 = vmax.f32 %v1585, 0.0
        %v1650 = vmax.f32 %v1586, 0.0
        %v1651 = vmax.f32 %v1587, 0.0
        %v1652 = vmax.f32 %v1588, 0.0
        %v1653 = vmax.f32 %v1589, 0.0
        %v1654 = vmax.f32 %v1590, 0.0
        %v1655 = vmax.f32 %v1591, 0.0
        %v1656 = vmax.f32 %v1592, 0.0
        %v1657 = vpack.c.bf16 %v1597, %v1593
        %v1658 = vpack.c.bf16 %v1598, %v1594
        %v1659 = vpack.c.bf16 %v1599, %v1595
        %v1660 = vpack.c.bf16 %v1600, %v1596
        %v1661 = vpack.c.bf16 %v1605, %v1601
        %v1662 = vpack.c.bf16 %v1606, %v1602
        %v1663 = vpack.c.bf16 %v1607, %v1603
        %v1664 = vpack.c.bf16 %v1608, %v1604
        %v1665 = vpack.c.bf16 %v1613, %v1609
        %v1666 = vpack.c.bf16 %v1614, %v1610
        %v1667 = vpack.c.bf16 %v1615, %v1611
        %v1668 = vpack.c.bf16 %v1616, %v1612
        %v1669 = vpack.c.bf16 %v1621, %v1617
        %v1670 = vpack.c.bf16 %v1622, %v1618
        %v1671 = vpack.c.bf16 %v1623, %v1619
        %v1672 = vpack.c.bf16 %v1624, %v1620
        %v1673 = vpack.c.bf16 %v1629, %v1625
        %v1674 = vpack.c.bf16 %v1630, %v1626
        %v1675 = vpack.c.bf16 %v1631, %v1627
        %v1676 = vpack.c.bf16 %v1632, %v1628
        %v1677 = vpack.c.bf16 %v1637, %v1633
        %v1678 = vpack.c.bf16 %v1638, %v1634
        %v1679 = vpack.c.bf16 %v1639, %v1635
        %v1680 = vpack.c.bf16 %v1640, %v1636
        %v1681 = vpack.c.bf16 %v1645, %v1641
        %v1682 = vpack.c.bf16 %v1646, %v1642
        %v1683 = vpack.c.bf16 %v1647, %v1643
        %v1684 = vpack.c.bf16 %v1648, %v1644
        %v1685 = vpack.c.bf16 %v1653, %v1649
        %v1686 = vpack.c.bf16 %v1654, %v1650
        %v1687 = vpack.c.bf16 %v1655, %v1651
        %v1688 = vpack.c.bf16 %v1656, %v1652
        %v1689 = vld [vmem:[#allocation7] sm:$0xff]
        %v1690 = vld [vmem:[#allocation7 + $0x8] sm:$0xff]
        %v1691 = vld [vmem:[#allocation7 + $0x10] sm:$0xff]
        %v1692 = vld [vmem:[#allocation7 + $0x18] sm:$0xff]
        %v1693 = vld [vmem:[#allocation7 + $0x20] sm:$0xff]
        %v1694 = vld [vmem:[#allocation7 + $0x28] sm:$0xff]
        %v1695 = vld [vmem:[#allocation7 + $0x30] sm:$0xff]
        %v1696 = vld [vmem:[#allocation7 + $0x38] sm:$0xff]
        %v1697 = vld [vmem:[#allocation7 + $0x40] sm:$0xff]
        %v1698 = vld [vmem:[#allocation7 + $0x48] sm:$0xff]
        %v1699 = vld [vmem:[#allocation7 + $0x50] sm:$0xff]
        %v1700 = vld [vmem:[#allocation7 + $0x58] sm:$0xff]
        %v1701 = vld [vmem:[#allocation7 + $0x60] sm:$0xff]
        %v1702 = vld [vmem:[#allocation7 + $0x68] sm:$0xff]
        %v1703 = vld [vmem:[#allocation7 + $0x70] sm:$0xff]
        %v1704 = vld [vmem:[#allocation7 + $0x78] sm:$0xff]
        %v1705 = vld [vmem:[#allocation7 + $0x80] sm:$0xff]
        %v1706 = vld [vmem:[#allocation7 + $0x88] sm:$0xff]
        %v1707 = vld [vmem:[#allocation7 + $0x90] sm:$0xff]
        %v1708 = vld [vmem:[#allocation7 + $0x98] sm:$0xff]
        %v1709 = vld [vmem:[#allocation7 + $0xa0] sm:$0xff]
        %v1710 = vld [vmem:[#allocation7 + $0xa8] sm:$0xff]
        %v1711 = vld [vmem:[#allocation7 + $0xb0] sm:$0xff]
        %v1712 = vld [vmem:[#allocation7 + $0xb8] sm:$0xff]
        %v1713 = vld [vmem:[#allocation7 + $0xc0] sm:$0xff]
        %v1714 = vld [vmem:[#allocation7 + $0xc8] sm:$0xff]
        %v1715 = vld [vmem:[#allocation7 + $0xd0] sm:$0xff]
        %v1716 = vld [vmem:[#allocation7 + $0xd8] sm:$0xff]
        %v1717 = vld [vmem:[#allocation7 + $0xe0] sm:$0xff]
        %v1718 = vld [vmem:[#allocation7 + $0xe8] sm:$0xff]
        %v1719 = vld [vmem:[#allocation7 + $0xf0] sm:$0xff]
        %v1720 = vld [vmem:[#allocation7 + $0xf8] sm:$0xff]
        %v1721 = vld [vmem:[#allocation7 + $0x100] sm:$0xff]
        %v1722 = vld [vmem:[#allocation7 + $0x108] sm:$0xff]
        %v1723 = vld [vmem:[#allocation7 + $0x110] sm:$0xff]
        %v1724 = vld [vmem:[#allocation7 + $0x118] sm:$0xff]
        %v1725 = vld [vmem:[#allocation7 + $0x120] sm:$0xff]
        %v1726 = vld [vmem:[#allocation7 + $0x128] sm:$0xff]
        %v1727 = vld [vmem:[#allocation7 + $0x130] sm:$0xff]
        %v1728 = vld [vmem:[#allocation7 + $0x138] sm:$0xff]
        %v1729 = vld [vmem:[#allocation7 + $0x140] sm:$0xff]
        %v1730 = vld [vmem:[#allocation7 + $0x148] sm:$0xff]
        %v1731 = vld [vmem:[#allocation7 + $0x150] sm:$0xff]
        %v1732 = vld [vmem:[#allocation7 + $0x158] sm:$0xff]
        %v1733 = vld [vmem:[#allocation7 + $0x160] sm:$0xff]
        %v1734 = vld [vmem:[#allocation7 + $0x168] sm:$0xff]
        %v1735 = vld [vmem:[#allocation7 + $0x170] sm:$0xff]
        %v1736 = vld [vmem:[#allocation7 + $0x178] sm:$0xff]
        %v1737 = vld [vmem:[#allocation7 + $0x180] sm:$0xff]
        %v1738 = vld [vmem:[#allocation7 + $0x188] sm:$0xff]
        %v1739 = vld [vmem:[#allocation7 + $0x190] sm:$0xff]
        %v1740 = vld [vmem:[#allocation7 + $0x198] sm:$0xff]
        %v1741 = vld [vmem:[#allocation7 + $0x1a0] sm:$0xff]
        %v1742 = vld [vmem:[#allocation7 + $0x1a8] sm:$0xff]
        %v1743 = vld [vmem:[#allocation7 + $0x1b0] sm:$0xff]
        %v1744 = vld [vmem:[#allocation7 + $0x1b8] sm:$0xff]
        %v1745 = vld [vmem:[#allocation7 + $0x1c0] sm:$0xff]
        %v1746 = vld [vmem:[#allocation7 + $0x1c8] sm:$0xff]
        %v1747 = vld [vmem:[#allocation7 + $0x1d0] sm:$0xff]
        %v1748 = vld [vmem:[#allocation7 + $0x1d8] sm:$0xff]
        %v1749 = vld [vmem:[#allocation7 + $0x1e0] sm:$0xff]
        %v1750 = vld [vmem:[#allocation7 + $0x1e8] sm:$0xff]
        %v1751 = vld [vmem:[#allocation7 + $0x1f0] sm:$0xff]
        %v1752 = vld [vmem:[#allocation7 + $0x1f8] sm:$0xff]
        %v1753 = vld [vmem:[#allocation7 + $0x200] sm:$0xff]
        %v1754 = vld [vmem:[#allocation7 + $0x208] sm:$0xff]
        %v1755 = vld [vmem:[#allocation7 + $0x210] sm:$0xff]
        %v1756 = vld [vmem:[#allocation7 + $0x218] sm:$0xff]
        %v1757 = vld [vmem:[#allocation7 + $0x220] sm:$0xff]
        %v1758 = vld [vmem:[#allocation7 + $0x228] sm:$0xff]
        %v1759 = vld [vmem:[#allocation7 + $0x230] sm:$0xff]
        %v1760 = vld [vmem:[#allocation7 + $0x238] sm:$0xff]
        %v1761 = vld [vmem:[#allocation7 + $0x240] sm:$0xff]
        %v1762 = vld [vmem:[#allocation7 + $0x248] sm:$0xff]
        %v1763 = vld [vmem:[#allocation7 + $0x250] sm:$0xff]
        %v1764 = vld [vmem:[#allocation7 + $0x258] sm:$0xff]
        %v1765 = vld [vmem:[#allocation7 + $0x260] sm:$0xff]
        %v1766 = vld [vmem:[#allocation7 + $0x268] sm:$0xff]
        %v1767 = vld [vmem:[#allocation7 + $0x270] sm:$0xff]
        %v1768 = vld [vmem:[#allocation7 + $0x278] sm:$0xff]
        %v1769 = vld [vmem:[#allocation7 + $0x280] sm:$0xff]
        %v1770 = vld [vmem:[#allocation7 + $0x288] sm:$0xff]
        %v1771 = vld [vmem:[#allocation7 + $0x290] sm:$0xff]
        %v1772 = vld [vmem:[#allocation7 + $0x298] sm:$0xff]
        %v1773 = vld [vmem:[#allocation7 + $0x2a0] sm:$0xff]
        %v1774 = vld [vmem:[#allocation7 + $0x2a8] sm:$0xff]
        %v1775 = vld [vmem:[#allocation7 + $0x2b0] sm:$0xff]
        %v1776 = vld [vmem:[#allocation7 + $0x2b8] sm:$0xff]
        %v1777 = vld [vmem:[#allocation7 + $0x2c0] sm:$0xff]
        %v1778 = vld [vmem:[#allocation7 + $0x2c8] sm:$0xff]
        %v1779 = vld [vmem:[#allocation7 + $0x2d0] sm:$0xff]
        %v1780 = vld [vmem:[#allocation7 + $0x2d8] sm:$0xff]
        %v1781 = vld [vmem:[#allocation7 + $0x2e0] sm:$0xff]
        %v1782 = vld [vmem:[#allocation7 + $0x2e8] sm:$0xff]
        %v1783 = vld [vmem:[#allocation7 + $0x2f0] sm:$0xff]
        %v1784 = vld [vmem:[#allocation7 + $0x2f8] sm:$0xff]
        %v1785 = vld [vmem:[#allocation7 + $0x300] sm:$0xff]
        %v1786 = vld [vmem:[#allocation7 + $0x308] sm:$0xff]
        %v1787 = vld [vmem:[#allocation7 + $0x310] sm:$0xff]
        %v1788 = vld [vmem:[#allocation7 + $0x318] sm:$0xff]
        %v1789 = vld [vmem:[#allocation7 + $0x320] sm:$0xff]
        %v1790 = vld [vmem:[#allocation7 + $0x328] sm:$0xff]
        %v1791 = vld [vmem:[#allocation7 + $0x330] sm:$0xff]
        %v1792 = vld [vmem:[#allocation7 + $0x338] sm:$0xff]
        %v1793 = vld [vmem:[#allocation7 + $0x340] sm:$0xff]
        %v1794 = vld [vmem:[#allocation7 + $0x348] sm:$0xff]
        %v1795 = vld [vmem:[#allocation7 + $0x350] sm:$0xff]
        %v1796 = vld [vmem:[#allocation7 + $0x358] sm:$0xff]
        %v1797 = vld [vmem:[#allocation7 + $0x360] sm:$0xff]
        %v1798 = vld [vmem:[#allocation7 + $0x368] sm:$0xff]
        %v1799 = vld [vmem:[#allocation7 + $0x370] sm:$0xff]
        %v1800 = vld [vmem:[#allocation7 + $0x378] sm:$0xff]
        %v1801 = vld [vmem:[#allocation7 + $0x380] sm:$0xff]
        %v1802 = vld [vmem:[#allocation7 + $0x388] sm:$0xff]
        %v1803 = vld [vmem:[#allocation7 + $0x390] sm:$0xff]
        %v1804 = vld [vmem:[#allocation7 + $0x398] sm:$0xff]
        %v1805 = vld [vmem:[#allocation7 + $0x3a0] sm:$0xff]
        %v1806 = vld [vmem:[#allocation7 + $0x3a8] sm:$0xff]
        %v1807 = vld [vmem:[#allocation7 + $0x3b0] sm:$0xff]
        %v1808 = vld [vmem:[#allocation7 + $0x3b8] sm:$0xff]
        %v1809 = vld [vmem:[#allocation7 + $0x3c0] sm:$0xff]
        %v1810 = vld [vmem:[#allocation7 + $0x3c8] sm:$0xff]
        %v1811 = vld [vmem:[#allocation7 + $0x3d0] sm:$0xff]
        %v1812 = vld [vmem:[#allocation7 + $0x3d8] sm:$0xff]
        %v1813 = vld [vmem:[#allocation7 + $0x3e0] sm:$0xff]
        %v1814 = vld [vmem:[#allocation7 + $0x3e8] sm:$0xff]
        %v1815 = vld [vmem:[#allocation7 + $0x3f0] sm:$0xff]
        %v1816 = vld [vmem:[#allocation7 + $0x3f8] sm:$0xff]
        %v1818 = vperm.slane %v401, 0
        %v1819 = vperm.slane %v401, 1
        %v1820 = vperm.slane %v401, 2
        %v1821 = vperm.slane %v401, 3
        %v1954 = vunpack.c.l.b16 %v1689
        %v1955 = vunpack.c.h.b16 %v1689
        %v1956 = vunpack.c.l.b16 %v1690
        %v1957 = vunpack.c.h.b16 %v1690
        %v1958 = vunpack.c.l.b16 %v1691
        %v1959 = vunpack.c.h.b16 %v1691
        %v1960 = vunpack.c.l.b16 %v1692
        %v1961 = vunpack.c.h.b16 %v1692
        %v1962 = vunpack.c.l.b16 %v1693
        %v1963 = vunpack.c.h.b16 %v1693
        %v1964 = vunpack.c.l.b16 %v1694
        %v1965 = vunpack.c.h.b16 %v1694
        %v1966 = vunpack.c.l.b16 %v1695
        %v1967 = vunpack.c.h.b16 %v1695
        %v1968 = vunpack.c.l.b16 %v1696
        %v1969 = vunpack.c.h.b16 %v1696
        %v1970 = vunpack.c.l.b16 %v1697
        %v1971 = vunpack.c.h.b16 %v1697
        %v1972 = vunpack.c.l.b16 %v1698
        %v1973 = vunpack.c.h.b16 %v1698
        %v1974 = vunpack.c.l.b16 %v1699
        %v1975 = vunpack.c.h.b16 %v1699
        %v1976 = vunpack.c.l.b16 %v1700
        %v1977 = vunpack.c.h.b16 %v1700
        %v1978 = vunpack.c.l.b16 %v1701
        %v1979 = vunpack.c.h.b16 %v1701
        %v1980 = vunpack.c.l.b16 %v1702
        %v1981 = vunpack.c.h.b16 %v1702
        %v1982 = vunpack.c.l.b16 %v1703
        %v1983 = vunpack.c.h.b16 %v1703
        %v1984 = vunpack.c.l.b16 %v1704
        %v1985 = vunpack.c.h.b16 %v1704
        %v1986 = vunpack.c.l.b16 %v1705
        %v1987 = vunpack.c.h.b16 %v1705
        %v1988 = vunpack.c.l.b16 %v1706
        %v1989 = vunpack.c.h.b16 %v1706
        %v1990 = vunpack.c.l.b16 %v1707
        %v1991 = vunpack.c.h.b16 %v1707
        %v1992 = vunpack.c.l.b16 %v1708
        %v1993 = vunpack.c.h.b16 %v1708
        %v1994 = vunpack.c.l.b16 %v1709
        %v1995 = vunpack.c.h.b16 %v1709
        %v1996 = vunpack.c.l.b16 %v1710
        %v1997 = vunpack.c.h.b16 %v1710
        %v1998 = vunpack.c.l.b16 %v1711
        %v1999 = vunpack.c.h.b16 %v1711
        %v2000 = vunpack.c.l.b16 %v1712
        %v2001 = vunpack.c.h.b16 %v1712
        %v2002 = vunpack.c.l.b16 %v1713
        %v2003 = vunpack.c.h.b16 %v1713
        %v2004 = vunpack.c.l.b16 %v1714
        %v2005 = vunpack.c.h.b16 %v1714
        %v2006 = vunpack.c.l.b16 %v1715
        %v2007 = vunpack.c.h.b16 %v1715
        %v2008 = vunpack.c.l.b16 %v1716
        %v2009 = vunpack.c.h.b16 %v1716
        %v2010 = vunpack.c.l.b16 %v1717
        %v2011 = vunpack.c.h.b16 %v1717
        %v2012 = vunpack.c.l.b16 %v1718
        %v2013 = vunpack.c.h.b16 %v1718
        %v2014 = vunpack.c.l.b16 %v1719
        %v2015 = vunpack.c.h.b16 %v1719
        %v2016 = vunpack.c.l.b16 %v1720
        %v2017 = vunpack.c.h.b16 %v1720
        %v2018 = vunpack.c.l.b16 %v1721
        %v2019 = vunpack.c.h.b16 %v1721
        %v2020 = vunpack.c.l.b16 %v1722
        %v2021 = vunpack.c.h.b16 %v1722
        %v2022 = vunpack.c.l.b16 %v1723
        %v2023 = vunpack.c.h.b16 %v1723
        %v2024 = vunpack.c.l.b16 %v1724
        %v2025 = vunpack.c.h.b16 %v1724
        %v2026 = vunpack.c.l.b16 %v1725
        %v2027 = vunpack.c.h.b16 %v1725
        %v2028 = vunpack.c.l.b16 %v1726
        %v2029 = vunpack.c.h.b16 %v1726
        %v2030 = vunpack.c.l.b16 %v1727
        %v2031 = vunpack.c.h.b16 %v1727
        %v2032 = vunpack.c.l.b16 %v1728
        %v2033 = vunpack.c.h.b16 %v1728
        %v2034 = vunpack.c.l.b16 %v1729
        %v2035 = vunpack.c.h.b16 %v1729
        %v2036 = vunpack.c.l.b16 %v1730
        %v2037 = vunpack.c.h.b16 %v1730
        %v2038 = vunpack.c.l.b16 %v1731
        %v2039 = vunpack.c.h.b16 %v1731
        %v2040 = vunpack.c.l.b16 %v1732
        %v2041 = vunpack.c.h.b16 %v1732
        %v2042 = vunpack.c.l.b16 %v1733
        %v2043 = vunpack.c.h.b16 %v1733
        %v2044 = vunpack.c.l.b16 %v1734
        %v2045 = vunpack.c.h.b16 %v1734
        %v2046 = vunpack.c.l.b16 %v1735
        %v2047 = vunpack.c.h.b16 %v1735
        %v2048 = vunpack.c.l.b16 %v1736
        %v2049 = vunpack.c.h.b16 %v1736
        %v2050 = vunpack.c.l.b16 %v1737
        %v2051 = vunpack.c.h.b16 %v1737
        %v2052 = vunpack.c.l.b16 %v1738
        %v2053 = vunpack.c.h.b16 %v1738
        %v2054 = vunpack.c.l.b16 %v1739
        %v2055 = vunpack.c.h.b16 %v1739
        %v2056 = vunpack.c.l.b16 %v1740
        %v2057 = vunpack.c.h.b16 %v1740
        %v2058 = vunpack.c.l.b16 %v1741
        %v2059 = vunpack.c.h.b16 %v1741
        %v2060 = vunpack.c.l.b16 %v1742
        %v2061 = vunpack.c.h.b16 %v1742
        %v2062 = vunpack.c.l.b16 %v1743
        %v2063 = vunpack.c.h.b16 %v1743
        %v2064 = vunpack.c.l.b16 %v1744
        %v2065 = vunpack.c.h.b16 %v1744
        %v2066 = vunpack.c.l.b16 %v1745
        %v2067 = vunpack.c.h.b16 %v1745
        %v2068 = vunpack.c.l.b16 %v1746
        %v2069 = vunpack.c.h.b16 %v1746
        %v2070 = vunpack.c.l.b16 %v1747
        %v2071 = vunpack.c.h.b16 %v1747
        %v2072 = vunpack.c.l.b16 %v1748
        %v2073 = vunpack.c.h.b16 %v1748
        %v2074 = vunpack.c.l.b16 %v1749
        %v2075 = vunpack.c.h.b16 %v1749
        %v2076 = vunpack.c.l.b16 %v1750
        %v2077 = vunpack.c.h.b16 %v1750
        %v2078 = vunpack.c.l.b16 %v1751
        %v2079 = vunpack.c.h.b16 %v1751
        %v2080 = vunpack.c.l.b16 %v1752
        %v2081 = vunpack.c.h.b16 %v1752
        %v2082 = vunpack.c.l.b16 %v1753
        %v2083 = vunpack.c.h.b16 %v1753
        %v2084 = vunpack.c.l.b16 %v1754
        %v2085 = vunpack.c.h.b16 %v1754
        %v2086 = vunpack.c.l.b16 %v1755
        %v2087 = vunpack.c.h.b16 %v1755
        %v2088 = vunpack.c.l.b16 %v1756
        %v2089 = vunpack.c.h.b16 %v1756
        %v2090 = vunpack.c.l.b16 %v1757
        %v2091 = vunpack.c.h.b16 %v1757
        %v2092 = vunpack.c.l.b16 %v1758
        %v2093 = vunpack.c.h.b16 %v1758
        %v2094 = vunpack.c.l.b16 %v1759
        %v2095 = vunpack.c.h.b16 %v1759
        %v2096 = vunpack.c.l.b16 %v1760
        %v2097 = vunpack.c.h.b16 %v1760
        %v2098 = vunpack.c.l.b16 %v1761
        %v2099 = vunpack.c.h.b16 %v1761
        %v2100 = vunpack.c.l.b16 %v1762
        %v2101 = vunpack.c.h.b16 %v1762
        %v2102 = vunpack.c.l.b16 %v1763
        %v2103 = vunpack.c.h.b16 %v1763
        %v2104 = vunpack.c.l.b16 %v1764
        %v2105 = vunpack.c.h.b16 %v1764
        %v2106 = vunpack.c.l.b16 %v1765
        %v2107 = vunpack.c.h.b16 %v1765
        %v2108 = vunpack.c.l.b16 %v1766
        %v2109 = vunpack.c.h.b16 %v1766
        %v2110 = vunpack.c.l.b16 %v1767
        %v2111 = vunpack.c.h.b16 %v1767
        %v2112 = vunpack.c.l.b16 %v1768
        %v2113 = vunpack.c.h.b16 %v1768
        %v2114 = vunpack.c.l.b16 %v1769
        %v2115 = vunpack.c.h.b16 %v1769
        %v2116 = vunpack.c.l.b16 %v1770
        %v2117 = vunpack.c.h.b16 %v1770
        %v2118 = vunpack.c.l.b16 %v1771
        %v2119 = vunpack.c.h.b16 %v1771
        %v2120 = vunpack.c.l.b16 %v1772
        %v2121 = vunpack.c.h.b16 %v1772
        %v2122 = vunpack.c.l.b16 %v1773
        %v2123 = vunpack.c.h.b16 %v1773
        %v2124 = vunpack.c.l.b16 %v1774
        %v2125 = vunpack.c.h.b16 %v1774
        %v2126 = vunpack.c.l.b16 %v1775
        %v2127 = vunpack.c.h.b16 %v1775
        %v2128 = vunpack.c.l.b16 %v1776
        %v2129 = vunpack.c.h.b16 %v1776
        %v2130 = vunpack.c.l.b16 %v1777
        %v2131 = vunpack.c.h.b16 %v1777
        %v2132 = vunpack.c.l.b16 %v1778
        %v2133 = vunpack.c.h.b16 %v1778
        %v2134 = vunpack.c.l.b16 %v1779
        %v2135 = vunpack.c.h.b16 %v1779
        %v2136 = vunpack.c.l.b16 %v1780
        %v2137 = vunpack.c.h.b16 %v1780
        %v2138 = vunpack.c.l.b16 %v1781
        %v2139 = vunpack.c.h.b16 %v1781
        %v2140 = vunpack.c.l.b16 %v1782
        %v2141 = vunpack.c.h.b16 %v1782
        %v2142 = vunpack.c.l.b16 %v1783
        %v2143 = vunpack.c.h.b16 %v1783
        %v2144 = vunpack.c.l.b16 %v1784
        %v2145 = vunpack.c.h.b16 %v1784
        %v2146 = vunpack.c.l.b16 %v1785
        %v2147 = vunpack.c.h.b16 %v1785
        %v2148 = vunpack.c.l.b16 %v1786
        %v2149 = vunpack.c.h.b16 %v1786
        %v2150 = vunpack.c.l.b16 %v1787
        %v2151 = vunpack.c.h.b16 %v1787
        %v2152 = vunpack.c.l.b16 %v1788
        %v2153 = vunpack.c.h.b16 %v1788
        %v2154 = vunpack.c.l.b16 %v1789
        %v2155 = vunpack.c.h.b16 %v1789
        %v2156 = vunpack.c.l.b16 %v1790
        %v2157 = vunpack.c.h.b16 %v1790
        %v2158 = vunpack.c.l.b16 %v1791
        %v2159 = vunpack.c.h.b16 %v1791
        %v2160 = vunpack.c.l.b16 %v1792
        %v2161 = vunpack.c.h.b16 %v1792
        %v2162 = vunpack.c.l.b16 %v1793
        %v2163 = vunpack.c.h.b16 %v1793
        %v2164 = vunpack.c.l.b16 %v1794
        %v2165 = vunpack.c.h.b16 %v1794
        %v2166 = vunpack.c.l.b16 %v1795
        %v2167 = vunpack.c.h.b16 %v1795
        %v2168 = vunpack.c.l.b16 %v1796
        %v2169 = vunpack.c.h.b16 %v1796
        %v2170 = vunpack.c.l.b16 %v1797
        %v2171 = vunpack.c.h.b16 %v1797
        %v2172 = vunpack.c.l.b16 %v1798
        %v2173 = vunpack.c.h.b16 %v1798
        %v2174 = vunpack.c.l.b16 %v1799
        %v2175 = vunpack.c.h.b16 %v1799
        %v2176 = vunpack.c.l.b16 %v1800
        %v2177 = vunpack.c.h.b16 %v1800
        %v2178 = vunpack.c.l.b16 %v1801
        %v2179 = vunpack.c.h.b16 %v1801
        %v2180 = vunpack.c.l.b16 %v1802
        %v2181 = vunpack.c.h.b16 %v1802
        %v2182 = vunpack.c.l.b16 %v1803
        %v2183 = vunpack.c.h.b16 %v1803
        %v2184 = vunpack.c.l.b16 %v1804
        %v2185 = vunpack.c.h.b16 %v1804
        %v2186 = vunpack.c.l.b16 %v1805
        %v2187 = vunpack.c.h.b16 %v1805
        %v2188 = vunpack.c.l.b16 %v1806
        %v2189 = vunpack.c.h.b16 %v1806
        %v2190 = vunpack.c.l.b16 %v1807
        %v2191 = vunpack.c.h.b16 %v1807
        %v2192 = vunpack.c.l.b16 %v1808
        %v2193 = vunpack.c.h.b16 %v1808
        %v2194 = vunpack.c.l.b16 %v1809
        %v2195 = vunpack.c.h.b16 %v1809
        %v2196 = vunpack.c.l.b16 %v1810
        %v2197 = vunpack.c.h.b16 %v1810
        %v2198 = vunpack.c.l.b16 %v1811
        %v2199 = vunpack.c.h.b16 %v1811
        %v2200 = vunpack.c.l.b16 %v1812
        %v2201 = vunpack.c.h.b16 %v1812
        %v2202 = vunpack.c.l.b16 %v1813
        %v2203 = vunpack.c.h.b16 %v1813
        %v2204 = vunpack.c.l.b16 %v1814
        %v2205 = vunpack.c.h.b16 %v1814
        %v2206 = vunpack.c.l.b16 %v1815
        %v2207 = vunpack.c.h.b16 %v1815
        %v2208 = vunpack.c.l.b16 %v1816
        %v2209 = vunpack.c.h.b16 %v1816
        %v2210 = vpack.c.b16 %v1958, %v1954
        %v2211 = vpack.c.b16 %v1959, %v1955
        %v2212 = vpack.c.b16 %v1960, %v1956
        %v2213 = vpack.c.b16 %v1961, %v1957
        %v2214 = vpack.c.b16 %v1966, %v1962
        %v2215 = vpack.c.b16 %v1967, %v1963
        %v2216 = vpack.c.b16 %v1968, %v1964
        %v2217 = vpack.c.b16 %v1969, %v1965
        %v2218 = vpack.c.b16 %v1974, %v1970
        %v2219 = vpack.c.b16 %v1975, %v1971
        %v2220 = vpack.c.b16 %v1976, %v1972
        %v2221 = vpack.c.b16 %v1977, %v1973
        %v2222 = vpack.c.b16 %v1982, %v1978
        %v2223 = vpack.c.b16 %v1983, %v1979
        %v2224 = vpack.c.b16 %v1984, %v1980
        %v2225 = vpack.c.b16 %v1985, %v1981
        %v2226 = vpack.c.b16 %v1990, %v1986
        %v2227 = vpack.c.b16 %v1991, %v1987
        %v2228 = vpack.c.b16 %v1992, %v1988
        %v2229 = vpack.c.b16 %v1993, %v1989
        %v2230 = vpack.c.b16 %v1998, %v1994
        %v2231 = vpack.c.b16 %v1999, %v1995
        %v2232 = vpack.c.b16 %v2000, %v1996
        %v2233 = vpack.c.b16 %v2001, %v1997
        %v2234 = vpack.c.b16 %v2006, %v2002
        %v2235 = vpack.c.b16 %v2007, %v2003
        %v2236 = vpack.c.b16 %v2008, %v2004
        %v2237 = vpack.c.b16 %v2009, %v2005
        %v2238 = vpack.c.b16 %v2014, %v2010
        %v2239 = vpack.c.b16 %v2015, %v2011
        %v2240 = vpack.c.b16 %v2016, %v2012
        %v2241 = vpack.c.b16 %v2017, %v2013
        %v2242 = vpack.c.b16 %v2022, %v2018
        %v2243 = vpack.c.b16 %v2023, %v2019
        %v2244 = vpack.c.b16 %v2024, %v2020
        %v2245 = vpack.c.b16 %v2025, %v2021
        %v2246 = vpack.c.b16 %v2030, %v2026
        %v2247 = vpack.c.b16 %v2031, %v2027
        %v2248 = vpack.c.b16 %v2032, %v2028
        %v2249 = vpack.c.b16 %v2033, %v2029
        %v2250 = vpack.c.b16 %v2038, %v2034
        %v2251 = vpack.c.b16 %v2039, %v2035
        %v2252 = vpack.c.b16 %v2040, %v2036
        %v2253 = vpack.c.b16 %v2041, %v2037
        %v2254 = vpack.c.b16 %v2046, %v2042
        %v2255 = vpack.c.b16 %v2047, %v2043
        %v2256 = vpack.c.b16 %v2048, %v2044
        %v2257 = vpack.c.b16 %v2049, %v2045
        %v2258 = vpack.c.b16 %v2054, %v2050
        %v2259 = vpack.c.b16 %v2055, %v2051
        %v2260 = vpack.c.b16 %v2056, %v2052
        %v2261 = vpack.c.b16 %v2057, %v2053
        %v2262 = vpack.c.b16 %v2062, %v2058
        %v2263 = vpack.c.b16 %v2063, %v2059
        %v2264 = vpack.c.b16 %v2064, %v2060
        %v2265 = vpack.c.b16 %v2065, %v2061
        %v2266 = vpack.c.b16 %v2070, %v2066
        %v2267 = vpack.c.b16 %v2071, %v2067
        %v2268 = vpack.c.b16 %v2072, %v2068
        %v2269 = vpack.c.b16 %v2073, %v2069
        %v2270 = vpack.c.b16 %v2078, %v2074
        %v2271 = vpack.c.b16 %v2079, %v2075
        %v2272 = vpack.c.b16 %v2080, %v2076
        %v2273 = vpack.c.b16 %v2081, %v2077
        %v2274 = vpack.c.b16 %v2086, %v2082
        %v2275 = vpack.c.b16 %v2087, %v2083
        %v2276 = vpack.c.b16 %v2088, %v2084
        %v2277 = vpack.c.b16 %v2089, %v2085
        %v2278 = vpack.c.b16 %v2094, %v2090
        %v2279 = vpack.c.b16 %v2095, %v2091
        %v2280 = vpack.c.b16 %v2096, %v2092
        %v2281 = vpack.c.b16 %v2097, %v2093
        %v2282 = vpack.c.b16 %v2102, %v2098
        %v2283 = vpack.c.b16 %v2103, %v2099
        %v2284 = vpack.c.b16 %v2104, %v2100
        %v2285 = vpack.c.b16 %v2105, %v2101
        %v2286 = vpack.c.b16 %v2110, %v2106
        %v2287 = vpack.c.b16 %v2111, %v2107
        %v2288 = vpack.c.b16 %v2112, %v2108
        %v2289 = vpack.c.b16 %v2113, %v2109
        %v2290 = vpack.c.b16 %v2118, %v2114
        %v2291 = vpack.c.b16 %v2119, %v2115
        %v2292 = vpack.c.b16 %v2120, %v2116
        %v2293 = vpack.c.b16 %v2121, %v2117
        %v2294 = vpack.c.b16 %v2126, %v2122
        %v2295 = vpack.c.b16 %v2127, %v2123
        %v2296 = vpack.c.b16 %v2128, %v2124
        %v2297 = vpack.c.b16 %v2129, %v2125
        %v2298 = vpack.c.b16 %v2134, %v2130
        %v2299 = vpack.c.b16 %v2135, %v2131
        %v2300 = vpack.c.b16 %v2136, %v2132
        %v2301 = vpack.c.b16 %v2137, %v2133
        %v2302 = vpack.c.b16 %v2142, %v2138
        %v2303 = vpack.c.b16 %v2143, %v2139
        %v2304 = vpack.c.b16 %v2144, %v2140
        %v2305 = vpack.c.b16 %v2145, %v2141
        %v2306 = vpack.c.b16 %v2150, %v2146
        %v2307 = vpack.c.b16 %v2151, %v2147
        %v2308 = vpack.c.b16 %v2152, %v2148
        %v2309 = vpack.c.b16 %v2153, %v2149
        %v2310 = vpack.c.b16 %v2158, %v2154
        %v2311 = vpack.c.b16 %v2159, %v2155
        %v2312 = vpack.c.b16 %v2160, %v2156
        %v2313 = vpack.c.b16 %v2161, %v2157
        %v2314 = vpack.c.b16 %v2166, %v2162
        %v2315 = vpack.c.b16 %v2167, %v2163
        %v2316 = vpack.c.b16 %v2168, %v2164
        %v2317 = vpack.c.b16 %v2169, %v2165
        %v2318 = vpack.c.b16 %v2174, %v2170
        %v2319 = vpack.c.b16 %v2175, %v2171
        %v2320 = vpack.c.b16 %v2176, %v2172
        %v2321 = vpack.c.b16 %v2177, %v2173
        %v2322 = vpack.c.b16 %v2182, %v2178
        %v2323 = vpack.c.b16 %v2183, %v2179
        %v2324 = vpack.c.b16 %v2184, %v2180
        %v2325 = vpack.c.b16 %v2185, %v2181
        %v2326 = vpack.c.b16 %v2190, %v2186
        %v2327 = vpack.c.b16 %v2191, %v2187
        %v2328 = vpack.c.b16 %v2192, %v2188
        %v2329 = vpack.c.b16 %v2193, %v2189
        %v2330 = vpack.c.b16 %v2198, %v2194
        %v2331 = vpack.c.b16 %v2199, %v2195
        %v2332 = vpack.c.b16 %v2200, %v2196
        %v2333 = vpack.c.b16 %v2201, %v2197
        %v2334 = vpack.c.b16 %v2206, %v2202
        %v2335 = vpack.c.b16 %v2207, %v2203
        %v2336 = vpack.c.b16 %v2208, %v2204
        %v2337 = vpack.c.b16 %v2209, %v2205
        %2466 = vmatpush.bf16.msra.mxu0 %v2238
        %2467 = vmatpush.bf16.msra.mxu0 %v2234
        %2468 = vmatpush.bf16.msra.mxu0 %v2230
        %2469 = vmatpush.bf16.msra.mxu0 %v2226
        %2470 = vmatpush.bf16.msra.mxu0 %v2222
        %2471 = vmatpush.bf16.msra.mxu0 %v2218
        %2472 = vmatpush.bf16.msra.mxu0 %v2214
        %2473 = vmatpush.bf16.msra.mxu0 %v2210
        %2474 = vmatmul.bf16.gmra.mxu0 %v1657
        %v2475 = vpop.f32.mrf.mxu0
        %v2476 = vadd.f32 %v1818, %v2475
        %v2477 = vpop.f32.mrf.mxu0
        %v2478 = vadd.f32 %v1818, %v2477
        %2479 = vmatmul.bf16.gmra.mxu0 %v1661
        %v2480 = vpop.f32.mrf.mxu0
        %v2481 = vadd.f32 %v1818, %v2480
        %v2482 = vpop.f32.mrf.mxu0
        %v2483 = vadd.f32 %v1818, %v2482
        %2484 = vmatmul.bf16.gmra.mxu0 %v1665
        %v2485 = vpop.f32.mrf.mxu0
        %v2486 = vadd.f32 %v1818, %v2485
        %v2487 = vpop.f32.mrf.mxu0
        %v2488 = vadd.f32 %v1818, %v2487
        %2489 = vmatmul.bf16.gmra.mxu0 %v1669
        %v2490 = vpop.f32.mrf.mxu0
        %v2491 = vadd.f32 %v1818, %v2490
        %v2492 = vpop.f32.mrf.mxu0
        %v2493 = vadd.f32 %v1818, %v2492
        %2494 = vmatmul.bf16.gmra.mxu0 %v1673
        %v2495 = vpop.f32.mrf.mxu0
        %v2496 = vadd.f32 %v1818, %v2495
        %v2497 = vpop.f32.mrf.mxu0
        %v2498 = vadd.f32 %v1818, %v2497
        %2499 = vmatmul.bf16.gmra.mxu0 %v1677
        %v2500 = vpop.f32.mrf.mxu0
        %v2501 = vadd.f32 %v1818, %v2500
        %v2502 = vpop.f32.mrf.mxu0
        %v2503 = vadd.f32 %v1818, %v2502
        %2504 = vmatmul.bf16.gmra.mxu0 %v1681
        %v2505 = vpop.f32.mrf.mxu0
        %v2506 = vadd.f32 %v1818, %v2505
        %v2507 = vpop.f32.mrf.mxu0
        %v2508 = vadd.f32 %v1818, %v2507
        %2509 = vmatmul.bf16.gmra.mxu0 %v1685
        %v2510 = vpop.f32.mrf.mxu0
        %v2511 = vadd.f32 %v1818, %v2510
        %v2512 = vpop.f32.mrf.mxu0
        %v2513 = vadd.f32 %v1818, %v2512
        %2514 = vdwg.mxu0
        %2515 = vmatpush.bf16.msra.mxu0 %v2270
        %2516 = vmatpush.bf16.msra.mxu0 %v2266
        %2517 = vmatpush.bf16.msra.mxu0 %v2262
        %2518 = vmatpush.bf16.msra.mxu0 %v2258
        %2519 = vmatpush.bf16.msra.mxu0 %v2254
        %2520 = vmatpush.bf16.msra.mxu0 %v2250
        %2521 = vmatpush.bf16.msra.mxu0 %v2246
        %2522 = vmatpush.bf16.msra.mxu0 %v2242
        %2523 = vmatmul.bf16.gmra.mxu0 %v1658
        %v2524 = vpop.f32.mrf.mxu0
        %v2525 = vadd.f32 %v2476, %v2524
        %v2526 = vpop.f32.mrf.mxu0
        %v2527 = vadd.f32 %v2478, %v2526
        %2528 = vmatmul.bf16.gmra.mxu0 %v1662
        %v2529 = vpop.f32.mrf.mxu0
        %v2530 = vadd.f32 %v2481, %v2529
        %v2531 = vpop.f32.mrf.mxu0
        %v2532 = vadd.f32 %v2483, %v2531
        %2533 = vmatmul.bf16.gmra.mxu0 %v1666
        %v2534 = vpop.f32.mrf.mxu0
        %v2535 = vadd.f32 %v2486, %v2534
        %v2536 = vpop.f32.mrf.mxu0
        %v2537 = vadd.f32 %v2488, %v2536
        %2538 = vmatmul.bf16.gmra.mxu0 %v1670
        %v2539 = vpop.f32.mrf.mxu0
        %v2540 = vadd.f32 %v2491, %v2539
        %v2541 = vpop.f32.mrf.mxu0
        %v2542 = vadd.f32 %v2493, %v2541
        %2543 = vmatmul.bf16.gmra.mxu0 %v1674
        %v2544 = vpop.f32.mrf.mxu0
        %v2545 = vadd.f32 %v2496, %v2544
        %v2546 = vpop.f32.mrf.mxu0
        %v2547 = vadd.f32 %v2498, %v2546
        %2548 = vmatmul.bf16.gmra.mxu0 %v1678
        %v2549 = vpop.f32.mrf.mxu0
        %v2550 = vadd.f32 %v2501, %v2549
        %v2551 = vpop.f32.mrf.mxu0
        %v2552 = vadd.f32 %v2503, %v2551
        %2553 = vmatmul.bf16.gmra.mxu0 %v1682
        %v2554 = vpop.f32.mrf.mxu0
        %v2555 = vadd.f32 %v2506, %v2554
        %v2556 = vpop.f32.mrf.mxu0
        %v2557 = vadd.f32 %v2508, %v2556
        %2558 = vmatmul.bf16.gmra.mxu0 %v1686
        %v2559 = vpop.f32.mrf.mxu0
        %v2560 = vadd.f32 %v2511, %v2559
        %v2561 = vpop.f32.mrf.mxu0
        %v2562 = vadd.f32 %v2513, %v2561
        %2563 = vdwg.mxu0
        %2564 = vmatpush.bf16.msra.mxu0 %v2302
        %2565 = vmatpush.bf16.msra.mxu0 %v2298
        %2566 = vmatpush.bf16.msra.mxu0 %v2294
        %2567 = vmatpush.bf16.msra.mxu0 %v2290
        %2568 = vmatpush.bf16.msra.mxu0 %v2286
        %2569 = vmatpush.bf16.msra.mxu0 %v2282
        %2570 = vmatpush.bf16.msra.mxu0 %v2278
        %2571 = vmatpush.bf16.msra.mxu0 %v2274
        %2572 = vmatmul.bf16.gmra.mxu0 %v1659
        %v2573 = vpop.f32.mrf.mxu0
        %v2574 = vadd.f32 %v2525, %v2573
        %v2575 = vpop.f32.mrf.mxu0
        %v2576 = vadd.f32 %v2527, %v2575
        %2577 = vmatmul.bf16.gmra.mxu0 %v1663
        %v2578 = vpop.f32.mrf.mxu0
        %v2579 = vadd.f32 %v2530, %v2578
        %v2580 = vpop.f32.mrf.mxu0
        %v2581 = vadd.f32 %v2532, %v2580
        %2582 = vmatmul.bf16.gmra.mxu0 %v1667
        %v2583 = vpop.f32.mrf.mxu0
        %v2584 = vadd.f32 %v2535, %v2583
        %v2585 = vpop.f32.mrf.mxu0
        %v2586 = vadd.f32 %v2537, %v2585
        %2587 = vmatmul.bf16.gmra.mxu0 %v1671
        %v2588 = vpop.f32.mrf.mxu0
        %v2589 = vadd.f32 %v2540, %v2588
        %v2590 = vpop.f32.mrf.mxu0
        %v2591 = vadd.f32 %v2542, %v2590
        %2592 = vmatmul.bf16.gmra.mxu0 %v1675
        %v2593 = vpop.f32.mrf.mxu0
        %v2594 = vadd.f32 %v2545, %v2593
        %v2595 = vpop.f32.mrf.mxu0
        %v2596 = vadd.f32 %v2547, %v2595
        %2597 = vmatmul.bf16.gmra.mxu0 %v1679
        %v2598 = vpop.f32.mrf.mxu0
        %v2599 = vadd.f32 %v2550, %v2598
        %v2600 = vpop.f32.mrf.mxu0
        %v2601 = vadd.f32 %v2552, %v2600
        %2602 = vmatmul.bf16.gmra.mxu0 %v1683
        %v2603 = vpop.f32.mrf.mxu0
        %v2604 = vadd.f32 %v2555, %v2603
        %v2605 = vpop.f32.mrf.mxu0
        %v2606 = vadd.f32 %v2557, %v2605
        %2607 = vmatmul.bf16.gmra.mxu0 %v1687
        %v2608 = vpop.f32.mrf.mxu0
        %v2609 = vadd.f32 %v2560, %v2608
        %v2610 = vpop.f32.mrf.mxu0
        %v2611 = vadd.f32 %v2562, %v2610
        %2612 = vdwg.mxu0
        %2613 = vmatpush.bf16.msra.mxu0 %v2334
        %2614 = vmatpush.bf16.msra.mxu0 %v2330
        %2615 = vmatpush.bf16.msra.mxu0 %v2326
        %2616 = vmatpush.bf16.msra.mxu0 %v2322
        %2617 = vmatpush.bf16.msra.mxu0 %v2318
        %2618 = vmatpush.bf16.msra.mxu0 %v2314
        %2619 = vmatpush.bf16.msra.mxu0 %v2310
        %2620 = vmatpush.bf16.msra.mxu0 %v2306
        %2621 = vmatmul.bf16.gmra.mxu0 %v1660
        %v2622 = vpop.f32.mrf.mxu0
        %v2623 = vadd.f32 %v2574, %v2622
        %v2624 = vpop.f32.mrf.mxu0
        %v2625 = vadd.f32 %v2576, %v2624
        %2626 = vmatmul.bf16.gmra.mxu0 %v1664
        %v2627 = vpop.f32.mrf.mxu0
        %v2628 = vadd.f32 %v2579, %v2627
        %v2629 = vpop.f32.mrf.mxu0
        %v2630 = vadd.f32 %v2581, %v2629
        %2631 = vmatmul.bf16.gmra.mxu0 %v1668
        %v2632 = vpop.f32.mrf.mxu0
        %v2633 = vadd.f32 %v2584, %v2632
        %v2634 = vpop.f32.mrf.mxu0
        %v2635 = vadd.f32 %v2586, %v2634
        %2636 = vmatmul.bf16.gmra.mxu0 %v1672
        %v2637 = vpop.f32.mrf.mxu0
        %v2638 = vadd.f32 %v2589, %v2637
        %v2639 = vpop.f32.mrf.mxu0
        %v2640 = vadd.f32 %v2591, %v2639
        %2641 = vmatmul.bf16.gmra.mxu0 %v1676
        %v2642 = vpop.f32.mrf.mxu0
        %v2643 = vadd.f32 %v2594, %v2642
        %v2644 = vpop.f32.mrf.mxu0
        %v2645 = vadd.f32 %v2596, %v2644
        %2646 = vmatmul.bf16.gmra.mxu0 %v1680
        %v2647 = vpop.f32.mrf.mxu0
        %v2648 = vadd.f32 %v2599, %v2647
        %v2649 = vpop.f32.mrf.mxu0
        %v2650 = vadd.f32 %v2601, %v2649
        %2651 = vmatmul.bf16.gmra.mxu0 %v1684
        %v2652 = vpop.f32.mrf.mxu0
        %v2653 = vadd.f32 %v2604, %v2652
        %v2654 = vpop.f32.mrf.mxu0
        %v2655 = vadd.f32 %v2606, %v2654
        %2656 = vmatmul.bf16.gmra.mxu0 %v1688
        %v2657 = vpop.f32.mrf.mxu0
        %v2658 = vadd.f32 %v2609, %v2657
        %v2659 = vpop.f32.mrf.mxu0
        %v2660 = vadd.f32 %v2611, %v2659
        %2661 = vdwg.mxu0
        %2662 = vmatpush.bf16.msra.mxu0 %v2239
        %2663 = vmatpush.bf16.msra.mxu0 %v2235
        %2664 = vmatpush.bf16.msra.mxu0 %v2231
        %2665 = vmatpush.bf16.msra.mxu0 %v2227
        %2666 = vmatpush.bf16.msra.mxu0 %v2223
        %2667 = vmatpush.bf16.msra.mxu0 %v2219
        %2668 = vmatpush.bf16.msra.mxu0 %v2215
        %2669 = vmatpush.bf16.msra.mxu0 %v2211
        %2670 = vmatmul.bf16.gmra.mxu0 %v1657
        %v2671 = vpop.f32.mrf.mxu0
        %v2672 = vadd.f32 %v1819, %v2671
        %v2673 = vpop.f32.mrf.mxu0
        %v2674 = vadd.f32 %v1819, %v2673
        %2675 = vmatmul.bf16.gmra.mxu0 %v1661
        %v2676 = vpop.f32.mrf.mxu0
        %v2677 = vadd.f32 %v1819, %v2676
        %v2678 = vpop.f32.mrf.mxu0
        %v2679 = vadd.f32 %v1819, %v2678
        %2680 = vmatmul.bf16.gmra.mxu0 %v1665
        %v2681 = vpop.f32.mrf.mxu0
        %v2682 = vadd.f32 %v1819, %v2681
        %v2683 = vpop.f32.mrf.mxu0
        %v2684 = vadd.f32 %v1819, %v2683
        %2685 = vmatmul.bf16.gmra.mxu0 %v1669
        %v2686 = vpop.f32.mrf.mxu0
        %v2687 = vadd.f32 %v1819, %v2686
        %v2688 = vpop.f32.mrf.mxu0
        %v2689 = vadd.f32 %v1819, %v2688
        %2690 = vmatmul.bf16.gmra.mxu0 %v1673
        %v2691 = vpop.f32.mrf.mxu0
        %v2692 = vadd.f32 %v1819, %v2691
        %v2693 = vpop.f32.mrf.mxu0
        %v2694 = vadd.f32 %v1819, %v2693
        %2695 = vmatmul.bf16.gmra.mxu0 %v1677
        %v2696 = vpop.f32.mrf.mxu0
        %v2697 = vadd.f32 %v1819, %v2696
        %v2698 = vpop.f32.mrf.mxu0
        %v2699 = vadd.f32 %v1819, %v2698
        %2700 = vmatmul.bf16.gmra.mxu0 %v1681
        %v2701 = vpop.f32.mrf.mxu0
        %v2702 = vadd.f32 %v1819, %v2701
        %v2703 = vpop.f32.mrf.mxu0
        %v2704 = vadd.f32 %v1819, %v2703
        %2705 = vmatmul.bf16.gmra.mxu0 %v1685
        %v2706 = vpop.f32.mrf.mxu0
        %v2707 = vadd.f32 %v1819, %v2706
        %v2708 = vpop.f32.mrf.mxu0
        %v2709 = vadd.f32 %v1819, %v2708
        %2710 = vdwg.mxu0
        %2711 = vmatpush.bf16.msra.mxu0 %v2271
        %2712 = vmatpush.bf16.msra.mxu0 %v2267
        %2713 = vmatpush.bf16.msra.mxu0 %v2263
        %2714 = vmatpush.bf16.msra.mxu0 %v2259
        %2715 = vmatpush.bf16.msra.mxu0 %v2255
        %2716 = vmatpush.bf16.msra.mxu0 %v2251
        %2717 = vmatpush.bf16.msra.mxu0 %v2247
        %2718 = vmatpush.bf16.msra.mxu0 %v2243
        %2719 = vmatmul.bf16.gmra.mxu0 %v1658
        %v2720 = vpop.f32.mrf.mxu0
        %v2721 = vadd.f32 %v2672, %v2720
        %v2722 = vpop.f32.mrf.mxu0
        %v2723 = vadd.f32 %v2674, %v2722
        %2724 = vmatmul.bf16.gmra.mxu0 %v1662
        %v2725 = vpop.f32.mrf.mxu0
        %v2726 = vadd.f32 %v2677, %v2725
        %v2727 = vpop.f32.mrf.mxu0
        %v2728 = vadd.f32 %v2679, %v2727
        %2729 = vmatmul.bf16.gmra.mxu0 %v1666
        %v2730 = vpop.f32.mrf.mxu0
        %v2731 = vadd.f32 %v2682, %v2730
        %v2732 = vpop.f32.mrf.mxu0
        %v2733 = vadd.f32 %v2684, %v2732
        %2734 = vmatmul.bf16.gmra.mxu0 %v1670
        %v2735 = vpop.f32.mrf.mxu0
        %v2736 = vadd.f32 %v2687, %v2735
        %v2737 = vpop.f32.mrf.mxu0
        %v2738 = vadd.f32 %v2689, %v2737
        %2739 = vmatmul.bf16.gmra.mxu0 %v1674
        %v2740 = vpop.f32.mrf.mxu0
        %v2741 = vadd.f32 %v2692, %v2740
        %v2742 = vpop.f32.mrf.mxu0
        %v2743 = vadd.f32 %v2694, %v2742
        %2744 = vmatmul.bf16.gmra.mxu0 %v1678
        %v2745 = vpop.f32.mrf.mxu0
        %v2746 = vadd.f32 %v2697, %v2745
        %v2747 = vpop.f32.mrf.mxu0
        %v2748 = vadd.f32 %v2699, %v2747
        %2749 = vmatmul.bf16.gmra.mxu0 %v1682
        %v2750 = vpop.f32.mrf.mxu0
        %v2751 = vadd.f32 %v2702, %v2750
        %v2752 = vpop.f32.mrf.mxu0
        %v2753 = vadd.f32 %v2704, %v2752
        %2754 = vmatmul.bf16.gmra.mxu0 %v1686
        %v2755 = vpop.f32.mrf.mxu0
        %v2756 = vadd.f32 %v2707, %v2755
        %v2757 = vpop.f32.mrf.mxu0
        %v2758 = vadd.f32 %v2709, %v2757
        %2759 = vdwg.mxu0
        %2760 = vmatpush.bf16.msra.mxu0 %v2303
        %2761 = vmatpush.bf16.msra.mxu0 %v2299
        %2762 = vmatpush.bf16.msra.mxu0 %v2295
        %2763 = vmatpush.bf16.msra.mxu0 %v2291
        %2764 = vmatpush.bf16.msra.mxu0 %v2287
        %2765 = vmatpush.bf16.msra.mxu0 %v2283
        %2766 = vmatpush.bf16.msra.mxu0 %v2279
        %2767 = vmatpush.bf16.msra.mxu0 %v2275
        %2768 = vmatmul.bf16.gmra.mxu0 %v1659
        %v2769 = vpop.f32.mrf.mxu0
        %v2770 = vadd.f32 %v2721, %v2769
        %v2771 = vpop.f32.mrf.mxu0
        %v2772 = vadd.f32 %v2723, %v2771
        %2773 = vmatmul.bf16.gmra.mxu0 %v1663
        %v2774 = vpop.f32.mrf.mxu0
        %v2775 = vadd.f32 %v2726, %v2774
        %v2776 = vpop.f32.mrf.mxu0
        %v2777 = vadd.f32 %v2728, %v2776
        %2778 = vmatmul.bf16.gmra.mxu0 %v1667
        %v2779 = vpop.f32.mrf.mxu0
        %v2780 = vadd.f32 %v2731, %v2779
        %v2781 = vpop.f32.mrf.mxu0
        %v2782 = vadd.f32 %v2733, %v2781
        %2783 = vmatmul.bf16.gmra.mxu0 %v1671
        %v2784 = vpop.f32.mrf.mxu0
        %v2785 = vadd.f32 %v2736, %v2784
        %v2786 = vpop.f32.mrf.mxu0
        %v2787 = vadd.f32 %v2738, %v2786
        %2788 = vmatmul.bf16.gmra.mxu0 %v1675
        %v2789 = vpop.f32.mrf.mxu0
        %v2790 = vadd.f32 %v2741, %v2789
        %v2791 = vpop.f32.mrf.mxu0
        %v2792 = vadd.f32 %v2743, %v2791
        %2793 = vmatmul.bf16.gmra.mxu0 %v1679
        %v2794 = vpop.f32.mrf.mxu0
        %v2795 = vadd.f32 %v2746, %v2794
        %v2796 = vpop.f32.mrf.mxu0
        %v2797 = vadd.f32 %v2748, %v2796
        %2798 = vmatmul.bf16.gmra.mxu0 %v1683
        %v2799 = vpop.f32.mrf.mxu0
        %v2800 = vadd.f32 %v2751, %v2799
        %v2801 = vpop.f32.mrf.mxu0
        %v2802 = vadd.f32 %v2753, %v2801
        %2803 = vmatmul.bf16.gmra.mxu0 %v1687
        %v2804 = vpop.f32.mrf.mxu0
        %v2805 = vadd.f32 %v2756, %v2804
        %v2806 = vpop.f32.mrf.mxu0
        %v2807 = vadd.f32 %v2758, %v2806
        %2808 = vdwg.mxu0
        %2809 = vmatpush.bf16.msra.mxu0 %v2335
        %2810 = vmatpush.bf16.msra.mxu0 %v2331
        %2811 = vmatpush.bf16.msra.mxu0 %v2327
        %2812 = vmatpush.bf16.msra.mxu0 %v2323
        %2813 = vmatpush.bf16.msra.mxu0 %v2319
        %2814 = vmatpush.bf16.msra.mxu0 %v2315
        %2815 = vmatpush.bf16.msra.mxu0 %v2311
        %2816 = vmatpush.bf16.msra.mxu0 %v2307
        %2817 = vmatmul.bf16.gmra.mxu0 %v1660
        %v2818 = vpop.f32.mrf.mxu0
        %v2819 = vadd.f32 %v2770, %v2818
        %v2820 = vpop.f32.mrf.mxu0
        %v2821 = vadd.f32 %v2772, %v2820
        %2822 = vmatmul.bf16.gmra.mxu0 %v1664
        %v2823 = vpop.f32.mrf.mxu0
        %v2824 = vadd.f32 %v2775, %v2823
        %v2825 = vpop.f32.mrf.mxu0
        %v2826 = vadd.f32 %v2777, %v2825
        %2827 = vmatmul.bf16.gmra.mxu0 %v1668
        %v2828 = vpop.f32.mrf.mxu0
        %v2829 = vadd.f32 %v2780, %v2828
        %v2830 = vpop.f32.mrf.mxu0
        %v2831 = vadd.f32 %v2782, %v2830
        %2832 = vmatmul.bf16.gmra.mxu0 %v1672
        %v2833 = vpop.f32.mrf.mxu0
        %v2834 = vadd.f32 %v2785, %v2833
        %v2835 = vpop.f32.mrf.mxu0
        %v2836 = vadd.f32 %v2787, %v2835
        %2837 = vmatmul.bf16.gmra.mxu0 %v1676
        %v2838 = vpop.f32.mrf.mxu0
        %v2839 = vadd.f32 %v2790, %v2838
        %v2840 = vpop.f32.mrf.mxu0
        %v2841 = vadd.f32 %v2792, %v2840
        %2842 = vmatmul.bf16.gmra.mxu0 %v1680
        %v2843 = vpop.f32.mrf.mxu0
        %v2844 = vadd.f32 %v2795, %v2843
        %v2845 = vpop.f32.mrf.mxu0
        %v2846 = vadd.f32 %v2797, %v2845
        %2847 = vmatmul.bf16.gmra.mxu0 %v1684
        %v2848 = vpop.f32.mrf.mxu0
        %v2849 = vadd.f32 %v2800, %v2848
        %v2850 = vpop.f32.mrf.mxu0
        %v2851 = vadd.f32 %v2802, %v2850
        %2852 = vmatmul.bf16.gmra.mxu0 %v1688
        %v2853 = vpop.f32.mrf.mxu0
        %v2854 = vadd.f32 %v2805, %v2853
        %v2855 = vpop.f32.mrf.mxu0
        %v2856 = vadd.f32 %v2807, %v2855
        %2857 = vdwg.mxu0
        %2858 = vmatpush.bf16.msra.mxu0 %v2240
        %2859 = vmatpush.bf16.msra.mxu0 %v2236
        %2860 = vmatpush.bf16.msra.mxu0 %v2232
        %2861 = vmatpush.bf16.msra.mxu0 %v2228
        %2862 = vmatpush.bf16.msra.mxu0 %v2224
        %2863 = vmatpush.bf16.msra.mxu0 %v2220
        %2864 = vmatpush.bf16.msra.mxu0 %v2216
        %2865 = vmatpush.bf16.msra.mxu0 %v2212
        %2866 = vmatmul.bf16.gmra.mxu0 %v1657
        %v2867 = vpop.f32.mrf.mxu0
        %v2868 = vadd.f32 %v1820, %v2867
        %v2869 = vpop.f32.mrf.mxu0
        %v2870 = vadd.f32 %v1820, %v2869
        %2871 = vmatmul.bf16.gmra.mxu0 %v1661
        %v2872 = vpop.f32.mrf.mxu0
        %v2873 = vadd.f32 %v1820, %v2872
        %v2874 = vpop.f32.mrf.mxu0
        %v2875 = vadd.f32 %v1820, %v2874
        %2876 = vmatmul.bf16.gmra.mxu0 %v1665
        %v2877 = vpop.f32.mrf.mxu0
        %v2878 = vadd.f32 %v1820, %v2877
        %v2879 = vpop.f32.mrf.mxu0
        %v2880 = vadd.f32 %v1820, %v2879
        %2881 = vmatmul.bf16.gmra.mxu0 %v1669
        %v2882 = vpop.f32.mrf.mxu0
        %v2883 = vadd.f32 %v1820, %v2882
        %v2884 = vpop.f32.mrf.mxu0
        %v2885 = vadd.f32 %v1820, %v2884
        %2886 = vmatmul.bf16.gmra.mxu0 %v1673
        %v2887 = vpop.f32.mrf.mxu0
        %v2888 = vadd.f32 %v1820, %v2887
        %v2889 = vpop.f32.mrf.mxu0
        %v2890 = vadd.f32 %v1820, %v2889
        %2891 = vmatmul.bf16.gmra.mxu0 %v1677
        %v2892 = vpop.f32.mrf.mxu0
        %v2893 = vadd.f32 %v1820, %v2892
        %v2894 = vpop.f32.mrf.mxu0
        %v2895 = vadd.f32 %v1820, %v2894
        %2896 = vmatmul.bf16.gmra.mxu0 %v1681
        %v2897 = vpop.f32.mrf.mxu0
        %v2898 = vadd.f32 %v1820, %v2897
        %v2899 = vpop.f32.mrf.mxu0
        %v2900 = vadd.f32 %v1820, %v2899
        %2901 = vmatmul.bf16.gmra.mxu0 %v1685
        %v2902 = vpop.f32.mrf.mxu0
        %v2903 = vadd.f32 %v1820, %v2902
        %v2904 = vpop.f32.mrf.mxu0
        %v2905 = vadd.f32 %v1820, %v2904
        %2906 = vdwg.mxu0
        %2907 = vmatpush.bf16.msra.mxu0 %v2272
        %2908 = vmatpush.bf16.msra.mxu0 %v2268
        %2909 = vmatpush.bf16.msra.mxu0 %v2264
        %2910 = vmatpush.bf16.msra.mxu0 %v2260
        %2911 = vmatpush.bf16.msra.mxu0 %v2256
        %2912 = vmatpush.bf16.msra.mxu0 %v2252
        %2913 = vmatpush.bf16.msra.mxu0 %v2248
        %2914 = vmatpush.bf16.msra.mxu0 %v2244
        %2915 = vmatmul.bf16.gmra.mxu0 %v1658
        %v2916 = vpop.f32.mrf.mxu0
        %v2917 = vadd.f32 %v2868, %v2916
        %v2918 = vpop.f32.mrf.mxu0
        %v2919 = vadd.f32 %v2870, %v2918
        %2920 = vmatmul.bf16.gmra.mxu0 %v1662
        %v2921 = vpop.f32.mrf.mxu0
        %v2922 = vadd.f32 %v2873, %v2921
        %v2923 = vpop.f32.mrf.mxu0
        %v2924 = vadd.f32 %v2875, %v2923
        %2925 = vmatmul.bf16.gmra.mxu0 %v1666
        %v2926 = vpop.f32.mrf.mxu0
        %v2927 = vadd.f32 %v2878, %v2926
        %v2928 = vpop.f32.mrf.mxu0
        %v2929 = vadd.f32 %v2880, %v2928
        %2930 = vmatmul.bf16.gmra.mxu0 %v1670
        %v2931 = vpop.f32.mrf.mxu0
        %v2932 = vadd.f32 %v2883, %v2931
        %v2933 = vpop.f32.mrf.mxu0
        %v2934 = vadd.f32 %v2885, %v2933
        %2935 = vmatmul.bf16.gmra.mxu0 %v1674
        %v2936 = vpop.f32.mrf.mxu0
        %v2937 = vadd.f32 %v2888, %v2936
        %v2938 = vpop.f32.mrf.mxu0
        %v2939 = vadd.f32 %v2890, %v2938
        %2940 = vmatmul.bf16.gmra.mxu0 %v1678
        %v2941 = vpop.f32.mrf.mxu0
        %v2942 = vadd.f32 %v2893, %v2941
        %v2943 = vpop.f32.mrf.mxu0
        %v2944 = vadd.f32 %v2895, %v2943
        %2945 = vmatmul.bf16.gmra.mxu0 %v1682
        %v2946 = vpop.f32.mrf.mxu0
        %v2947 = vadd.f32 %v2898, %v2946
        %v2948 = vpop.f32.mrf.mxu0
        %v2949 = vadd.f32 %v2900, %v2948
        %2950 = vmatmul.bf16.gmra.mxu0 %v1686
        %v2951 = vpop.f32.mrf.mxu0
        %v2952 = vadd.f32 %v2903, %v2951
        %v2953 = vpop.f32.mrf.mxu0
        %v2954 = vadd.f32 %v2905, %v2953
        %2955 = vdwg.mxu0
        %2956 = vmatpush.bf16.msra.mxu0 %v2304
        %2957 = vmatpush.bf16.msra.mxu0 %v2300
        %2958 = vmatpush.bf16.msra.mxu0 %v2296
        %2959 = vmatpush.bf16.msra.mxu0 %v2292
        %2960 = vmatpush.bf16.msra.mxu0 %v2288
        %2961 = vmatpush.bf16.msra.mxu0 %v2284
        %2962 = vmatpush.bf16.msra.mxu0 %v2280
        %2963 = vmatpush.bf16.msra.mxu0 %v2276
        %2964 = vmatmul.bf16.gmra.mxu0 %v1659
        %v2965 = vpop.f32.mrf.mxu0
        %v2966 = vadd.f32 %v2917, %v2965
        %v2967 = vpop.f32.mrf.mxu0
        %v2968 = vadd.f32 %v2919, %v2967
        %2969 = vmatmul.bf16.gmra.mxu0 %v1663
        %v2970 = vpop.f32.mrf.mxu0
        %v2971 = vadd.f32 %v2922, %v2970
        %v2972 = vpop.f32.mrf.mxu0
        %v2973 = vadd.f32 %v2924, %v2972
        %2974 = vmatmul.bf16.gmra.mxu0 %v1667
        %v2975 = vpop.f32.mrf.mxu0
        %v2976 = vadd.f32 %v2927, %v2975
        %v2977 = vpop.f32.mrf.mxu0
        %v2978 = vadd.f32 %v2929, %v2977
        %2979 = vmatmul.bf16.gmra.mxu0 %v1671
        %v2980 = vpop.f32.mrf.mxu0
        %v2981 = vadd.f32 %v2932, %v2980
        %v2982 = vpop.f32.mrf.mxu0
        %v2983 = vadd.f32 %v2934, %v2982
        %2984 = vmatmul.bf16.gmra.mxu0 %v1675
        %v2985 = vpop.f32.mrf.mxu0
        %v2986 = vadd.f32 %v2937, %v2985
        %v2987 = vpop.f32.mrf.mxu0
        %v2988 = vadd.f32 %v2939, %v2987
        %2989 = vmatmul.bf16.gmra.mxu0 %v1679
        %v2990 = vpop.f32.mrf.mxu0
        %v2991 = vadd.f32 %v2942, %v2990
        %v2992 = vpop.f32.mrf.mxu0
        %v2993 = vadd.f32 %v2944, %v2992
        %2994 = vmatmul.bf16.gmra.mxu0 %v1683
        %v2995 = vpop.f32.mrf.mxu0
        %v2996 = vadd.f32 %v2947, %v2995
        %v2997 = vpop.f32.mrf.mxu0
        %v2998 = vadd.f32 %v2949, %v2997
        %2999 = vmatmul.bf16.gmra.mxu0 %v1687
        %v3000 = vpop.f32.mrf.mxu0
        %v3001 = vadd.f32 %v2952, %v3000
        %v3002 = vpop.f32.mrf.mxu0
        %v3003 = vadd.f32 %v2954, %v3002
        %3004 = vdwg.mxu0
        %3005 = vmatpush.bf16.msra.mxu0 %v2336
        %3006 = vmatpush.bf16.msra.mxu0 %v2332
        %3007 = vmatpush.bf16.msra.mxu0 %v2328
        %3008 = vmatpush.bf16.msra.mxu0 %v2324
        %3009 = vmatpush.bf16.msra.mxu0 %v2320
        %3010 = vmatpush.bf16.msra.mxu0 %v2316
        %3011 = vmatpush.bf16.msra.mxu0 %v2312
        %3012 = vmatpush.bf16.msra.mxu0 %v2308
        %3013 = vmatmul.bf16.gmra.mxu0 %v1660
        %v3014 = vpop.f32.mrf.mxu0
        %v3015 = vadd.f32 %v2966, %v3014
        %v3016 = vpop.f32.mrf.mxu0
        %v3017 = vadd.f32 %v2968, %v3016
        %3018 = vmatmul.bf16.gmra.mxu0 %v1664
        %v3019 = vpop.f32.mrf.mxu0
        %v3020 = vadd.f32 %v2971, %v3019
        %v3021 = vpop.f32.mrf.mxu0
        %v3022 = vadd.f32 %v2973, %v3021
        %3023 = vmatmul.bf16.gmra.mxu0 %v1668
        %v3024 = vpop.f32.mrf.mxu0
        %v3025 = vadd.f32 %v2976, %v3024
        %v3026 = vpop.f32.mrf.mxu0
        %v3027 = vadd.f32 %v2978, %v3026
        %3028 = vmatmul.bf16.gmra.mxu0 %v1672
        %v3029 = vpop.f32.mrf.mxu0
        %v3030 = vadd.f32 %v2981, %v3029
        %v3031 = vpop.f32.mrf.mxu0
        %v3032 = vadd.f32 %v2983, %v3031
        %3033 = vmatmul.bf16.gmra.mxu0 %v1676
        %v3034 = vpop.f32.mrf.mxu0
        %v3035 = vadd.f32 %v2986, %v3034
        %v3036 = vpop.f32.mrf.mxu0
        %v3037 = vadd.f32 %v2988, %v3036
        %3038 = vmatmul.bf16.gmra.mxu0 %v1680
        %v3039 = vpop.f32.mrf.mxu0
        %v3040 = vadd.f32 %v2991, %v3039
        %v3041 = vpop.f32.mrf.mxu0
        %v3042 = vadd.f32 %v2993, %v3041
        %3043 = vmatmul.bf16.gmra.mxu0 %v1684
        %v3044 = vpop.f32.mrf.mxu0
        %v3045 = vadd.f32 %v2996, %v3044
        %v3046 = vpop.f32.mrf.mxu0
        %v3047 = vadd.f32 %v2998, %v3046
        %3048 = vmatmul.bf16.gmra.mxu0 %v1688
        %v3049 = vpop.f32.mrf.mxu0
        %v3050 = vadd.f32 %v3001, %v3049
        %v3051 = vpop.f32.mrf.mxu0
        %v3052 = vadd.f32 %v3003, %v3051
        %3053 = vdwg.mxu0
        %3054 = vmatpush.bf16.msra.mxu0 %v2241
        %3055 = vmatpush.bf16.msra.mxu0 %v2237
        %3056 = vmatpush.bf16.msra.mxu0 %v2233
        %3057 = vmatpush.bf16.msra.mxu0 %v2229
        %3058 = vmatpush.bf16.msra.mxu0 %v2225
        %3059 = vmatpush.bf16.msra.mxu0 %v2221
        %3060 = vmatpush.bf16.msra.mxu0 %v2217
        %3061 = vmatpush.bf16.msra.mxu0 %v2213
        %3062 = vmatmul.bf16.gmra.mxu0 %v1657
        %v3063 = vpop.f32.mrf.mxu0
        %v3064 = vadd.f32 %v1821, %v3063
        %v3065 = vpop.f32.mrf.mxu0
        %v3066 = vadd.f32 %v1821, %v3065
        %3067 = vmatmul.bf16.gmra.mxu0 %v1661
        %v3068 = vpop.f32.mrf.mxu0
        %v3069 = vadd.f32 %v1821, %v3068
        %v3070 = vpop.f32.mrf.mxu0
        %v3071 = vadd.f32 %v1821, %v3070
        %3072 = vmatmul.bf16.gmra.mxu0 %v1665
        %v3073 = vpop.f32.mrf.mxu0
        %v3074 = vadd.f32 %v1821, %v3073
        %v3075 = vpop.f32.mrf.mxu0
        %v3076 = vadd.f32 %v1821, %v3075
        %3077 = vmatmul.bf16.gmra.mxu0 %v1669
        %v3078 = vpop.f32.mrf.mxu0
        %v3079 = vadd.f32 %v1821, %v3078
        %v3080 = vpop.f32.mrf.mxu0
        %v3081 = vadd.f32 %v1821, %v3080
        %3082 = vmatmul.bf16.gmra.mxu0 %v1673
        %v3083 = vpop.f32.mrf.mxu0
        %v3084 = vadd.f32 %v1821, %v3083
        %v3085 = vpop.f32.mrf.mxu0
        %v3086 = vadd.f32 %v1821, %v3085
        %3087 = vmatmul.bf16.gmra.mxu0 %v1677
        %v3088 = vpop.f32.mrf.mxu0
        %v3089 = vadd.f32 %v1821, %v3088
        %v3090 = vpop.f32.mrf.mxu0
        %v3091 = vadd.f32 %v1821, %v3090
        %3092 = vmatmul.bf16.gmra.mxu0 %v1681
        %v3093 = vpop.f32.mrf.mxu0
        %v3094 = vadd.f32 %v1821, %v3093
        %v3095 = vpop.f32.mrf.mxu0
        %v3096 = vadd.f32 %v1821, %v3095
        %3097 = vmatmul.bf16.gmra.mxu0 %v1685
        %v3098 = vpop.f32.mrf.mxu0
        %v3099 = vadd.f32 %v1821, %v3098
        %v3100 = vpop.f32.mrf.mxu0
        %v3101 = vadd.f32 %v1821, %v3100
        %3102 = vdwg.mxu0
        %3103 = vmatpush.bf16.msra.mxu0 %v2273
        %3104 = vmatpush.bf16.msra.mxu0 %v2269
        %3105 = vmatpush.bf16.msra.mxu0 %v2265
        %3106 = vmatpush.bf16.msra.mxu0 %v2261
        %3107 = vmatpush.bf16.msra.mxu0 %v2257
        %3108 = vmatpush.bf16.msra.mxu0 %v2253
        %3109 = vmatpush.bf16.msra.mxu0 %v2249
        %3110 = vmatpush.bf16.msra.mxu0 %v2245
        %3111 = vmatmul.bf16.gmra.mxu0 %v1658
        %v3112 = vpop.f32.mrf.mxu0
        %v3113 = vadd.f32 %v3064, %v3112
        %v3114 = vpop.f32.mrf.mxu0
        %v3115 = vadd.f32 %v3066, %v3114
        %3116 = vmatmul.bf16.gmra.mxu0 %v1662
        %v3117 = vpop.f32.mrf.mxu0
        %v3118 = vadd.f32 %v3069, %v3117
        %v3119 = vpop.f32.mrf.mxu0
        %v3120 = vadd.f32 %v3071, %v3119
        %3121 = vmatmul.bf16.gmra.mxu0 %v1666
        %v3122 = vpop.f32.mrf.mxu0
        %v3123 = vadd.f32 %v3074, %v3122
        %v3124 = vpop.f32.mrf.mxu0
        %v3125 = vadd.f32 %v3076, %v3124
        %3126 = vmatmul.bf16.gmra.mxu0 %v1670
        %v3127 = vpop.f32.mrf.mxu0
        %v3128 = vadd.f32 %v3079, %v3127
        %v3129 = vpop.f32.mrf.mxu0
        %v3130 = vadd.f32 %v3081, %v3129
        %3131 = vmatmul.bf16.gmra.mxu0 %v1674
        %v3132 = vpop.f32.mrf.mxu0
        %v3133 = vadd.f32 %v3084, %v3132
        %v3134 = vpop.f32.mrf.mxu0
        %v3135 = vadd.f32 %v3086, %v3134
        %3136 = vmatmul.bf16.gmra.mxu0 %v1678
        %v3137 = vpop.f32.mrf.mxu0
        %v3138 = vadd.f32 %v3089, %v3137
        %v3139 = vpop.f32.mrf.mxu0
        %v3140 = vadd.f32 %v3091, %v3139
        %3141 = vmatmul.bf16.gmra.mxu0 %v1682
        %v3142 = vpop.f32.mrf.mxu0
        %v3143 = vadd.f32 %v3094, %v3142
        %v3144 = vpop.f32.mrf.mxu0
        %v3145 = vadd.f32 %v3096, %v3144
        %3146 = vmatmul.bf16.gmra.mxu0 %v1686
        %v3147 = vpop.f32.mrf.mxu0
        %v3148 = vadd.f32 %v3099, %v3147
        %v3149 = vpop.f32.mrf.mxu0
        %v3150 = vadd.f32 %v3101, %v3149
        %3151 = vdwg.mxu0
        %3152 = vmatpush.bf16.msra.mxu0 %v2305
        %3153 = vmatpush.bf16.msra.mxu0 %v2301
        %3154 = vmatpush.bf16.msra.mxu0 %v2297
        %3155 = vmatpush.bf16.msra.mxu0 %v2293
        %3156 = vmatpush.bf16.msra.mxu0 %v2289
        %3157 = vmatpush.bf16.msra.mxu0 %v2285
        %3158 = vmatpush.bf16.msra.mxu0 %v2281
        %3159 = vmatpush.bf16.msra.mxu0 %v2277
        %3160 = vmatmul.bf16.gmra.mxu0 %v1659
        %v3161 = vpop.f32.mrf.mxu0
        %v3162 = vadd.f32 %v3113, %v3161
        %v3163 = vpop.f32.mrf.mxu0
        %v3164 = vadd.f32 %v3115, %v3163
        %3165 = vmatmul.bf16.gmra.mxu0 %v1663
        %v3166 = vpop.f32.mrf.mxu0
        %v3167 = vadd.f32 %v3118, %v3166
        %v3168 = vpop.f32.mrf.mxu0
        %v3169 = vadd.f32 %v3120, %v3168
        %3170 = vmatmul.bf16.gmra.mxu0 %v1667
        %v3171 = vpop.f32.mrf.mxu0
        %v3172 = vadd.f32 %v3123, %v3171
        %v3173 = vpop.f32.mrf.mxu0
        %v3174 = vadd.f32 %v3125, %v3173
        %3175 = vmatmul.bf16.gmra.mxu0 %v1671
        %v3176 = vpop.f32.mrf.mxu0
        %v3177 = vadd.f32 %v3128, %v3176
        %v3178 = vpop.f32.mrf.mxu0
        %v3179 = vadd.f32 %v3130, %v3178
        %3180 = vmatmul.bf16.gmra.mxu0 %v1675
        %v3181 = vpop.f32.mrf.mxu0
        %v3182 = vadd.f32 %v3133, %v3181
        %v3183 = vpop.f32.mrf.mxu0
        %v3184 = vadd.f32 %v3135, %v3183
        %3185 = vmatmul.bf16.gmra.mxu0 %v1679
        %v3186 = vpop.f32.mrf.mxu0
        %v3187 = vadd.f32 %v3138, %v3186
        %v3188 = vpop.f32.mrf.mxu0
        %v3189 = vadd.f32 %v3140, %v3188
        %3190 = vmatmul.bf16.gmra.mxu0 %v1683
        %v3191 = vpop.f32.mrf.mxu0
        %v3192 = vadd.f32 %v3143, %v3191
        %v3193 = vpop.f32.mrf.mxu0
        %v3194 = vadd.f32 %v3145, %v3193
        %3195 = vmatmul.bf16.gmra.mxu0 %v1687
        %v3196 = vpop.f32.mrf.mxu0
        %v3197 = vadd.f32 %v3148, %v3196
        %v3198 = vpop.f32.mrf.mxu0
        %v3199 = vadd.f32 %v3150, %v3198
        %3200 = vdwg.mxu0
        %3201 = vmatpush.bf16.msra.mxu0 %v2337
        %3202 = vmatpush.bf16.msra.mxu0 %v2333
        %3203 = vmatpush.bf16.msra.mxu0 %v2329
        %3204 = vmatpush.bf16.msra.mxu0 %v2325
        %3205 = vmatpush.bf16.msra.mxu0 %v2321
        %3206 = vmatpush.bf16.msra.mxu0 %v2317
        %3207 = vmatpush.bf16.msra.mxu0 %v2313
        %3208 = vmatpush.bf16.msra.mxu0 %v2309
        %3209 = vmatmul.bf16.gmra.mxu0 %v1660
        %v3210 = vpop.f32.mrf.mxu0
        %v3211 = vadd.f32 %v3162, %v3210
        %v3212 = vpop.f32.mrf.mxu0
        %v3213 = vadd.f32 %v3164, %v3212
        %3214 = vmatmul.bf16.gmra.mxu0 %v1664
        %v3215 = vpop.f32.mrf.mxu0
        %v3216 = vadd.f32 %v3167, %v3215
        %v3217 = vpop.f32.mrf.mxu0
        %v3218 = vadd.f32 %v3169, %v3217
        %3219 = vmatmul.bf16.gmra.mxu0 %v1668
        %v3220 = vpop.f32.mrf.mxu0
        %v3221 = vadd.f32 %v3172, %v3220
        %v3222 = vpop.f32.mrf.mxu0
        %v3223 = vadd.f32 %v3174, %v3222
        %3224 = vmatmul.bf16.gmra.mxu0 %v1672
        %v3225 = vpop.f32.mrf.mxu0
        %v3226 = vadd.f32 %v3177, %v3225
        %v3227 = vpop.f32.mrf.mxu0
        %v3228 = vadd.f32 %v3179, %v3227
        %3229 = vmatmul.bf16.gmra.mxu0 %v1676
        %v3230 = vpop.f32.mrf.mxu0
        %v3231 = vadd.f32 %v3182, %v3230
        %v3232 = vpop.f32.mrf.mxu0
        %v3233 = vadd.f32 %v3184, %v3232
        %3234 = vmatmul.bf16.gmra.mxu0 %v1680
        %v3235 = vpop.f32.mrf.mxu0
        %v3236 = vadd.f32 %v3187, %v3235
        %v3237 = vpop.f32.mrf.mxu0
        %v3238 = vadd.f32 %v3189, %v3237
        %3239 = vmatmul.bf16.gmra.mxu0 %v1684
        %v3240 = vpop.f32.mrf.mxu0
        %v3241 = vadd.f32 %v3192, %v3240
        %v3242 = vpop.f32.mrf.mxu0
        %v3243 = vadd.f32 %v3194, %v3242
        %3244 = vmatmul.bf16.gmra.mxu0 %v1688
        %v3245 = vpop.f32.mrf.mxu0
        %v3246 = vadd.f32 %v3197, %v3245
        %v3247 = vpop.f32.mrf.mxu0
        %v3248 = vadd.f32 %v3199, %v3247
        %3249 = vdwg.mxu0
        %v3250 = vmax.f32 %v2623, 0.0
        %v3251 = vmax.f32 %v2819, 0.0
        %v3252 = vmax.f32 %v3015, 0.0
        %v3253 = vmax.f32 %v3211, 0.0
        %v3254 = vmax.f32 %v2625, 0.0
        %v3255 = vmax.f32 %v2821, 0.0
        %v3256 = vmax.f32 %v3017, 0.0
        %v3257 = vmax.f32 %v3213, 0.0
        %v3258 = vmax.f32 %v2628, 0.0
        %v3259 = vmax.f32 %v2824, 0.0
        %v3260 = vmax.f32 %v3020, 0.0
        %v3261 = vmax.f32 %v3216, 0.0
        %v3262 = vmax.f32 %v2630, 0.0
        %v3263 = vmax.f32 %v2826, 0.0
        %v3264 = vmax.f32 %v3022, 0.0
        %v3265 = vmax.f32 %v3218, 0.0
        %v3266 = vmax.f32 %v2633, 0.0
        %v3267 = vmax.f32 %v2829, 0.0
        %v3268 = vmax.f32 %v3025, 0.0
        %v3269 = vmax.f32 %v3221, 0.0
        %v3270 = vmax.f32 %v2635, 0.0
        %v3271 = vmax.f32 %v2831, 0.0
        %v3272 = vmax.f32 %v3027, 0.0
        %v3273 = vmax.f32 %v3223, 0.0
        %v3274 = vmax.f32 %v2638, 0.0
        %v3275 = vmax.f32 %v2834, 0.0
        %v3276 = vmax.f32 %v3030, 0.0
        %v3277 = vmax.f32 %v3226, 0.0
        %v3278 = vmax.f32 %v2640, 0.0
        %v3279 = vmax.f32 %v2836, 0.0
        %v3280 = vmax.f32 %v3032, 0.0
        %v3281 = vmax.f32 %v3228, 0.0
        %v3282 = vmax.f32 %v2643, 0.0
        %v3283 = vmax.f32 %v2839, 0.0
        %v3284 = vmax.f32 %v3035, 0.0
        %v3285 = vmax.f32 %v3231, 0.0
        %v3286 = vmax.f32 %v2645, 0.0
        %v3287 = vmax.f32 %v2841, 0.0
        %v3288 = vmax.f32 %v3037, 0.0
        %v3289 = vmax.f32 %v3233, 0.0
        %v3290 = vmax.f32 %v2648, 0.0
        %v3291 = vmax.f32 %v2844, 0.0
        %v3292 = vmax.f32 %v3040, 0.0
        %v3293 = vmax.f32 %v3236, 0.0
        %v3294 = vmax.f32 %v2650, 0.0
        %v3295 = vmax.f32 %v2846, 0.0
        %v3296 = vmax.f32 %v3042, 0.0
        %v3297 = vmax.f32 %v3238, 0.0
        %v3298 = vmax.f32 %v2653, 0.0
        %v3299 = vmax.f32 %v2849, 0.0
        %v3300 = vmax.f32 %v3045, 0.0
        %v3301 = vmax.f32 %v3241, 0.0
        %v3302 = vmax.f32 %v2655, 0.0
        %v3303 = vmax.f32 %v2851, 0.0
        %v3304 = vmax.f32 %v3047, 0.0
        %v3305 = vmax.f32 %v3243, 0.0
        %v3306 = vmax.f32 %v2658, 0.0
        %v3307 = vmax.f32 %v2854, 0.0
        %v3308 = vmax.f32 %v3050, 0.0
        %v3309 = vmax.f32 %v3246, 0.0
        %v3310 = vmax.f32 %v2660, 0.0
        %v3311 = vmax.f32 %v2856, 0.0
        %v3312 = vmax.f32 %v3052, 0.0
        %v3313 = vmax.f32 %v3248, 0.0
        %v3314 = vadd.f32 %v3250, %v3251
        %v3315 = vadd.f32 %v3314, %v3252
        %v3316 = vadd.f32 %v3315, %v3253
        %3317 = vadd.xlane.f32.xlu0 %v3316
        %v3318 = vpop.xlane.xlu0 %3317
        %v3319 = vadd.f32 %v3254, %v3255
        %v3320 = vadd.f32 %v3319, %v3256
        %v3321 = vadd.f32 %v3320, %v3257
        %3322 = vadd.xlane.f32.xlu0 %v3321
        %v3323 = vpop.xlane.xlu0 %3322
        %v3324 = vadd.f32 %v3258, %v3259
        %v3325 = vadd.f32 %v3324, %v3260
        %v3326 = vadd.f32 %v3325, %v3261
        %3327 = vadd.xlane.f32.xlu0 %v3326
        %v3328 = vpop.xlane.xlu0 %3327
        %v3329 = vadd.f32 %v3262, %v3263
        %v3330 = vadd.f32 %v3329, %v3264
        %v3331 = vadd.f32 %v3330, %v3265
        %3332 = vadd.xlane.f32.xlu0 %v3331
        %v3333 = vpop.xlane.xlu0 %3332
        %v3334 = vadd.f32 %v3266, %v3267
        %v3335 = vadd.f32 %v3334, %v3268
        %v3336 = vadd.f32 %v3335, %v3269
        %3337 = vadd.xlane.f32.xlu0 %v3336
        %v3338 = vpop.xlane.xlu0 %3337
        %v3339 = vadd.f32 %v3270, %v3271
        %v3340 = vadd.f32 %v3339, %v3272
        %v3341 = vadd.f32 %v3340, %v3273
        %3342 = vadd.xlane.f32.xlu0 %v3341
        %v3343 = vpop.xlane.xlu0 %3342
        %v3344 = vadd.f32 %v3274, %v3275
        %v3345 = vadd.f32 %v3344, %v3276
        %v3346 = vadd.f32 %v3345, %v3277
        %3347 = vadd.xlane.f32.xlu0 %v3346
        %v3348 = vpop.xlane.xlu0 %3347
        %v3349 = vadd.f32 %v3278, %v3279
        %v3350 = vadd.f32 %v3349, %v3280
        %v3351 = vadd.f32 %v3350, %v3281
        %3352 = vadd.xlane.f32.xlu0 %v3351
        %v3353 = vpop.xlane.xlu0 %3352
        %v3354 = vadd.f32 %v3282, %v3283
        %v3355 = vadd.f32 %v3354, %v3284
        %v3356 = vadd.f32 %v3355, %v3285
        %3357 = vadd.xlane.f32.xlu0 %v3356
        %v3358 = vpop.xlane.xlu0 %3357
        %v3359 = vadd.f32 %v3286, %v3287
        %v3360 = vadd.f32 %v3359, %v3288
        %v3361 = vadd.f32 %v3360, %v3289
        %3362 = vadd.xlane.f32.xlu0 %v3361
        %v3363 = vpop.xlane.xlu0 %3362
        %v3364 = vadd.f32 %v3290, %v3291
        %v3365 = vadd.f32 %v3364, %v3292
        %v3366 = vadd.f32 %v3365, %v3293
        %3367 = vadd.xlane.f32.xlu0 %v3366
        %v3368 = vpop.xlane.xlu0 %3367
        %v3369 = vadd.f32 %v3294, %v3295
        %v3370 = vadd.f32 %v3369, %v3296
        %v3371 = vadd.f32 %v3370, %v3297
        %3372 = vadd.xlane.f32.xlu0 %v3371
        %v3373 = vpop.xlane.xlu0 %3372
        %v3374 = vadd.f32 %v3298, %v3299
        %v3375 = vadd.f32 %v3374, %v3300
        %v3376 = vadd.f32 %v3375, %v3301
        %3377 = vadd.xlane.f32.xlu0 %v3376
        %v3378 = vpop.xlane.xlu0 %3377
        %v3379 = vadd.f32 %v3302, %v3303
        %v3380 = vadd.f32 %v3379, %v3304
        %v3381 = vadd.f32 %v3380, %v3305
        %3382 = vadd.xlane.f32.xlu0 %v3381
        %v3383 = vpop.xlane.xlu0 %3382
        %v3384 = vadd.f32 %v3306, %v3307
        %v3385 = vadd.f32 %v3384, %v3308
        %v3386 = vadd.f32 %v3385, %v3309
        %3387 = vadd.xlane.f32.xlu0 %v3386
        %v3388 = vpop.xlane.xlu0 %3387
        %v3389 = vadd.f32 %v3310, %v3311
        %v3390 = vadd.f32 %v3389, %v3312
        %v3391 = vadd.f32 %v3390, %v3313
        %3392 = vadd.xlane.f32.xlu0 %v3391
        %v3393 = vpop.xlane.xlu0 %3392
        %v3394 = vmul.f32 %v3250, %v3250
        %v3395 = vmul.f32 %v3251, %v3251
        %v3396 = vmul.f32 %v3252, %v3252
        %v3397 = vmul.f32 %v3253, %v3253
        %v3398 = vmul.f32 %v3254, %v3254
        %v3399 = vmul.f32 %v3255, %v3255
        %v3400 = vmul.f32 %v3256, %v3256
        %v3401 = vmul.f32 %v3257, %v3257
        %v3402 = vmul.f32 %v3258, %v3258
        %v3403 = vmul.f32 %v3259, %v3259
        %v3404 = vmul.f32 %v3260, %v3260
        %v3405 = vmul.f32 %v3261, %v3261
        %v3406 = vmul.f32 %v3262, %v3262
        %v3407 = vmul.f32 %v3263, %v3263
        %v3408 = vmul.f32 %v3264, %v3264
        %v3409 = vmul.f32 %v3265, %v3265
        %v3410 = vmul.f32 %v3266, %v3266
        %v3411 = vmul.f32 %v3267, %v3267
        %v3412 = vmul.f32 %v3268, %v3268
        %v3413 = vmul.f32 %v3269, %v3269
        %v3414 = vmul.f32 %v3270, %v3270
        %v3415 = vmul.f32 %v3271, %v3271
        %v3416 = vmul.f32 %v3272, %v3272
        %v3417 = vmul.f32 %v3273, %v3273
        %v3418 = vmul.f32 %v3274, %v3274
        %v3419 = vmul.f32 %v3275, %v3275
        %v3420 = vmul.f32 %v3276, %v3276
        %v3421 = vmul.f32 %v3277, %v3277
        %v3422 = vmul.f32 %v3278, %v3278
        %v3423 = vmul.f32 %v3279, %v3279
        %v3424 = vmul.f32 %v3280, %v3280
        %v3425 = vmul.f32 %v3281, %v3281
        %v3426 = vmul.f32 %v3282, %v3282
        %v3427 = vmul.f32 %v3283, %v3283
        %v3428 = vmul.f32 %v3284, %v3284
        %v3429 = vmul.f32 %v3285, %v3285
        %v3430 = vmul.f32 %v3286, %v3286
        %v3431 = vmul.f32 %v3287, %v3287
        %v3432 = vmul.f32 %v3288, %v3288
        %v3433 = vmul.f32 %v3289, %v3289
        %v3434 = vmul.f32 %v3290, %v3290
        %v3435 = vmul.f32 %v3291, %v3291
        %v3436 = vmul.f32 %v3292, %v3292
        %v3437 = vmul.f32 %v3293, %v3293
        %v3438 = vmul.f32 %v3294, %v3294
        %v3439 = vmul.f32 %v3295, %v3295
        %v3440 = vmul.f32 %v3296, %v3296
        %v3441 = vmul.f32 %v3297, %v3297
        %v3442 = vmul.f32 %v3298, %v3298
        %v3443 = vmul.f32 %v3299, %v3299
        %v3444 = vmul.f32 %v3300, %v3300
        %v3445 = vmul.f32 %v3301, %v3301
        %v3446 = vmul.f32 %v3302, %v3302
        %v3447 = vmul.f32 %v3303, %v3303
        %v3448 = vmul.f32 %v3304, %v3304
        %v3449 = vmul.f32 %v3305, %v3305
        %v3450 = vmul.f32 %v3306, %v3306
        %v3451 = vmul.f32 %v3307, %v3307
        %v3452 = vmul.f32 %v3308, %v3308
        %v3453 = vmul.f32 %v3309, %v3309
        %v3454 = vmul.f32 %v3310, %v3310
        %v3455 = vmul.f32 %v3311, %v3311
        %v3456 = vmul.f32 %v3312, %v3312
        %v3457 = vmul.f32 %v3313, %v3313
        %v3458 = vadd.f32 %v3394, %v3395
        %v3459 = vadd.f32 %v3458, %v3396
        %v3460 = vadd.f32 %v3459, %v3397
        %3461 = vadd.xlane.f32.xlu0 %v3460
        %v3462 = vpop.xlane.xlu0 %3461
        %v3463 = vadd.f32 %v3398, %v3399
        %v3464 = vadd.f32 %v3463, %v3400
        %v3465 = vadd.f32 %v3464, %v3401
        %3466 = vadd.xlane.f32.xlu0 %v3465
        %v3467 = vpop.xlane.xlu0 %3466
        %v3468 = vadd.f32 %v3402, %v3403
        %v3469 = vadd.f32 %v3468, %v3404
        %v3470 = vadd.f32 %v3469, %v3405
        %3471 = vadd.xlane.f32.xlu0 %v3470
        %v3472 = vpop.xlane.xlu0 %3471
        %v3473 = vadd.f32 %v3406, %v3407
        %v3474 = vadd.f32 %v3473, %v3408
        %v3475 = vadd.f32 %v3474, %v3409
        %3476 = vadd.xlane.f32.xlu0 %v3475
        %v3477 = vpop.xlane.xlu0 %3476
        %v3478 = vadd.f32 %v3410, %v3411
        %v3479 = vadd.f32 %v3478, %v3412
        %v3480 = vadd.f32 %v3479, %v3413
        %3481 = vadd.xlane.f32.xlu0 %v3480
        %v3482 = vpop.xlane.xlu0 %3481
        %v3483 = vadd.f32 %v3414, %v3415
        %v3484 = vadd.f32 %v3483, %v3416
        %v3485 = vadd.f32 %v3484, %v3417
        %3486 = vadd.xlane.f32.xlu0 %v3485
        %v3487 = vpop.xlane.xlu0 %3486
        %v3488 = vadd.f32 %v3418, %v3419
        %v3489 = vadd.f32 %v3488, %v3420
        %v3490 = vadd.f32 %v3489, %v3421
        %3491 = vadd.xlane.f32.xlu0 %v3490
        %v3492 = vpop.xlane.xlu0 %3491
        %v3493 = vadd.f32 %v3422, %v3423
        %v3494 = vadd.f32 %v3493, %v3424
        %v3495 = vadd.f32 %v3494, %v3425
        %3496 = vadd.xlane.f32.xlu0 %v3495
        %v3497 = vpop.xlane.xlu0 %3496
        %v3498 = vadd.f32 %v3426, %v3427
        %v3499 = vadd.f32 %v3498, %v3428
        %v3500 = vadd.f32 %v3499, %v3429
        %3501 = vadd.xlane.f32.xlu0 %v3500
        %v3502 = vpop.xlane.xlu0 %3501
        %v3503 = vadd.f32 %v3430, %v3431
        %v3504 = vadd.f32 %v3503, %v3432
        %v3505 = vadd.f32 %v3504, %v3433
        %3506 = vadd.xlane.f32.xlu0 %v3505
        %v3507 = vpop.xlane.xlu0 %3506
        %v3508 = vadd.f32 %v3434, %v3435
        %v3509 = vadd.f32 %v3508, %v3436
        %v3510 = vadd.f32 %v3509, %v3437
        %3511 = vadd.xlane.f32.xlu0 %v3510
        %v3512 = vpop.xlane.xlu0 %3511
        %v3513 = vadd.f32 %v3438, %v3439
        %v3514 = vadd.f32 %v3513, %v3440
        %v3515 = vadd.f32 %v3514, %v3441
        %3516 = vadd.xlane.f32.xlu0 %v3515
        %v3517 = vpop.xlane.xlu0 %3516
        %v3518 = vadd.f32 %v3442, %v3443
        %v3519 = vadd.f32 %v3518, %v3444
        %v3520 = vadd.f32 %v3519, %v3445
        %3521 = vadd.xlane.f32.xlu0 %v3520
        %v3522 = vpop.xlane.xlu0 %3521
        %v3523 = vadd.f32 %v3446, %v3447
        %v3524 = vadd.f32 %v3523, %v3448
        %v3525 = vadd.f32 %v3524, %v3449
        %3526 = vadd.xlane.f32.xlu0 %v3525
        %v3527 = vpop.xlane.xlu0 %3526
        %v3528 = vadd.f32 %v3450, %v3451
        %v3529 = vadd.f32 %v3528, %v3452
        %v3530 = vadd.f32 %v3529, %v3453
        %3531 = vadd.xlane.f32.xlu0 %v3530
        %v3532 = vpop.xlane.xlu0 %3531
        %v3533 = vadd.f32 %v3454, %v3455
        %v3534 = vadd.f32 %v3533, %v3456
        %v3535 = vadd.f32 %v3534, %v3457
        %3536 = vadd.xlane.f32.xlu0 %v3535
        %v3537 = vpop.xlane.xlu0 %3536
        %v3538 = vmul.f32 %v3318, %v1062
        %v3539 = vmul.f32 %v3323, %v1062
        %v3540 = vmul.f32 %v3328, %v1062
        %v3541 = vmul.f32 %v3333, %v1062
        %v3542 = vmul.f32 %v3338, %v1062
        %v3543 = vmul.f32 %v3343, %v1062
        %v3544 = vmul.f32 %v3348, %v1062
        %v3545 = vmul.f32 %v3353, %v1062
        %v3546 = vmul.f32 %v3358, %v1062
        %v3547 = vmul.f32 %v3363, %v1062
        %v3548 = vmul.f32 %v3368, %v1062
        %v3549 = vmul.f32 %v3373, %v1062
        %v3550 = vmul.f32 %v3378, %v1062
        %v3551 = vmul.f32 %v3383, %v1062
        %v3552 = vmul.f32 %v3388, %v1062
        %v3553 = vmul.f32 %v3393, %v1062
        %v3554 = vmul.f32 %v3462, %v1062
        %v3555 = vmul.f32 %v3467, %v1062
        %v3556 = vmul.f32 %v3472, %v1062
        %v3557 = vmul.f32 %v3477, %v1062
        %v3558 = vmul.f32 %v3482, %v1062
        %v3559 = vmul.f32 %v3487, %v1062
        %v3560 = vmul.f32 %v3492, %v1062
        %v3561 = vmul.f32 %v3497, %v1062
        %v3562 = vmul.f32 %v3502, %v1062
        %v3563 = vmul.f32 %v3507, %v1062
        %v3564 = vmul.f32 %v3512, %v1062
        %v3565 = vmul.f32 %v3517, %v1062
        %v3566 = vmul.f32 %v3522, %v1062
        %v3567 = vmul.f32 %v3527, %v1062
        %v3568 = vmul.f32 %v3532, %v1062
        %v3569 = vmul.f32 %v3537, %v1062
        %v3570 = vmul.f32 %v3538, %v3538
        %v3571 = vmul.f32 %v3539, %v3539
        %v3572 = vmul.f32 %v3540, %v3540
        %v3573 = vmul.f32 %v3541, %v3541
        %v3574 = vmul.f32 %v3542, %v3542
        %v3575 = vmul.f32 %v3543, %v3543
        %v3576 = vmul.f32 %v3544, %v3544
        %v3577 = vmul.f32 %v3545, %v3545
        %v3578 = vmul.f32 %v3546, %v3546
        %v3579 = vmul.f32 %v3547, %v3547
        %v3580 = vmul.f32 %v3548, %v3548
        %v3581 = vmul.f32 %v3549, %v3549
        %v3582 = vmul.f32 %v3550, %v3550
        %v3583 = vmul.f32 %v3551, %v3551
        %v3584 = vmul.f32 %v3552, %v3552
        %v3585 = vmul.f32 %v3553, %v3553
        %v3586 = vsub.f32 %v3554, %v3570
        %v3587 = vsub.f32 %v3555, %v3571
        %v3588 = vsub.f32 %v3556, %v3572
        %v3589 = vsub.f32 %v3557, %v3573
        %v3590 = vsub.f32 %v3558, %v3574
        %v3591 = vsub.f32 %v3559, %v3575
        %v3592 = vsub.f32 %v3560, %v3576
        %v3593 = vsub.f32 %v3561, %v3577
        %v3594 = vsub.f32 %v3562, %v3578
        %v3595 = vsub.f32 %v3563, %v3579
        %v3596 = vsub.f32 %v3564, %v3580
        %v3597 = vsub.f32 %v3565, %v3581
        %v3598 = vsub.f32 %v3566, %v3582
        %v3599 = vsub.f32 %v3567, %v3583
        %v3600 = vsub.f32 %v3568, %v3584
        %v3601 = vsub.f32 %v3569, %v3585
        %v3602 = vmax.f32 %v3586, 0.0
        %v3603 = vmax.f32 %v3587, 0.0
        %v3604 = vmax.f32 %v3588, 0.0
        %v3605 = vmax.f32 %v3589, 0.0
        %v3606 = vmax.f32 %v3590, 0.0
        %v3607 = vmax.f32 %v3591, 0.0
        %v3608 = vmax.f32 %v3592, 0.0
        %v3609 = vmax.f32 %v3593, 0.0
        %v3610 = vmax.f32 %v3594, 0.0
        %v3611 = vmax.f32 %v3595, 0.0
        %v3612 = vmax.f32 %v3596, 0.0
        %v3613 = vmax.f32 %v3597, 0.0
        %v3614 = vmax.f32 %v3598, 0.0
        %v3615 = vmax.f32 %v3599, 0.0
        %v3616 = vmax.f32 %v3600, 0.0
        %v3617 = vmax.f32 %v3601, 0.0
        %v3618 = vsub.f32 %v3250, %v3538
        %v3619 = vsub.f32 %v3251, %v3538
        %v3620 = vsub.f32 %v3252, %v3538
        %v3621 = vsub.f32 %v3253, %v3538
        %v3622 = vsub.f32 %v3254, %v3539
        %v3623 = vsub.f32 %v3255, %v3539
        %v3624 = vsub.f32 %v3256, %v3539
        %v3625 = vsub.f32 %v3257, %v3539
        %v3626 = vsub.f32 %v3258, %v3540
        %v3627 = vsub.f32 %v3259, %v3540
        %v3628 = vsub.f32 %v3260, %v3540
        %v3629 = vsub.f32 %v3261, %v3540
        %v3630 = vsub.f32 %v3262, %v3541
        %v3631 = vsub.f32 %v3263, %v3541
        %v3632 = vsub.f32 %v3264, %v3541
        %v3633 = vsub.f32 %v3265, %v3541
        %v3634 = vsub.f32 %v3266, %v3542
        %v3635 = vsub.f32 %v3267, %v3542
        %v3636 = vsub.f32 %v3268, %v3542
        %v3637 = vsub.f32 %v3269, %v3542
        %v3638 = vsub.f32 %v3270, %v3543
        %v3639 = vsub.f32 %v3271, %v3543
        %v3640 = vsub.f32 %v3272, %v3543
        %v3641 = vsub.f32 %v3273, %v3543
        %v3642 = vsub.f32 %v3274, %v3544
        %v3643 = vsub.f32 %v3275, %v3544
        %v3644 = vsub.f32 %v3276, %v3544
        %v3645 = vsub.f32 %v3277, %v3544
        %v3646 = vsub.f32 %v3278, %v3545
        %v3647 = vsub.f32 %v3279, %v3545
        %v3648 = vsub.f32 %v3280, %v3545
        %v3649 = vsub.f32 %v3281, %v3545
        %v3650 = vsub.f32 %v3282, %v3546
        %v3651 = vsub.f32 %v3283, %v3546
        %v3652 = vsub.f32 %v3284, %v3546
        %v3653 = vsub.f32 %v3285, %v3546
        %v3654 = vsub.f32 %v3286, %v3547
        %v3655 = vsub.f32 %v3287, %v3547
        %v3656 = vsub.f32 %v3288, %v3547
        %v3657 = vsub.f32 %v3289, %v3547
        %v3658 = vsub.f32 %v3290, %v3548
        %v3659 = vsub.f32 %v3291, %v3548
        %v3660 = vsub.f32 %v3292, %v3548
        %v3661 = vsub.f32 %v3293, %v3548
        %v3662 = vsub.f32 %v3294, %v3549
        %v3663 = vsub.f32 %v3295, %v3549
        %v3664 = vsub.f32 %v3296, %v3549
        %v3665 = vsub.f32 %v3297, %v3549
        %v3666 = vsub.f32 %v3298, %v3550
        %v3667 = vsub.f32 %v3299, %v3550
        %v3668 = vsub.f32 %v3300, %v3550
        %v3669 = vsub.f32 %v3301, %v3550
        %v3670 = vsub.f32 %v3302, %v3551
        %v3671 = vsub.f32 %v3303, %v3551
        %v3672 = vsub.f32 %v3304, %v3551
        %v3673 = vsub.f32 %v3305, %v3551
        %v3674 = vsub.f32 %v3306, %v3552
        %v3675 = vsub.f32 %v3307, %v3552
        %v3676 = vsub.f32 %v3308, %v3552
        %v3677 = vsub.f32 %v3309, %v3552
        %v3678 = vsub.f32 %v3310, %v3553
        %v3679 = vsub.f32 %v3311, %v3553
        %v3680 = vsub.f32 %v3312, %v3553
        %v3681 = vsub.f32 %v3313, %v3553
        %v3682 = vadd.f32 %v3602, 1e-05
        %v3683 = vadd.f32 %v3603, 1e-05
        %v3684 = vadd.f32 %v3604, 1e-05
        %v3685 = vadd.f32 %v3605, 1e-05
        %v3686 = vadd.f32 %v3606, 1e-05
        %v3687 = vadd.f32 %v3607, 1e-05
        %v3688 = vadd.f32 %v3608, 1e-05
        %v3689 = vadd.f32 %v3609, 1e-05
        %v3690 = vadd.f32 %v3610, 1e-05
        %v3691 = vadd.f32 %v3611, 1e-05
        %v3692 = vadd.f32 %v3612, 1e-05
        %v3693 = vadd.f32 %v3613, 1e-05
        %v3694 = vadd.f32 %v3614, 1e-05
        %v3695 = vadd.f32 %v3615, 1e-05
        %v3696 = vadd.f32 %v3616, 1e-05
        %v3697 = vadd.f32 %v3617, 1e-05
        %v3698 = vrsqrt.pop %v3682
        %v3699 = vmul.f32 %v3698, %v3682
        %v3700 = vmul.f32 %v3699, %v3698
        %v3701 = vmul.f32 0.5, %v3700
        %v3702 = vsub.f32 1.5, %v3701
        %v3703 = vmul.f32 %v3698, %v3702
        %vm3704 = vweird.f32 %v3682
        %vm3705 = vweird.f32 %v3698
        %vm3706 = vmor %vm3704, %vm3705
        %v3707 = vsel %vm3706, %v3698, %v3703
        %v3708 = vrsqrt.pop %v3683
        %v3709 = vmul.f32 %v3708, %v3683
        %v3710 = vmul.f32 %v3709, %v3708
        %v3711 = vmul.f32 0.5, %v3710
        %v3712 = vsub.f32 1.5, %v3711
        %v3713 = vmul.f32 %v3708, %v3712
        %vm3714 = vweird.f32 %v3683
        %vm3715 = vweird.f32 %v3708
        %vm3716 = vmor %vm3714, %vm3715
        %v3717 = vsel %vm3716, %v3708, %v3713
        %v3718 = vrsqrt.pop %v3684
        %v3719 = vmul.f32 %v3718, %v3684
        %v3720 = vmul.f32 %v3719, %v3718
        %v3721 = vmul.f32 0.5, %v3720
        %v3722 = vsub.f32 1.5, %v3721
        %v3723 = vmul.f32 %v3718, %v3722
        %vm3724 = vweird.f32 %v3684
        %vm3725 = vweird.f32 %v3718
        %vm3726 = vmor %vm3724, %vm3725
        %v3727 = vsel %vm3726, %v3718, %v3723
        %v3728 = vrsqrt.pop %v3685
        %v3729 = vmul.f32 %v3728, %v3685
        %v3730 = vmul.f32 %v3729, %v3728
        %v3731 = vmul.f32 0.5, %v3730
        %v3732 = vsub.f32 1.5, %v3731
        %v3733 = vmul.f32 %v3728, %v3732
        %vm3734 = vweird.f32 %v3685
        %vm3735 = vweird.f32 %v3728
        %vm3736 = vmor %vm3734, %vm3735
        %v3737 = vsel %vm3736, %v3728, %v3733
        %v3738 = vrsqrt.pop %v3686
        %v3739 = vmul.f32 %v3738, %v3686
        %v3740 = vmul.f32 %v3739, %v3738
        %v3741 = vmul.f32 0.5, %v3740
        %v3742 = vsub.f32 1.5, %v3741
        %v3743 = vmul.f32 %v3738, %v3742
        %vm3744 = vweird.f32 %v3686
        %vm3745 = vweird.f32 %v3738
        %vm3746 = vmor %vm3744, %vm3745
        %v3747 = vsel %vm3746, %v3738, %v3743
        %v3748 = vrsqrt.pop %v3687
        %v3749 = vmul.f32 %v3748, %v3687
        %v3750 = vmul.f32 %v3749, %v3748
        %v3751 = vmul.f32 0.5, %v3750
        %v3752 = vsub.f32 1.5, %v3751
        %v3753 = vmul.f32 %v3748, %v3752
        %vm3754 = vweird.f32 %v3687
        %vm3755 = vweird.f32 %v3748
        %vm3756 = vmor %vm3754, %vm3755
        %v3757 = vsel %vm3756, %v3748, %v3753
        %v3758 = vrsqrt.pop %v3688
        %v3759 = vmul.f32 %v3758, %v3688
        %v3760 = vmul.f32 %v3759, %v3758
        %v3761 = vmul.f32 0.5, %v3760
        %v3762 = vsub.f32 1.5, %v3761
        %v3763 = vmul.f32 %v3758, %v3762
        %vm3764 = vweird.f32 %v3688
        %vm3765 = vweird.f32 %v3758
        %vm3766 = vmor %vm3764, %vm3765
        %v3767 = vsel %vm3766, %v3758, %v3763
        %v3768 = vrsqrt.pop %v3689
        %v3769 = vmul.f32 %v3768, %v3689
        %v3770 = vmul.f32 %v3769, %v3768
        %v3771 = vmul.f32 0.5, %v3770
        %v3772 = vsub.f32 1.5, %v3771
        %v3773 = vmul.f32 %v3768, %v3772
        %vm3774 = vweird.f32 %v3689
        %vm3775 = vweird.f32 %v3768
        %vm3776 = vmor %vm3774, %vm3775
        %v3777 = vsel %vm3776, %v3768, %v3773
        %v3778 = vrsqrt.pop %v3690
        %v3779 = vmul.f32 %v3778, %v3690
        %v3780 = vmul.f32 %v3779, %v3778
        %v3781 = vmul.f32 0.5, %v3780
        %v3782 = vsub.f32 1.5, %v3781
        %v3783 = vmul.f32 %v3778, %v3782
        %vm3784 = vweird.f32 %v3690
        %vm3785 = vweird.f32 %v3778
        %vm3786 = vmor %vm3784, %vm3785
        %v3787 = vsel %vm3786, %v3778, %v3783
        %v3788 = vrsqrt.pop %v3691
        %v3789 = vmul.f32 %v3788, %v3691
        %v3790 = vmul.f32 %v3789, %v3788
        %v3791 = vmul.f32 0.5, %v3790
        %v3792 = vsub.f32 1.5, %v3791
        %v3793 = vmul.f32 %v3788, %v3792
        %vm3794 = vweird.f32 %v3691
        %vm3795 = vweird.f32 %v3788
        %vm3796 = vmor %vm3794, %vm3795
        %v3797 = vsel %vm3796, %v3788, %v3793
        %v3798 = vrsqrt.pop %v3692
        %v3799 = vmul.f32 %v3798, %v3692
        %v3800 = vmul.f32 %v3799, %v3798
        %v3801 = vmul.f32 0.5, %v3800
        %v3802 = vsub.f32 1.5, %v3801
        %v3803 = vmul.f32 %v3798, %v3802
        %vm3804 = vweird.f32 %v3692
        %vm3805 = vweird.f32 %v3798
        %vm3806 = vmor %vm3804, %vm3805
        %v3807 = vsel %vm3806, %v3798, %v3803
        %v3808 = vrsqrt.pop %v3693
        %v3809 = vmul.f32 %v3808, %v3693
        %v3810 = vmul.f32 %v3809, %v3808
        %v3811 = vmul.f32 0.5, %v3810
        %v3812 = vsub.f32 1.5, %v3811
        %v3813 = vmul.f32 %v3808, %v3812
        %vm3814 = vweird.f32 %v3693
        %vm3815 = vweird.f32 %v3808
        %vm3816 = vmor %vm3814, %vm3815
        %v3817 = vsel %vm3816, %v3808, %v3813
        %v3818 = vrsqrt.pop %v3694
        %v3819 = vmul.f32 %v3818, %v3694
        %v3820 = vmul.f32 %v3819, %v3818
        %v3821 = vmul.f32 0.5, %v3820
        %v3822 = vsub.f32 1.5, %v3821
        %v3823 = vmul.f32 %v3818, %v3822
        %vm3824 = vweird.f32 %v3694
        %vm3825 = vweird.f32 %v3818
        %vm3826 = vmor %vm3824, %vm3825
        %v3827 = vsel %vm3826, %v3818, %v3823
        %v3828 = vrsqrt.pop %v3695
        %v3829 = vmul.f32 %v3828, %v3695
        %v3830 = vmul.f32 %v3829, %v3828
        %v3831 = vmul.f32 0.5, %v3830
        %v3832 = vsub.f32 1.5, %v3831
        %v3833 = vmul.f32 %v3828, %v3832
        %vm3834 = vweird.f32 %v3695
        %vm3835 = vweird.f32 %v3828
        %vm3836 = vmor %vm3834, %vm3835
        %v3837 = vsel %vm3836, %v3828, %v3833
        %v3838 = vrsqrt.pop %v3696
        %v3839 = vmul.f32 %v3838, %v3696
        %v3840 = vmul.f32 %v3839, %v3838
        %v3841 = vmul.f32 0.5, %v3840
        %v3842 = vsub.f32 1.5, %v3841
        %v3843 = vmul.f32 %v3838, %v3842
        %vm3844 = vweird.f32 %v3696
        %vm3845 = vweird.f32 %v3838
        %vm3846 = vmor %vm3844, %vm3845
        %v3847 = vsel %vm3846, %v3838, %v3843
        %v3848 = vrsqrt.pop %v3697
        %v3849 = vmul.f32 %v3848, %v3697
        %v3850 = vmul.f32 %v3849, %v3848
        %v3851 = vmul.f32 0.5, %v3850
        %v3852 = vsub.f32 1.5, %v3851
        %v3853 = vmul.f32 %v3848, %v3852
        %vm3854 = vweird.f32 %v3697
        %vm3855 = vweird.f32 %v3848
        %vm3856 = vmor %vm3854, %vm3855
        %v3857 = vsel %vm3856, %v3848, %v3853
        %v3858 = vmul.f32 %v3618, %v3707
        %v3859 = vmul.f32 %v3619, %v3707
        %v3860 = vmul.f32 %v3620, %v3707
        %v3861 = vmul.f32 %v3621, %v3707
        %v3862 = vmul.f32 %v3622, %v3717
        %v3863 = vmul.f32 %v3623, %v3717
        %v3864 = vmul.f32 %v3624, %v3717
        %v3865 = vmul.f32 %v3625, %v3717
        %v3866 = vmul.f32 %v3626, %v3727
        %v3867 = vmul.f32 %v3627, %v3727
        %v3868 = vmul.f32 %v3628, %v3727
        %v3869 = vmul.f32 %v3629, %v3727
        %v3870 = vmul.f32 %v3630, %v3737
        %v3871 = vmul.f32 %v3631, %v3737
        %v3872 = vmul.f32 %v3632, %v3737
        %v3873 = vmul.f32 %v3633, %v3737
        %v3874 = vmul.f32 %v3634, %v3747
        %v3875 = vmul.f32 %v3635, %v3747
        %v3876 = vmul.f32 %v3636, %v3747
        %v3877 = vmul.f32 %v3637, %v3747
        %v3878 = vmul.f32 %v3638, %v3757
        %v3879 = vmul.f32 %v3639, %v3757
        %v3880 = vmul.f32 %v3640, %v3757
        %v3881 = vmul.f32 %v3641, %v3757
        %v3882 = vmul.f32 %v3642, %v3767
        %v3883 = vmul.f32 %v3643, %v3767
        %v3884 = vmul.f32 %v3644, %v3767
        %v3885 = vmul.f32 %v3645, %v3767
        %v3886 = vmul.f32 %v3646, %v3777
        %v3887 = vmul.f32 %v3647, %v3777
        %v3888 = vmul.f32 %v3648, %v3777
        %v3889 = vmul.f32 %v3649, %v3777
        %v3890 = vmul.f32 %v3650, %v3787
        %v3891 = vmul.f32 %v3651, %v3787
        %v3892 = vmul.f32 %v3652, %v3787
        %v3893 = vmul.f32 %v3653, %v3787
        %v3894 = vmul.f32 %v3654, %v3797
        %v3895 = vmul.f32 %v3655, %v3797
        %v3896 = vmul.f32 %v3656, %v3797
        %v3897 = vmul.f32 %v3657, %v3797
        %v3898 = vmul.f32 %v3658, %v3807
        %v3899 = vmul.f32 %v3659, %v3807
        %v3900 = vmul.f32 %v3660, %v3807
        %v3901 = vmul.f32 %v3661, %v3807
        %v3902 = vmul.f32 %v3662, %v3817
        %v3903 = vmul.f32 %v3663, %v3817
        %v3904 = vmul.f32 %v3664, %v3817
        %v3905 = vmul.f32 %v3665, %v3817
        %v3906 = vmul.f32 %v3666, %v3827
        %v3907 = vmul.f32 %v3667, %v3827
        %v3908 = vmul.f32 %v3668, %v3827
        %v3909 = vmul.f32 %v3669, %v3827
        %v3910 = vmul.f32 %v3670, %v3837
        %v3911 = vmul.f32 %v3671, %v3837
        %v3912 = vmul.f32 %v3672, %v3837
        %v3913 = vmul.f32 %v3673, %v3837
        %v3914 = vmul.f32 %v3674, %v3847
        %v3915 = vmul.f32 %v3675, %v3847
        %v3916 = vmul.f32 %v3676, %v3847
        %v3917 = vmul.f32 %v3677, %v3847
        %v3918 = vmul.f32 %v3678, %v3857
        %v3919 = vmul.f32 %v3679, %v3857
        %v3920 = vmul.f32 %v3680, %v3857
        %v3921 = vmul.f32 %v3681, %v3857
        %v3923 = vperm.slane %v402, 0
        %v3924 = vperm.slane %v402, 1
        %v3925 = vperm.slane %v402, 2
        %v3926 = vperm.slane %v402, 3
        %v3931 = vmul.f32 %v3858, %v3923
        %v3932 = vmul.f32 %v3859, %v3924
        %v3933 = vmul.f32 %v3860, %v3925
        %v3934 = vmul.f32 %v3861, %v3926
        %v3935 = vmul.f32 %v3862, %v3923
        %v3936 = vmul.f32 %v3863, %v3924
        %v3937 = vmul.f32 %v3864, %v3925
        %v3938 = vmul.f32 %v3865, %v3926
        %v3939 = vmul.f32 %v3866, %v3923
        %v3940 = vmul.f32 %v3867, %v3924
        %v3941 = vmul.f32 %v3868, %v3925
        %v3942 = vmul.f32 %v3869, %v3926
        %v3943 = vmul.f32 %v3870, %v3923
        %v3944 = vmul.f32 %v3871, %v3924
        %v3945 = vmul.f32 %v3872, %v3925
        %v3946 = vmul.f32 %v3873, %v3926
        %v3947 = vmul.f32 %v3874, %v3923
        %v3948 = vmul.f32 %v3875, %v3924
        %v3949 = vmul.f32 %v3876, %v3925
        %v3950 = vmul.f32 %v3877, %v3926
        %v3951 = vmul.f32 %v3878, %v3923
        %v3952 = vmul.f32 %v3879, %v3924
        %v3953 = vmul.f32 %v3880, %v3925
        %v3954 = vmul.f32 %v3881, %v3926
        %v3955 = vmul.f32 %v3882, %v3923
        %v3956 = vmul.f32 %v3883, %v3924
        %v3957 = vmul.f32 %v3884, %v3925
        %v3958 = vmul.f32 %v3885, %v3926
        %v3959 = vmul.f32 %v3886, %v3923
        %v3960 = vmul.f32 %v3887, %v3924
        %v3961 = vmul.f32 %v3888, %v3925
        %v3962 = vmul.f32 %v3889, %v3926
        %v3963 = vmul.f32 %v3890, %v3923
        %v3964 = vmul.f32 %v3891, %v3924
        %v3965 = vmul.f32 %v3892, %v3925
        %v3966 = vmul.f32 %v3893, %v3926
        %v3967 = vmul.f32 %v3894, %v3923
        %v3968 = vmul.f32 %v3895, %v3924
        %v3969 = vmul.f32 %v3896, %v3925
        %v3970 = vmul.f32 %v3897, %v3926
        %v3971 = vmul.f32 %v3898, %v3923
        %v3972 = vmul.f32 %v3899, %v3924
        %v3973 = vmul.f32 %v3900, %v3925
        %v3974 = vmul.f32 %v3901, %v3926
        %v3975 = vmul.f32 %v3902, %v3923
        %v3976 = vmul.f32 %v3903, %v3924
        %v3977 = vmul.f32 %v3904, %v3925
        %v3978 = vmul.f32 %v3905, %v3926
        %v3979 = vmul.f32 %v3906, %v3923
        %v3980 = vmul.f32 %v3907, %v3924
        %v3981 = vmul.f32 %v3908, %v3925
        %v3982 = vmul.f32 %v3909, %v3926
        %v3983 = vmul.f32 %v3910, %v3923
        %v3984 = vmul.f32 %v3911, %v3924
        %v3985 = vmul.f32 %v3912, %v3925
        %v3986 = vmul.f32 %v3913, %v3926
        %v3987 = vmul.f32 %v3914, %v3923
        %v3988 = vmul.f32 %v3915, %v3924
        %v3989 = vmul.f32 %v3916, %v3925
        %v3990 = vmul.f32 %v3917, %v3926
        %v3991 = vmul.f32 %v3918, %v3923
        %v3992 = vmul.f32 %v3919, %v3924
        %v3993 = vmul.f32 %v3920, %v3925
        %v3994 = vmul.f32 %v3921, %v3926
        %v3996 = vperm.slane %v403, 0
        %v3997 = vperm.slane %v403, 1
        %v3998 = vperm.slane %v403, 2
        %v3999 = vperm.slane %v403, 3
        %v4004 = vadd.f32 %v3931, %v3996
        %v4005 = vadd.f32 %v3932, %v3997
        %v4006 = vadd.f32 %v3933, %v3998
        %v4007 = vadd.f32 %v3934, %v3999
        %v4008 = vadd.f32 %v3935, %v3996
        %v4009 = vadd.f32 %v3936, %v3997
        %v4010 = vadd.f32 %v3937, %v3998
        %v4011 = vadd.f32 %v3938, %v3999
        %v4012 = vadd.f32 %v3939, %v3996
        %v4013 = vadd.f32 %v3940, %v3997
        %v4014 = vadd.f32 %v3941, %v3998
        %v4015 = vadd.f32 %v3942, %v3999
        %v4016 = vadd.f32 %v3943, %v3996
        %v4017 = vadd.f32 %v3944, %v3997
        %v4018 = vadd.f32 %v3945, %v3998
        %v4019 = vadd.f32 %v3946, %v3999
        %v4020 = vadd.f32 %v3947, %v3996
        %v4021 = vadd.f32 %v3948, %v3997
        %v4022 = vadd.f32 %v3949, %v3998
        %v4023 = vadd.f32 %v3950, %v3999
        %v4024 = vadd.f32 %v3951, %v3996
        %v4025 = vadd.f32 %v3952, %v3997
        %v4026 = vadd.f32 %v3953, %v3998
        %v4027 = vadd.f32 %v3954, %v3999
        %v4028 = vadd.f32 %v3955, %v3996
        %v4029 = vadd.f32 %v3956, %v3997
        %v4030 = vadd.f32 %v3957, %v3998
        %v4031 = vadd.f32 %v3958, %v3999
        %v4032 = vadd.f32 %v3959, %v3996
        %v4033 = vadd.f32 %v3960, %v3997
        %v4034 = vadd.f32 %v3961, %v3998
        %v4035 = vadd.f32 %v3962, %v3999
        %v4036 = vadd.f32 %v3963, %v3996
        %v4037 = vadd.f32 %v3964, %v3997
        %v4038 = vadd.f32 %v3965, %v3998
        %v4039 = vadd.f32 %v3966, %v3999
        %v4040 = vadd.f32 %v3967, %v3996
        %v4041 = vadd.f32 %v3968, %v3997
        %v4042 = vadd.f32 %v3969, %v3998
        %v4043 = vadd.f32 %v3970, %v3999
        %v4044 = vadd.f32 %v3971, %v3996
        %v4045 = vadd.f32 %v3972, %v3997
        %v4046 = vadd.f32 %v3973, %v3998
        %v4047 = vadd.f32 %v3974, %v3999
        %v4048 = vadd.f32 %v3975, %v3996
        %v4049 = vadd.f32 %v3976, %v3997
        %v4050 = vadd.f32 %v3977, %v3998
        %v4051 = vadd.f32 %v3978, %v3999
        %v4052 = vadd.f32 %v3979, %v3996
        %v4053 = vadd.f32 %v3980, %v3997
        %v4054 = vadd.f32 %v3981, %v3998
        %v4055 = vadd.f32 %v3982, %v3999
        %v4056 = vadd.f32 %v3983, %v3996
        %v4057 = vadd.f32 %v3984, %v3997
        %v4058 = vadd.f32 %v3985, %v3998
        %v4059 = vadd.f32 %v3986, %v3999
        %v4060 = vadd.f32 %v3987, %v3996
        %v4061 = vadd.f32 %v3988, %v3997
        %v4062 = vadd.f32 %v3989, %v3998
        %v4063 = vadd.f32 %v3990, %v3999
        %v4064 = vadd.f32 %v3991, %v3996
        %v4065 = vadd.f32 %v3992, %v3997
        %v4066 = vadd.f32 %v3993, %v3998
        %v4067 = vadd.f32 %v3994, %v3999
        %v4068 = vadd.f32 %v4004, %v1593
        %v4069 = vadd.f32 %v4005, %v1594
        %v4070 = vadd.f32 %v4006, %v1595
        %v4071 = vadd.f32 %v4007, %v1596
        %v4072 = vadd.f32 %v4008, %v1597
        %v4073 = vadd.f32 %v4009, %v1598
        %v4074 = vadd.f32 %v4010, %v1599
        %v4075 = vadd.f32 %v4011, %v1600
        %v4076 = vadd.f32 %v4012, %v1601
        %v4077 = vadd.f32 %v4013, %v1602
        %v4078 = vadd.f32 %v4014, %v1603
        %v4079 = vadd.f32 %v4015, %v1604
        %v4080 = vadd.f32 %v4016, %v1605
        %v4081 = vadd.f32 %v4017, %v1606
        %v4082 = vadd.f32 %v4018, %v1607
        %v4083 = vadd.f32 %v4019, %v1608
        %v4084 = vadd.f32 %v4020, %v1609
        %v4085 = vadd.f32 %v4021, %v1610
        %v4086 = vadd.f32 %v4022, %v1611
        %v4087 = vadd.f32 %v4023, %v1612
        %v4088 = vadd.f32 %v4024, %v1613
        %v4089 = vadd.f32 %v4025, %v1614
        %v4090 = vadd.f32 %v4026, %v1615
        %v4091 = vadd.f32 %v4027, %v1616
        %v4092 = vadd.f32 %v4028, %v1617
        %v4093 = vadd.f32 %v4029, %v1618
        %v4094 = vadd.f32 %v4030, %v1619
        %v4095 = vadd.f32 %v4031, %v1620
        %v4096 = vadd.f32 %v4032, %v1621
        %v4097 = vadd.f32 %v4033, %v1622
        %v4098 = vadd.f32 %v4034, %v1623
        %v4099 = vadd.f32 %v4035, %v1624
        %v4100 = vadd.f32 %v4036, %v1625
        %v4101 = vadd.f32 %v4037, %v1626
        %v4102 = vadd.f32 %v4038, %v1627
        %v4103 = vadd.f32 %v4039, %v1628
        %v4104 = vadd.f32 %v4040, %v1629
        %v4105 = vadd.f32 %v4041, %v1630
        %v4106 = vadd.f32 %v4042, %v1631
        %v4107 = vadd.f32 %v4043, %v1632
        %v4108 = vadd.f32 %v4044, %v1633
        %v4109 = vadd.f32 %v4045, %v1634
        %v4110 = vadd.f32 %v4046, %v1635
        %v4111 = vadd.f32 %v4047, %v1636
        %v4112 = vadd.f32 %v4048, %v1637
        %v4113 = vadd.f32 %v4049, %v1638
        %v4114 = vadd.f32 %v4050, %v1639
        %v4115 = vadd.f32 %v4051, %v1640
        %v4116 = vadd.f32 %v4052, %v1641
        %v4117 = vadd.f32 %v4053, %v1642
        %v4118 = vadd.f32 %v4054, %v1643
        %v4119 = vadd.f32 %v4055, %v1644
        %v4120 = vadd.f32 %v4056, %v1645
        %v4121 = vadd.f32 %v4057, %v1646
        %v4122 = vadd.f32 %v4058, %v1647
        %v4123 = vadd.f32 %v4059, %v1648
        %v4124 = vadd.f32 %v4060, %v1649
        %v4125 = vadd.f32 %v4061, %v1650
        %v4126 = vadd.f32 %v4062, %v1651
        %v4127 = vadd.f32 %v4063, %v1652
        %v4128 = vadd.f32 %v4064, %v1653
        %v4129 = vadd.f32 %v4065, %v1654
        %v4130 = vadd.f32 %v4066, %v1655
        %v4131 = vadd.f32 %v4067, %v1656
        %v4132 = vpack.c.bf16 %v4072, %v4068
        %v4133 = vpack.c.bf16 %v4073, %v4069
        %v4134 = vpack.c.bf16 %v4074, %v4070
        %v4135 = vpack.c.bf16 %v4075, %v4071
        %v4136 = vpack.c.bf16 %v4080, %v4076
        %v4137 = vpack.c.bf16 %v4081, %v4077
        %v4138 = vpack.c.bf16 %v4082, %v4078
        %v4139 = vpack.c.bf16 %v4083, %v4079
        %v4140 = vpack.c.bf16 %v4088, %v4084
        %v4141 = vpack.c.bf16 %v4089, %v4085
        %v4142 = vpack.c.bf16 %v4090, %v4086
        %v4143 = vpack.c.bf16 %v4091, %v4087
        %v4144 = vpack.c.bf16 %v4096, %v4092
        %v4145 = vpack.c.bf16 %v4097, %v4093
        %v4146 = vpack.c.bf16 %v4098, %v4094
        %v4147 = vpack.c.bf16 %v4099, %v4095
        %v4148 = vpack.c.bf16 %v4104, %v4100
        %v4149 = vpack.c.bf16 %v4105, %v4101
        %v4150 = vpack.c.bf16 %v4106, %v4102
        %v4151 = vpack.c.bf16 %v4107, %v4103
        %v4152 = vpack.c.bf16 %v4112, %v4108
        %v4153 = vpack.c.bf16 %v4113, %v4109
        %v4154 = vpack.c.bf16 %v4114, %v4110
        %v4155 = vpack.c.bf16 %v4115, %v4111
        %v4156 = vpack.c.bf16 %v4120, %v4116
        %v4157 = vpack.c.bf16 %v4121, %v4117
        %v4158 = vpack.c.bf16 %v4122, %v4118
        %v4159 = vpack.c.bf16 %v4123, %v4119
        %v4160 = vpack.c.bf16 %v4128, %v4124
        %v4161 = vpack.c.bf16 %v4129, %v4125
        %v4162 = vpack.c.bf16 %v4130, %v4126
        %v4163 = vpack.c.bf16 %v4131, %v4127
        %v4164 = vld [vmem:[#allocation8] sm:$0xff]
        %v4165 = vld [vmem:[#allocation8 + $0x8] sm:$0xff]
        %v4166 = vld [vmem:[#allocation8 + $0x10] sm:$0xff]
        %v4167 = vld [vmem:[#allocation8 + $0x18] sm:$0xff]
        %v4168 = vld [vmem:[#allocation8 + $0x20] sm:$0xff]
        %v4169 = vld [vmem:[#allocation8 + $0x28] sm:$0xff]
        %v4170 = vld [vmem:[#allocation8 + $0x30] sm:$0xff]
        %v4171 = vld [vmem:[#allocation8 + $0x38] sm:$0xff]
        %v4172 = vld [vmem:[#allocation8 + $0x40] sm:$0xff]
        %v4173 = vld [vmem:[#allocation8 + $0x48] sm:$0xff]
        %v4174 = vld [vmem:[#allocation8 + $0x50] sm:$0xff]
        %v4175 = vld [vmem:[#allocation8 + $0x58] sm:$0xff]
        %v4176 = vld [vmem:[#allocation8 + $0x60] sm:$0xff]
        %v4177 = vld [vmem:[#allocation8 + $0x68] sm:$0xff]
        %v4178 = vld [vmem:[#allocation8 + $0x70] sm:$0xff]
        %v4179 = vld [vmem:[#allocation8 + $0x78] sm:$0xff]
        %v4180 = vld [vmem:[#allocation8 + $0x80] sm:$0xff]
        %v4181 = vld [vmem:[#allocation8 + $0x88] sm:$0xff]
        %v4182 = vld [vmem:[#allocation8 + $0x90] sm:$0xff]
        %v4183 = vld [vmem:[#allocation8 + $0x98] sm:$0xff]
        %v4184 = vld [vmem:[#allocation8 + $0xa0] sm:$0xff]
        %v4185 = vld [vmem:[#allocation8 + $0xa8] sm:$0xff]
        %v4186 = vld [vmem:[#allocation8 + $0xb0] sm:$0xff]
        %v4187 = vld [vmem:[#allocation8 + $0xb8] sm:$0xff]
        %v4188 = vld [vmem:[#allocation8 + $0xc0] sm:$0xff]
        %v4189 = vld [vmem:[#allocation8 + $0xc8] sm:$0xff]
        %v4190 = vld [vmem:[#allocation8 + $0xd0] sm:$0xff]
        %v4191 = vld [vmem:[#allocation8 + $0xd8] sm:$0xff]
        %v4192 = vld [vmem:[#allocation8 + $0xe0] sm:$0xff]
        %v4193 = vld [vmem:[#allocation8 + $0xe8] sm:$0xff]
        %v4194 = vld [vmem:[#allocation8 + $0xf0] sm:$0xff]
        %v4195 = vld [vmem:[#allocation8 + $0xf8] sm:$0xff]
        %v4196 = vld [vmem:[#allocation8 + $0x100] sm:$0xff]
        %v4197 = vld [vmem:[#allocation8 + $0x108] sm:$0xff]
        %v4198 = vld [vmem:[#allocation8 + $0x110] sm:$0xff]
        %v4199 = vld [vmem:[#allocation8 + $0x118] sm:$0xff]
        %v4200 = vld [vmem:[#allocation8 + $0x120] sm:$0xff]
        %v4201 = vld [vmem:[#allocation8 + $0x128] sm:$0xff]
        %v4202 = vld [vmem:[#allocation8 + $0x130] sm:$0xff]
        %v4203 = vld [vmem:[#allocation8 + $0x138] sm:$0xff]
        %v4204 = vld [vmem:[#allocation8 + $0x140] sm:$0xff]
        %v4205 = vld [vmem:[#allocation8 + $0x148] sm:$0xff]
        %v4206 = vld [vmem:[#allocation8 + $0x150] sm:$0xff]
        %v4207 = vld [vmem:[#allocation8 + $0x158] sm:$0xff]
        %v4208 = vld [vmem:[#allocation8 + $0x160] sm:$0xff]
        %v4209 = vld [vmem:[#allocation8 + $0x168] sm:$0xff]
        %v4210 = vld [vmem:[#allocation8 + $0x170] sm:$0xff]
        %v4211 = vld [vmem:[#allocation8 + $0x178] sm:$0xff]
        %v4212 = vld [vmem:[#allocation8 + $0x180] sm:$0xff]
        %v4213 = vld [vmem:[#allocation8 + $0x188] sm:$0xff]
        %v4214 = vld [vmem:[#allocation8 + $0x190] sm:$0xff]
        %v4215 = vld [vmem:[#allocation8 + $0x198] sm:$0xff]
        %v4216 = vld [vmem:[#allocation8 + $0x1a0] sm:$0xff]
        %v4217 = vld [vmem:[#allocation8 + $0x1a8] sm:$0xff]
        %v4218 = vld [vmem:[#allocation8 + $0x1b0] sm:$0xff]
        %v4219 = vld [vmem:[#allocation8 + $0x1b8] sm:$0xff]
        %v4220 = vld [vmem:[#allocation8 + $0x1c0] sm:$0xff]
        %v4221 = vld [vmem:[#allocation8 + $0x1c8] sm:$0xff]
        %v4222 = vld [vmem:[#allocation8 + $0x1d0] sm:$0xff]
        %v4223 = vld [vmem:[#allocation8 + $0x1d8] sm:$0xff]
        %v4224 = vld [vmem:[#allocation8 + $0x1e0] sm:$0xff]
        %v4225 = vld [vmem:[#allocation8 + $0x1e8] sm:$0xff]
        %v4226 = vld [vmem:[#allocation8 + $0x1f0] sm:$0xff]
        %v4227 = vld [vmem:[#allocation8 + $0x1f8] sm:$0xff]
        %v4229 = vperm.slane %v404, 0
        %v4230 = vperm.slane %v404, 1
        %v4297 = vunpack.c.l.b16 %v4164
        %v4298 = vunpack.c.h.b16 %v4164
        %v4299 = vunpack.c.l.b16 %v4165
        %v4300 = vunpack.c.h.b16 %v4165
        %v4301 = vunpack.c.l.b16 %v4166
        %v4302 = vunpack.c.h.b16 %v4166
        %v4303 = vunpack.c.l.b16 %v4167
        %v4304 = vunpack.c.h.b16 %v4167
        %v4305 = vunpack.c.l.b16 %v4168
        %v4306 = vunpack.c.h.b16 %v4168
        %v4307 = vunpack.c.l.b16 %v4169
        %v4308 = vunpack.c.h.b16 %v4169
        %v4309 = vunpack.c.l.b16 %v4170
        %v4310 = vunpack.c.h.b16 %v4170
        %v4311 = vunpack.c.l.b16 %v4171
        %v4312 = vunpack.c.h.b16 %v4171
        %v4313 = vunpack.c.l.b16 %v4172
        %v4314 = vunpack.c.h.b16 %v4172
        %v4315 = vunpack.c.l.b16 %v4173
        %v4316 = vunpack.c.h.b16 %v4173
        %v4317 = vunpack.c.l.b16 %v4174
        %v4318 = vunpack.c.h.b16 %v4174
        %v4319 = vunpack.c.l.b16 %v4175
        %v4320 = vunpack.c.h.b16 %v4175
        %v4321 = vunpack.c.l.b16 %v4176
        %v4322 = vunpack.c.h.b16 %v4176
        %v4323 = vunpack.c.l.b16 %v4177
        %v4324 = vunpack.c.h.b16 %v4177
        %v4325 = vunpack.c.l.b16 %v4178
        %v4326 = vunpack.c.h.b16 %v4178
        %v4327 = vunpack.c.l.b16 %v4179
        %v4328 = vunpack.c.h.b16 %v4179
        %v4329 = vunpack.c.l.b16 %v4180
        %v4330 = vunpack.c.h.b16 %v4180
        %v4331 = vunpack.c.l.b16 %v4181
        %v4332 = vunpack.c.h.b16 %v4181
        %v4333 = vunpack.c.l.b16 %v4182
        %v4334 = vunpack.c.h.b16 %v4182
        %v4335 = vunpack.c.l.b16 %v4183
        %v4336 = vunpack.c.h.b16 %v4183
        %v4337 = vunpack.c.l.b16 %v4184
        %v4338 = vunpack.c.h.b16 %v4184
        %v4339 = vunpack.c.l.b16 %v4185
        %v4340 = vunpack.c.h.b16 %v4185
        %v4341 = vunpack.c.l.b16 %v4186
        %v4342 = vunpack.c.h.b16 %v4186
        %v4343 = vunpack.c.l.b16 %v4187
        %v4344 = vunpack.c.h.b16 %v4187
        %v4345 = vunpack.c.l.b16 %v4188
        %v4346 = vunpack.c.h.b16 %v4188
        %v4347 = vunpack.c.l.b16 %v4189
        %v4348 = vunpack.c.h.b16 %v4189
        %v4349 = vunpack.c.l.b16 %v4190
        %v4350 = vunpack.c.h.b16 %v4190
        %v4351 = vunpack.c.l.b16 %v4191
        %v4352 = vunpack.c.h.b16 %v4191
        %v4353 = vunpack.c.l.b16 %v4192
        %v4354 = vunpack.c.h.b16 %v4192
        %v4355 = vunpack.c.l.b16 %v4193
        %v4356 = vunpack.c.h.b16 %v4193
        %v4357 = vunpack.c.l.b16 %v4194
        %v4358 = vunpack.c.h.b16 %v4194
        %v4359 = vunpack.c.l.b16 %v4195
        %v4360 = vunpack.c.h.b16 %v4195
        %v4361 = vunpack.c.l.b16 %v4196
        %v4362 = vunpack.c.h.b16 %v4196
        %v4363 = vunpack.c.l.b16 %v4197
        %v4364 = vunpack.c.h.b16 %v4197
        %v4365 = vunpack.c.l.b16 %v4198
        %v4366 = vunpack.c.h.b16 %v4198
        %v4367 = vunpack.c.l.b16 %v4199
        %v4368 = vunpack.c.h.b16 %v4199
        %v4369 = vunpack.c.l.b16 %v4200
        %v4370 = vunpack.c.h.b16 %v4200
        %v4371 = vunpack.c.l.b16 %v4201
        %v4372 = vunpack.c.h.b16 %v4201
        %v4373 = vunpack.c.l.b16 %v4202
        %v4374 = vunpack.c.h.b16 %v4202
        %v4375 = vunpack.c.l.b16 %v4203
        %v4376 = vunpack.c.h.b16 %v4203
        %v4377 = vunpack.c.l.b16 %v4204
        %v4378 = vunpack.c.h.b16 %v4204
        %v4379 = vunpack.c.l.b16 %v4205
        %v4380 = vunpack.c.h.b16 %v4205
        %v4381 = vunpack.c.l.b16 %v4206
        %v4382 = vunpack.c.h.b16 %v4206
        %v4383 = vunpack.c.l.b16 %v4207
        %v4384 = vunpack.c.h.b16 %v4207
        %v4385 = vunpack.c.l.b16 %v4208
        %v4386 = vunpack.c.h.b16 %v4208
        %v4387 = vunpack.c.l.b16 %v4209
        %v4388 = vunpack.c.h.b16 %v4209
        %v4389 = vunpack.c.l.b16 %v4210
        %v4390 = vunpack.c.h.b16 %v4210
        %v4391 = vunpack.c.l.b16 %v4211
        %v4392 = vunpack.c.h.b16 %v4211
        %v4393 = vunpack.c.l.b16 %v4212
        %v4394 = vunpack.c.h.b16 %v4212
        %v4395 = vunpack.c.l.b16 %v4213
        %v4396 = vunpack.c.h.b16 %v4213
        %v4397 = vunpack.c.l.b16 %v4214
        %v4398 = vunpack.c.h.b16 %v4214
        %v4399 = vunpack.c.l.b16 %v4215
        %v4400 = vunpack.c.h.b16 %v4215
        %v4401 = vunpack.c.l.b16 %v4216
        %v4402 = vunpack.c.h.b16 %v4216
        %v4403 = vunpack.c.l.b16 %v4217
        %v4404 = vunpack.c.h.b16 %v4217
        %v4405 = vunpack.c.l.b16 %v4218
        %v4406 = vunpack.c.h.b16 %v4218
        %v4407 = vunpack.c.l.b16 %v4219
        %v4408 = vunpack.c.h.b16 %v4219
        %v4409 = vunpack.c.l.b16 %v4220
        %v4410 = vunpack.c.h.b16 %v4220
        %v4411 = vunpack.c.l.b16 %v4221
        %v4412 = vunpack.c.h.b16 %v4221
        %v4413 = vunpack.c.l.b16 %v4222
        %v4414 = vunpack.c.h.b16 %v4222
        %v4415 = vunpack.c.l.b16 %v4223
        %v4416 = vunpack.c.h.b16 %v4223
        %v4417 = vunpack.c.l.b16 %v4224
        %v4418 = vunpack.c.h.b16 %v4224
        %v4419 = vunpack.c.l.b16 %v4225
        %v4420 = vunpack.c.h.b16 %v4225
        %v4421 = vunpack.c.l.b16 %v4226
        %v4422 = vunpack.c.h.b16 %v4226
        %v4423 = vunpack.c.l.b16 %v4227
        %v4424 = vunpack.c.h.b16 %v4227
        %v4425 = vpack.c.b16 %v4299, %v4297
        %v4426 = vpack.c.b16 %v4300, %v4298
        %v4427 = vpack.c.b16 %v4303, %v4301
        %v4428 = vpack.c.b16 %v4304, %v4302
        %v4429 = vpack.c.b16 %v4307, %v4305
        %v4430 = vpack.c.b16 %v4308, %v4306
        %v4431 = vpack.c.b16 %v4311, %v4309
        %v4432 = vpack.c.b16 %v4312, %v4310
        %v4433 = vpack.c.b16 %v4315, %v4313
        %v4434 = vpack.c.b16 %v4316, %v4314
        %v4435 = vpack.c.b16 %v4319, %v4317
        %v4436 = vpack.c.b16 %v4320, %v4318
        %v4437 = vpack.c.b16 %v4323, %v4321
        %v4438 = vpack.c.b16 %v4324, %v4322
        %v4439 = vpack.c.b16 %v4327, %v4325
        %v4440 = vpack.c.b16 %v4328, %v4326
        %v4441 = vpack.c.b16 %v4331, %v4329
        %v4442 = vpack.c.b16 %v4332, %v4330
        %v4443 = vpack.c.b16 %v4335, %v4333
        %v4444 = vpack.c.b16 %v4336, %v4334
        %v4445 = vpack.c.b16 %v4339, %v4337
        %v4446 = vpack.c.b16 %v4340, %v4338
        %v4447 = vpack.c.b16 %v4343, %v4341
        %v4448 = vpack.c.b16 %v4344, %v4342
        %v4449 = vpack.c.b16 %v4347, %v4345
        %v4450 = vpack.c.b16 %v4348, %v4346
        %v4451 = vpack.c.b16 %v4351, %v4349
        %v4452 = vpack.c.b16 %v4352, %v4350
        %v4453 = vpack.c.b16 %v4355, %v4353
        %v4454 = vpack.c.b16 %v4356, %v4354
        %v4455 = vpack.c.b16 %v4359, %v4357
        %v4456 = vpack.c.b16 %v4360, %v4358
        %v4457 = vpack.c.b16 %v4363, %v4361
        %v4458 = vpack.c.b16 %v4364, %v4362
        %v4459 = vpack.c.b16 %v4367, %v4365
        %v4460 = vpack.c.b16 %v4368, %v4366
        %v4461 = vpack.c.b16 %v4371, %v4369
        %v4462 = vpack.c.b16 %v4372, %v4370
        %v4463 = vpack.c.b16 %v4375, %v4373
        %v4464 = vpack.c.b16 %v4376, %v4374
        %v4465 = vpack.c.b16 %v4379, %v4377
        %v4466 = vpack.c.b16 %v4380, %v4378
        %v4467 = vpack.c.b16 %v4383, %v4381
        %v4468 = vpack.c.b16 %v4384, %v4382
        %v4469 = vpack.c.b16 %v4387, %v4385
        %v4470 = vpack.c.b16 %v4388, %v4386
        %v4471 = vpack.c.b16 %v4391, %v4389
        %v4472 = vpack.c.b16 %v4392, %v4390
        %v4473 = vpack.c.b16 %v4395, %v4393
        %v4474 = vpack.c.b16 %v4396, %v4394
        %v4475 = vpack.c.b16 %v4399, %v4397
        %v4476 = vpack.c.b16 %v4400, %v4398
        %v4477 = vpack.c.b16 %v4403, %v4401
        %v4478 = vpack.c.b16 %v4404, %v4402
        %v4479 = vpack.c.b16 %v4407, %v4405
        %v4480 = vpack.c.b16 %v4408, %v4406
        %v4481 = vpack.c.b16 %v4411, %v4409
        %v4482 = vpack.c.b16 %v4412, %v4410
        %v4483 = vpack.c.b16 %v4415, %v4413
        %v4484 = vpack.c.b16 %v4416, %v4414
        %v4485 = vpack.c.b16 %v4419, %v4417
        %v4486 = vpack.c.b16 %v4420, %v4418
        %v4487 = vpack.c.b16 %v4423, %v4421
        %v4488 = vpack.c.b16 %v4424, %v4422
        %4553 = vmatpush.bf16.msra.mxu0 %v4439
        %4554 = vmatpush.bf16.msra.mxu0 %v4437
        %4555 = vmatpush.bf16.msra.mxu0 %v4435
        %4556 = vmatpush.bf16.msra.mxu0 %v4433
        %4557 = vmatpush.bf16.msra.mxu0 %v4431
        %4558 = vmatpush.bf16.msra.mxu0 %v4429
        %4559 = vmatpush.bf16.msra.mxu0 %v4427
        %4560 = vmatpush.bf16.msra.mxu0 %v4425
        %4561 = vmatmul.bf16.gmra.mxu0 %v4132
        %v4562 = vpop.f32.mrf.mxu0
        %v4563 = vadd.f32 %v4229, %v4562
        %v4564 = vpop.f32.mrf.mxu0
        %v4565 = vadd.f32 %v4229, %v4564
        %4566 = vmatmul.bf16.gmra.mxu0 %v4136
        %v4567 = vpop.f32.mrf.mxu0
        %v4568 = vadd.f32 %v4229, %v4567
        %v4569 = vpop.f32.mrf.mxu0
        %v4570 = vadd.f32 %v4229, %v4569
        %4571 = vmatmul.bf16.gmra.mxu0 %v4140
        %v4572 = vpop.f32.mrf.mxu0
        %v4573 = vadd.f32 %v4229, %v4572
        %v4574 = vpop.f32.mrf.mxu0
        %v4575 = vadd.f32 %v4229, %v4574
        %4576 = vmatmul.bf16.gmra.mxu0 %v4144
        %v4577 = vpop.f32.mrf.mxu0
        %v4578 = vadd.f32 %v4229, %v4577
        %v4579 = vpop.f32.mrf.mxu0
        %v4580 = vadd.f32 %v4229, %v4579
        %4581 = vmatmul.bf16.gmra.mxu0 %v4148
        %v4582 = vpop.f32.mrf.mxu0
        %v4583 = vadd.f32 %v4229, %v4582
        %v4584 = vpop.f32.mrf.mxu0
        %v4585 = vadd.f32 %v4229, %v4584
        %4586 = vmatmul.bf16.gmra.mxu0 %v4152
        %v4587 = vpop.f32.mrf.mxu0
        %v4588 = vadd.f32 %v4229, %v4587
        %v4589 = vpop.f32.mrf.mxu0
        %v4590 = vadd.f32 %v4229, %v4589
        %4591 = vmatmul.bf16.gmra.mxu0 %v4156
        %v4592 = vpop.f32.mrf.mxu0
        %v4593 = vadd.f32 %v4229, %v4592
        %v4594 = vpop.f32.mrf.mxu0
        %v4595 = vadd.f32 %v4229, %v4594
        %4596 = vmatmul.bf16.gmra.mxu0 %v4160
        %v4597 = vpop.f32.mrf.mxu0
        %v4598 = vadd.f32 %v4229, %v4597
        %v4599 = vpop.f32.mrf.mxu0
        %v4600 = vadd.f32 %v4229, %v4599
        %4601 = vdwg.mxu0
        %4602 = vmatpush.bf16.msra.mxu0 %v4455
        %4603 = vmatpush.bf16.msra.mxu0 %v4453
        %4604 = vmatpush.bf16.msra.mxu0 %v4451
        %4605 = vmatpush.bf16.msra.mxu0 %v4449
        %4606 = vmatpush.bf16.msra.mxu0 %v4447
        %4607 = vmatpush.bf16.msra.mxu0 %v4445
        %4608 = vmatpush.bf16.msra.mxu0 %v4443
        %4609 = vmatpush.bf16.msra.mxu0 %v4441
        %4610 = vmatmul.bf16.gmra.mxu0 %v4133
        %v4611 = vpop.f32.mrf.mxu0
        %v4612 = vadd.f32 %v4563, %v4611
        %v4613 = vpop.f32.mrf.mxu0
        %v4614 = vadd.f32 %v4565, %v4613
        %4615 = vmatmul.bf16.gmra.mxu0 %v4137
        %v4616 = vpop.f32.mrf.mxu0
        %v4617 = vadd.f32 %v4568, %v4616
        %v4618 = vpop.f32.mrf.mxu0
        %v4619 = vadd.f32 %v4570, %v4618
        %4620 = vmatmul.bf16.gmra.mxu0 %v4141
        %v4621 = vpop.f32.mrf.mxu0
        %v4622 = vadd.f32 %v4573, %v4621
        %v4623 = vpop.f32.mrf.mxu0
        %v4624 = vadd.f32 %v4575, %v4623
        %4625 = vmatmul.bf16.gmra.mxu0 %v4145
        %v4626 = vpop.f32.mrf.mxu0
        %v4627 = vadd.f32 %v4578, %v4626
        %v4628 = vpop.f32.mrf.mxu0
        %v4629 = vadd.f32 %v4580, %v4628
        %4630 = vmatmul.bf16.gmra.mxu0 %v4149
        %v4631 = vpop.f32.mrf.mxu0
        %v4632 = vadd.f32 %v4583, %v4631
        %v4633 = vpop.f32.mrf.mxu0
        %v4634 = vadd.f32 %v4585, %v4633
        %4635 = vmatmul.bf16.gmra.mxu0 %v4153
        %v4636 = vpop.f32.mrf.mxu0
        %v4637 = vadd.f32 %v4588, %v4636
        %v4638 = vpop.f32.mrf.mxu0
        %v4639 = vadd.f32 %v4590, %v4638
        %4640 = vmatmul.bf16.gmra.mxu0 %v4157
        %v4641 = vpop.f32.mrf.mxu0
        %v4642 = vadd.f32 %v4593, %v4641
        %v4643 = vpop.f32.mrf.mxu0
        %v4644 = vadd.f32 %v4595, %v4643
        %4645 = vmatmul.bf16.gmra.mxu0 %v4161
        %v4646 = vpop.f32.mrf.mxu0
        %v4647 = vadd.f32 %v4598, %v4646
        %v4648 = vpop.f32.mrf.mxu0
        %v4649 = vadd.f32 %v4600, %v4648
        %4650 = vdwg.mxu0
        %4651 = vmatpush.bf16.msra.mxu0 %v4471
        %4652 = vmatpush.bf16.msra.mxu0 %v4469
        %4653 = vmatpush.bf16.msra.mxu0 %v4467
        %4654 = vmatpush.bf16.msra.mxu0 %v4465
        %4655 = vmatpush.bf16.msra.mxu0 %v4463
        %4656 = vmatpush.bf16.msra.mxu0 %v4461
        %4657 = vmatpush.bf16.msra.mxu0 %v4459
        %4658 = vmatpush.bf16.msra.mxu0 %v4457
        %4659 = vmatmul.bf16.gmra.mxu0 %v4134
        %v4660 = vpop.f32.mrf.mxu0
        %v4661 = vadd.f32 %v4612, %v4660
        %v4662 = vpop.f32.mrf.mxu0
        %v4663 = vadd.f32 %v4614, %v4662
        %4664 = vmatmul.bf16.gmra.mxu0 %v4138
        %v4665 = vpop.f32.mrf.mxu0
        %v4666 = vadd.f32 %v4617, %v4665
        %v4667 = vpop.f32.mrf.mxu0
        %v4668 = vadd.f32 %v4619, %v4667
        %4669 = vmatmul.bf16.gmra.mxu0 %v4142
        %v4670 = vpop.f32.mrf.mxu0
        %v4671 = vadd.f32 %v4622, %v4670
        %v4672 = vpop.f32.mrf.mxu0
        %v4673 = vadd.f32 %v4624, %v4672
        %4674 = vmatmul.bf16.gmra.mxu0 %v4146
        %v4675 = vpop.f32.mrf.mxu0
        %v4676 = vadd.f32 %v4627, %v4675
        %v4677 = vpop.f32.mrf.mxu0
        %v4678 = vadd.f32 %v4629, %v4677
        %4679 = vmatmul.bf16.gmra.mxu0 %v4150
        %v4680 = vpop.f32.mrf.mxu0
        %v4681 = vadd.f32 %v4632, %v4680
        %v4682 = vpop.f32.mrf.mxu0
        %v4683 = vadd.f32 %v4634, %v4682
        %4684 = vmatmul.bf16.gmra.mxu0 %v4154
        %v4685 = vpop.f32.mrf.mxu0
        %v4686 = vadd.f32 %v4637, %v4685
        %v4687 = vpop.f32.mrf.mxu0
        %v4688 = vadd.f32 %v4639, %v4687
        %4689 = vmatmul.bf16.gmra.mxu0 %v4158
        %v4690 = vpop.f32.mrf.mxu0
        %v4691 = vadd.f32 %v4642, %v4690
        %v4692 = vpop.f32.mrf.mxu0
        %v4693 = vadd.f32 %v4644, %v4692
        %4694 = vmatmul.bf16.gmra.mxu0 %v4162
        %v4695 = vpop.f32.mrf.mxu0
        %v4696 = vadd.f32 %v4647, %v4695
        %v4697 = vpop.f32.mrf.mxu0
        %v4698 = vadd.f32 %v4649, %v4697
        %4699 = vdwg.mxu0
        %4700 = vmatpush.bf16.msra.mxu0 %v4487
        %4701 = vmatpush.bf16.msra.mxu0 %v4485
        %4702 = vmatpush.bf16.msra.mxu0 %v4483
        %4703 = vmatpush.bf16.msra.mxu0 %v4481
        %4704 = vmatpush.bf16.msra.mxu0 %v4479
        %4705 = vmatpush.bf16.msra.mxu0 %v4477
        %4706 = vmatpush.bf16.msra.mxu0 %v4475
        %4707 = vmatpush.bf16.msra.mxu0 %v4473
        %4708 = vmatmul.bf16.gmra.mxu0 %v4135
        %v4709 = vpop.f32.mrf.mxu0
        %v4710 = vadd.f32 %v4661, %v4709
        %v4711 = vpop.f32.mrf.mxu0
        %v4712 = vadd.f32 %v4663, %v4711
        %4713 = vmatmul.bf16.gmra.mxu0 %v4139
        %v4714 = vpop.f32.mrf.mxu0
        %v4715 = vadd.f32 %v4666, %v4714
        %v4716 = vpop.f32.mrf.mxu0
        %v4717 = vadd.f32 %v4668, %v4716
        %4718 = vmatmul.bf16.gmra.mxu0 %v4143
        %v4719 = vpop.f32.mrf.mxu0
        %v4720 = vadd.f32 %v4671, %v4719
        %v4721 = vpop.f32.mrf.mxu0
        %v4722 = vadd.f32 %v4673, %v4721
        %4723 = vmatmul.bf16.gmra.mxu0 %v4147
        %v4724 = vpop.f32.mrf.mxu0
        %v4725 = vadd.f32 %v4676, %v4724
        %v4726 = vpop.f32.mrf.mxu0
        %v4727 = vadd.f32 %v4678, %v4726
        %4728 = vmatmul.bf16.gmra.mxu0 %v4151
        %v4729 = vpop.f32.mrf.mxu0
        %v4730 = vadd.f32 %v4681, %v4729
        %v4731 = vpop.f32.mrf.mxu0
        %v4732 = vadd.f32 %v4683, %v4731
        %4733 = vmatmul.bf16.gmra.mxu0 %v4155
        %v4734 = vpop.f32.mrf.mxu0
        %v4735 = vadd.f32 %v4686, %v4734
        %v4736 = vpop.f32.mrf.mxu0
        %v4737 = vadd.f32 %v4688, %v4736
        %4738 = vmatmul.bf16.gmra.mxu0 %v4159
        %v4739 = vpop.f32.mrf.mxu0
        %v4740 = vadd.f32 %v4691, %v4739
        %v4741 = vpop.f32.mrf.mxu0
        %v4742 = vadd.f32 %v4693, %v4741
        %4743 = vmatmul.bf16.gmra.mxu0 %v4163
        %v4744 = vpop.f32.mrf.mxu0
        %v4745 = vadd.f32 %v4696, %v4744
        %v4746 = vpop.f32.mrf.mxu0
        %v4747 = vadd.f32 %v4698, %v4746
        %4748 = vdwg.mxu0
        %4749 = vmatpush.bf16.msra.mxu0 %v4440
        %4750 = vmatpush.bf16.msra.mxu0 %v4438
        %4751 = vmatpush.bf16.msra.mxu0 %v4436
        %4752 = vmatpush.bf16.msra.mxu0 %v4434
        %4753 = vmatpush.bf16.msra.mxu0 %v4432
        %4754 = vmatpush.bf16.msra.mxu0 %v4430
        %4755 = vmatpush.bf16.msra.mxu0 %v4428
        %4756 = vmatpush.bf16.msra.mxu0 %v4426
        %4757 = vmatmul.bf16.gmra.mxu0 %v4132
        %v4758 = vpop.f32.mrf.mxu0
        %v4759 = vadd.f32 %v4230, %v4758
        %v4760 = vpop.f32.mrf.mxu0
        %v4761 = vadd.f32 %v4230, %v4760
        %4762 = vmatmul.bf16.gmra.mxu0 %v4136
        %v4763 = vpop.f32.mrf.mxu0
        %v4764 = vadd.f32 %v4230, %v4763
        %v4765 = vpop.f32.mrf.mxu0
        %v4766 = vadd.f32 %v4230, %v4765
        %4767 = vmatmul.bf16.gmra.mxu0 %v4140
        %v4768 = vpop.f32.mrf.mxu0
        %v4769 = vadd.f32 %v4230, %v4768
        %v4770 = vpop.f32.mrf.mxu0
        %v4771 = vadd.f32 %v4230, %v4770
        %4772 = vmatmul.bf16.gmra.mxu0 %v4144
        %v4773 = vpop.f32.mrf.mxu0
        %v4774 = vadd.f32 %v4230, %v4773
        %v4775 = vpop.f32.mrf.mxu0
        %v4776 = vadd.f32 %v4230, %v4775
        %4777 = vmatmul.bf16.gmra.mxu0 %v4148
        %v4778 = vpop.f32.mrf.mxu0
        %v4779 = vadd.f32 %v4230, %v4778
        %v4780 = vpop.f32.mrf.mxu0
        %v4781 = vadd.f32 %v4230, %v4780
        %4782 = vmatmul.bf16.gmra.mxu0 %v4152
        %v4783 = vpop.f32.mrf.mxu0
        %v4784 = vadd.f32 %v4230, %v4783
        %v4785 = vpop.f32.mrf.mxu0
        %v4786 = vadd.f32 %v4230, %v4785
        %4787 = vmatmul.bf16.gmra.mxu0 %v4156
        %v4788 = vpop.f32.mrf.mxu0
        %v4789 = vadd.f32 %v4230, %v4788
        %v4790 = vpop.f32.mrf.mxu0
        %v4791 = vadd.f32 %v4230, %v4790
        %4792 = vmatmul.bf16.gmra.mxu0 %v4160
        %v4793 = vpop.f32.mrf.mxu0
        %v4794 = vadd.f32 %v4230, %v4793
        %v4795 = vpop.f32.mrf.mxu0
        %v4796 = vadd.f32 %v4230, %v4795
        %4797 = vdwg.mxu0
        %4798 = vmatpush.bf16.msra.mxu0 %v4456
        %4799 = vmatpush.bf16.msra.mxu0 %v4454
        %4800 = vmatpush.bf16.msra.mxu0 %v4452
        %4801 = vmatpush.bf16.msra.mxu0 %v4450
        %4802 = vmatpush.bf16.msra.mxu0 %v4448
        %4803 = vmatpush.bf16.msra.mxu0 %v4446
        %4804 = vmatpush.bf16.msra.mxu0 %v4444
        %4805 = vmatpush.bf16.msra.mxu0 %v4442
        %4806 = vmatmul.bf16.gmra.mxu0 %v4133
        %v4807 = vpop.f32.mrf.mxu0
        %v4808 = vadd.f32 %v4759, %v4807
        %v4809 = vpop.f32.mrf.mxu0
        %v4810 = vadd.f32 %v4761, %v4809
        %4811 = vmatmul.bf16.gmra.mxu0 %v4137
        %v4812 = vpop.f32.mrf.mxu0
        %v4813 = vadd.f32 %v4764, %v4812
        %v4814 = vpop.f32.mrf.mxu0
        %v4815 = vadd.f32 %v4766, %v4814
        %4816 = vmatmul.bf16.gmra.mxu0 %v4141
        %v4817 = vpop.f32.mrf.mxu0
        %v4818 = vadd.f32 %v4769, %v4817
        %v4819 = vpop.f32.mrf.mxu0
        %v4820 = vadd.f32 %v4771, %v4819
        %4821 = vmatmul.bf16.gmra.mxu0 %v4145
        %v4822 = vpop.f32.mrf.mxu0
        %v4823 = vadd.f32 %v4774, %v4822
        %v4824 = vpop.f32.mrf.mxu0
        %v4825 = vadd.f32 %v4776, %v4824
        %4826 = vmatmul.bf16.gmra.mxu0 %v4149
        %v4827 = vpop.f32.mrf.mxu0
        %v4828 = vadd.f32 %v4779, %v4827
        %v4829 = vpop.f32.mrf.mxu0
        %v4830 = vadd.f32 %v4781, %v4829
        %4831 = vmatmul.bf16.gmra.mxu0 %v4153
        %v4832 = vpop.f32.mrf.mxu0
        %v4833 = vadd.f32 %v4784, %v4832
        %v4834 = vpop.f32.mrf.mxu0
        %v4835 = vadd.f32 %v4786, %v4834
        %4836 = vmatmul.bf16.gmra.mxu0 %v4157
        %v4837 = vpop.f32.mrf.mxu0
        %v4838 = vadd.f32 %v4789, %v4837
        %v4839 = vpop.f32.mrf.mxu0
        %v4840 = vadd.f32 %v4791, %v4839
        %4841 = vmatmul.bf16.gmra.mxu0 %v4161
        %v4842 = vpop.f32.mrf.mxu0
        %v4843 = vadd.f32 %v4794, %v4842
        %v4844 = vpop.f32.mrf.mxu0
        %v4845 = vadd.f32 %v4796, %v4844
        %4846 = vdwg.mxu0
        %4847 = vmatpush.bf16.msra.mxu0 %v4472
        %4848 = vmatpush.bf16.msra.mxu0 %v4470
        %4849 = vmatpush.bf16.msra.mxu0 %v4468
        %4850 = vmatpush.bf16.msra.mxu0 %v4466
        %4851 = vmatpush.bf16.msra.mxu0 %v4464
        %4852 = vmatpush.bf16.msra.mxu0 %v4462
        %4853 = vmatpush.bf16.msra.mxu0 %v4460
        %4854 = vmatpush.bf16.msra.mxu0 %v4458
        %4855 = vmatmul.bf16.gmra.mxu0 %v4134
        %v4856 = vpop.f32.mrf.mxu0
        %v4857 = vadd.f32 %v4808, %v4856
        %v4858 = vpop.f32.mrf.mxu0
        %v4859 = vadd.f32 %v4810, %v4858
        %4860 = vmatmul.bf16.gmra.mxu0 %v4138
        %v4861 = vpop.f32.mrf.mxu0
        %v4862 = vadd.f32 %v4813, %v4861
        %v4863 = vpop.f32.mrf.mxu0
        %v4864 = vadd.f32 %v4815, %v4863
        %4865 = vmatmul.bf16.gmra.mxu0 %v4142
        %v4866 = vpop.f32.mrf.mxu0
        %v4867 = vadd.f32 %v4818, %v4866
        %v4868 = vpop.f32.mrf.mxu0
        %v4869 = vadd.f32 %v4820, %v4868
        %4870 = vmatmul.bf16.gmra.mxu0 %v4146
        %v4871 = vpop.f32.mrf.mxu0
        %v4872 = vadd.f32 %v4823, %v4871
        %v4873 = vpop.f32.mrf.mxu0
        %v4874 = vadd.f32 %v4825, %v4873
        %4875 = vmatmul.bf16.gmra.mxu0 %v4150
        %v4876 = vpop.f32.mrf.mxu0
        %v4877 = vadd.f32 %v4828, %v4876
        %v4878 = vpop.f32.mrf.mxu0
        %v4879 = vadd.f32 %v4830, %v4878
        %4880 = vmatmul.bf16.gmra.mxu0 %v4154
        %v4881 = vpop.f32.mrf.mxu0
        %v4882 = vadd.f32 %v4833, %v4881
        %v4883 = vpop.f32.mrf.mxu0
        %v4884 = vadd.f32 %v4835, %v4883
        %4885 = vmatmul.bf16.gmra.mxu0 %v4158
        %v4886 = vpop.f32.mrf.mxu0
        %v4887 = vadd.f32 %v4838, %v4886
        %v4888 = vpop.f32.mrf.mxu0
        %v4889 = vadd.f32 %v4840, %v4888
        %4890 = vmatmul.bf16.gmra.mxu0 %v4162
        %v4891 = vpop.f32.mrf.mxu0
        %v4892 = vadd.f32 %v4843, %v4891
        %v4893 = vpop.f32.mrf.mxu0
        %v4894 = vadd.f32 %v4845, %v4893
        %4895 = vdwg.mxu0
        %4896 = vmatpush.bf16.msra.mxu0 %v4488
        %4897 = vmatpush.bf16.msra.mxu0 %v4486
        %4898 = vmatpush.bf16.msra.mxu0 %v4484
        %4899 = vmatpush.bf16.msra.mxu0 %v4482
        %4900 = vmatpush.bf16.msra.mxu0 %v4480
        %4901 = vmatpush.bf16.msra.mxu0 %v4478
        %4902 = vmatpush.bf16.msra.mxu0 %v4476
        %4903 = vmatpush.bf16.msra.mxu0 %v4474
        %4904 = vmatmul.bf16.gmra.mxu0 %v4135
        %v4905 = vpop.f32.mrf.mxu0
        %v4906 = vadd.f32 %v4857, %v4905
        %v4907 = vpop.f32.mrf.mxu0
        %v4908 = vadd.f32 %v4859, %v4907
        %4909 = vmatmul.bf16.gmra.mxu0 %v4139
        %v4910 = vpop.f32.mrf.mxu0
        %v4911 = vadd.f32 %v4862, %v4910
        %v4912 = vpop.f32.mrf.mxu0
        %v4913 = vadd.f32 %v4864, %v4912
        %4914 = vmatmul.bf16.gmra.mxu0 %v4143
        %v4915 = vpop.f32.mrf.mxu0
        %v4916 = vadd.f32 %v4867, %v4915
        %v4917 = vpop.f32.mrf.mxu0
        %v4918 = vadd.f32 %v4869, %v4917
        %4919 = vmatmul.bf16.gmra.mxu0 %v4147
        %v4920 = vpop.f32.mrf.mxu0
        %v4921 = vadd.f32 %v4872, %v4920
        %v4922 = vpop.f32.mrf.mxu0
        %v4923 = vadd.f32 %v4874, %v4922
        %4924 = vmatmul.bf16.gmra.mxu0 %v4151
        %v4925 = vpop.f32.mrf.mxu0
        %v4926 = vadd.f32 %v4877, %v4925
        %v4927 = vpop.f32.mrf.mxu0
        %v4928 = vadd.f32 %v4879, %v4927
        %4929 = vmatmul.bf16.gmra.mxu0 %v4155
        %v4930 = vpop.f32.mrf.mxu0
        %v4931 = vadd.f32 %v4882, %v4930
        %v4932 = vpop.f32.mrf.mxu0
        %v4933 = vadd.f32 %v4884, %v4932
        %4934 = vmatmul.bf16.gmra.mxu0 %v4159
        %v4935 = vpop.f32.mrf.mxu0
        %v4936 = vadd.f32 %v4887, %v4935
        %v4937 = vpop.f32.mrf.mxu0
        %v4938 = vadd.f32 %v4889, %v4937
        %4939 = vmatmul.bf16.gmra.mxu0 %v4163
        %v4940 = vpop.f32.mrf.mxu0
        %v4941 = vadd.f32 %v4892, %v4940
        %v4942 = vpop.f32.mrf.mxu0
        %v4943 = vadd.f32 %v4894, %v4942
        %4944 = vdwg.mxu0
        %v4945 = vadd.f32 %v4710, %v4906
        %4946 = vadd.xlane.f32.xlu0 %v4945
        %v4947 = vpop.xlane.xlu0 %4946
        %v4948 = vadd.f32 %v4712, %v4908
        %4949 = vadd.xlane.f32.xlu0 %v4948
        %v4950 = vpop.xlane.xlu0 %4949
        %v4951 = vadd.f32 %v4715, %v4911
        %4952 = vadd.xlane.f32.xlu0 %v4951
        %v4953 = vpop.xlane.xlu0 %4952
        %v4954 = vadd.f32 %v4717, %v4913
        %4955 = vadd.xlane.f32.xlu0 %v4954
        %v4956 = vpop.xlane.xlu0 %4955
        %v4957 = vadd.f32 %v4720, %v4916
        %4958 = vadd.xlane.f32.xlu0 %v4957
        %v4959 = vpop.xlane.xlu0 %4958
        %v4960 = vadd.f32 %v4722, %v4918
        %4961 = vadd.xlane.f32.xlu0 %v4960
        %v4962 = vpop.xlane.xlu0 %4961
        %v4963 = vadd.f32 %v4725, %v4921
        %4964 = vadd.xlane.f32.xlu0 %v4963
        %v4965 = vpop.xlane.xlu0 %4964
        %v4966 = vadd.f32 %v4727, %v4923
        %4967 = vadd.xlane.f32.xlu0 %v4966
        %v4968 = vpop.xlane.xlu0 %4967
        %v4969 = vadd.f32 %v4730, %v4926
        %4970 = vadd.xlane.f32.xlu0 %v4969
        %v4971 = vpop.xlane.xlu0 %4970
        %v4972 = vadd.f32 %v4732, %v4928
        %4973 = vadd.xlane.f32.xlu0 %v4972
        %v4974 = vpop.xlane.xlu0 %4973
        %v4975 = vadd.f32 %v4735, %v4931
        %4976 = vadd.xlane.f32.xlu0 %v4975
        %v4977 = vpop.xlane.xlu0 %4976
        %v4978 = vadd.f32 %v4737, %v4933
        %4979 = vadd.xlane.f32.xlu0 %v4978
        %v4980 = vpop.xlane.xlu0 %4979
        %v4981 = vadd.f32 %v4740, %v4936
        %4982 = vadd.xlane.f32.xlu0 %v4981
        %v4983 = vpop.xlane.xlu0 %4982
        %v4984 = vadd.f32 %v4742, %v4938
        %4985 = vadd.xlane.f32.xlu0 %v4984
        %v4986 = vpop.xlane.xlu0 %4985
        %v4987 = vadd.f32 %v4745, %v4941
        %4988 = vadd.xlane.f32.xlu0 %v4987
        %v4989 = vpop.xlane.xlu0 %4988
        %v4990 = vadd.f32 %v4747, %v4943
        %4991 = vadd.xlane.f32.xlu0 %v4990
        %v4992 = vpop.xlane.xlu0 %4991
        %v4993 = vmul.f32 %v4710, %v4710
        %v4994 = vmul.f32 %v4906, %v4906
        %v4995 = vmul.f32 %v4712, %v4712
        %v4996 = vmul.f32 %v4908, %v4908
        %v4997 = vmul.f32 %v4715, %v4715
        %v4998 = vmul.f32 %v4911, %v4911
        %v4999 = vmul.f32 %v4717, %v4717
        %v5000 = vmul.f32 %v4913, %v4913
        %v5001 = vmul.f32 %v4720, %v4720
        %v5002 = vmul.f32 %v4916, %v4916
        %v5003 = vmul.f32 %v4722, %v4722
        %v5004 = vmul.f32 %v4918, %v4918
        %v5005 = vmul.f32 %v4725, %v4725
        %v5006 = vmul.f32 %v4921, %v4921
        %v5007 = vmul.f32 %v4727, %v4727
        %v5008 = vmul.f32 %v4923, %v4923
        %v5009 = vmul.f32 %v4730, %v4730
        %v5010 = vmul.f32 %v4926, %v4926
        %v5011 = vmul.f32 %v4732, %v4732
        %v5012 = vmul.f32 %v4928, %v4928
        %v5013 = vmul.f32 %v4735, %v4735
        %v5014 = vmul.f32 %v4931, %v4931
        %v5015 = vmul.f32 %v4737, %v4737
        %v5016 = vmul.f32 %v4933, %v4933
        %v5017 = vmul.f32 %v4740, %v4740
        %v5018 = vmul.f32 %v4936, %v4936
        %v5019 = vmul.f32 %v4742, %v4742
        %v5020 = vmul.f32 %v4938, %v4938
        %v5021 = vmul.f32 %v4745, %v4745
        %v5022 = vmul.f32 %v4941, %v4941
        %v5023 = vmul.f32 %v4747, %v4747
        %v5024 = vmul.f32 %v4943, %v4943
        %v5025 = vadd.f32 %v4993, %v4994
        %5026 = vadd.xlane.f32.xlu0 %v5025
        %v5027 = vpop.xlane.xlu0 %5026
        %v5028 = vadd.f32 %v4995, %v4996
        %5029 = vadd.xlane.f32.xlu0 %v5028
        %v5030 = vpop.xlane.xlu0 %5029
        %v5031 = vadd.f32 %v4997, %v4998
        %5032 = vadd.xlane.f32.xlu0 %v5031
        %v5033 = vpop.xlane.xlu0 %5032
        %v5034 = vadd.f32 %v4999, %v5000
        %5035 = vadd.xlane.f32.xlu0 %v5034
        %v5036 = vpop.xlane.xlu0 %5035
        %v5037 = vadd.f32 %v5001, %v5002
        %5038 = vadd.xlane.f32.xlu0 %v5037
        %v5039 = vpop.xlane.xlu0 %5038
        %v5040 = vadd.f32 %v5003, %v5004
        %5041 = vadd.xlane.f32.xlu0 %v5040
        %v5042 = vpop.xlane.xlu0 %5041
        %v5043 = vadd.f32 %v5005, %v5006
        %5044 = vadd.xlane.f32.xlu0 %v5043
        %v5045 = vpop.xlane.xlu0 %5044
        %v5046 = vadd.f32 %v5007, %v5008
        %5047 = vadd.xlane.f32.xlu0 %v5046
        %v5048 = vpop.xlane.xlu0 %5047
        %v5049 = vadd.f32 %v5009, %v5010
        %5050 = vadd.xlane.f32.xlu0 %v5049
        %v5051 = vpop.xlane.xlu0 %5050
        %v5052 = vadd.f32 %v5011, %v5012
        %5053 = vadd.xlane.f32.xlu0 %v5052
        %v5054 = vpop.xlane.xlu0 %5053
        %v5055 = vadd.f32 %v5013, %v5014
        %5056 = vadd.xlane.f32.xlu0 %v5055
        %v5057 = vpop.xlane.xlu0 %5056
        %v5058 = vadd.f32 %v5015, %v5016
        %5059 = vadd.xlane.f32.xlu0 %v5058
        %v5060 = vpop.xlane.xlu0 %5059
        %v5061 = vadd.f32 %v5017, %v5018
        %5062 = vadd.xlane.f32.xlu0 %v5061
        %v5063 = vpop.xlane.xlu0 %5062
        %v5064 = vadd.f32 %v5019, %v5020
        %5065 = vadd.xlane.f32.xlu0 %v5064
        %v5066 = vpop.xlane.xlu0 %5065
        %v5067 = vadd.f32 %v5021, %v5022
        %5068 = vadd.xlane.f32.xlu0 %v5067
        %v5069 = vpop.xlane.xlu0 %5068
        %v5070 = vadd.f32 %v5023, %v5024
        %5071 = vadd.xlane.f32.xlu0 %v5070
        %v5072 = vpop.xlane.xlu0 %5071
        %v5073 = vrcp.pop 256.0
        %v5074 = vmul.f32 256.0, %v5073
        %v5075 = vsub.f32 1.0, %v5074
        %v5076 = vmul.f32 %v5073, %v5075
        %v5077 = vadd.f32 %v5073, %v5076
        %vm5078 = vweird.f32 %v5073
        %v5079 = vsel %vm5078, %v5073, %v5077
        %v5080 = vmul.f32 %v4947, %v5079
        %v5081 = vmul.f32 %v4950, %v5079
        %v5082 = vmul.f32 %v4953, %v5079
        %v5083 = vmul.f32 %v4956, %v5079
        %v5084 = vmul.f32 %v4959, %v5079
        %v5085 = vmul.f32 %v4962, %v5079
        %v5086 = vmul.f32 %v4965, %v5079
        %v5087 = vmul.f32 %v4968, %v5079
        %v5088 = vmul.f32 %v4971, %v5079
        %v5089 = vmul.f32 %v4974, %v5079
        %v5090 = vmul.f32 %v4977, %v5079
        %v5091 = vmul.f32 %v4980, %v5079
        %v5092 = vmul.f32 %v4983, %v5079
        %v5093 = vmul.f32 %v4986, %v5079
        %v5094 = vmul.f32 %v4989, %v5079
        %v5095 = vmul.f32 %v4992, %v5079
        %v5096 = vmul.f32 %v5027, %v5079
        %v5097 = vmul.f32 %v5030, %v5079
        %v5098 = vmul.f32 %v5033, %v5079
        %v5099 = vmul.f32 %v5036, %v5079
        %v5100 = vmul.f32 %v5039, %v5079
        %v5101 = vmul.f32 %v5042, %v5079
        %v5102 = vmul.f32 %v5045, %v5079
        %v5103 = vmul.f32 %v5048, %v5079
        %v5104 = vmul.f32 %v5051, %v5079
        %v5105 = vmul.f32 %v5054, %v5079
        %v5106 = vmul.f32 %v5057, %v5079
        %v5107 = vmul.f32 %v5060, %v5079
        %v5108 = vmul.f32 %v5063, %v5079
        %v5109 = vmul.f32 %v5066, %v5079
        %v5110 = vmul.f32 %v5069, %v5079
        %v5111 = vmul.f32 %v5072, %v5079
        %v5112 = vmul.f32 %v5080, %v5080
        %v5113 = vmul.f32 %v5081, %v5081
        %v5114 = vmul.f32 %v5082, %v5082
        %v5115 = vmul.f32 %v5083, %v5083
        %v5116 = vmul.f32 %v5084, %v5084
        %v5117 = vmul.f32 %v5085, %v5085
        %v5118 = vmul.f32 %v5086, %v5086
        %v5119 = vmul.f32 %v5087, %v5087
        %v5120 = vmul.f32 %v5088, %v5088
        %v5121 = vmul.f32 %v5089, %v5089
        %v5122 = vmul.f32 %v5090, %v5090
        %v5123 = vmul.f32 %v5091, %v5091
        %v5124 = vmul.f32 %v5092, %v5092
        %v5125 = vmul.f32 %v5093, %v5093
        %v5126 = vmul.f32 %v5094, %v5094
        %v5127 = vmul.f32 %v5095, %v5095
        %v5128 = vsub.f32 %v5096, %v5112
        %v5129 = vsub.f32 %v5097, %v5113
        %v5130 = vsub.f32 %v5098, %v5114
        %v5131 = vsub.f32 %v5099, %v5115
        %v5132 = vsub.f32 %v5100, %v5116
        %v5133 = vsub.f32 %v5101, %v5117
        %v5134 = vsub.f32 %v5102, %v5118
        %v5135 = vsub.f32 %v5103, %v5119
        %v5136 = vsub.f32 %v5104, %v5120
        %v5137 = vsub.f32 %v5105, %v5121
        %v5138 = vsub.f32 %v5106, %v5122
        %v5139 = vsub.f32 %v5107, %v5123
        %v5140 = vsub.f32 %v5108, %v5124
        %v5141 = vsub.f32 %v5109, %v5125
        %v5142 = vsub.f32 %v5110, %v5126
        %v5143 = vsub.f32 %v5111, %v5127
        %v5144 = vmax.f32 %v5128, 0.0
        %v5145 = vmax.f32 %v5129, 0.0
        %v5146 = vmax.f32 %v5130, 0.0
        %v5147 = vmax.f32 %v5131, 0.0
        %v5148 = vmax.f32 %v5132, 0.0
        %v5149 = vmax.f32 %v5133, 0.0
        %v5150 = vmax.f32 %v5134, 0.0
        %v5151 = vmax.f32 %v5135, 0.0
        %v5152 = vmax.f32 %v5136, 0.0
        %v5153 = vmax.f32 %v5137, 0.0
        %v5154 = vmax.f32 %v5138, 0.0
        %v5155 = vmax.f32 %v5139, 0.0
        %v5156 = vmax.f32 %v5140, 0.0
        %v5157 = vmax.f32 %v5141, 0.0
        %v5158 = vmax.f32 %v5142, 0.0
        %v5159 = vmax.f32 %v5143, 0.0
        %v5160 = vsub.f32 %v4710, %v5080
        %v5161 = vsub.f32 %v4906, %v5080
        %v5162 = vsub.f32 %v4712, %v5081
        %v5163 = vsub.f32 %v4908, %v5081
        %v5164 = vsub.f32 %v4715, %v5082
        %v5165 = vsub.f32 %v4911, %v5082
        %v5166 = vsub.f32 %v4717, %v5083
        %v5167 = vsub.f32 %v4913, %v5083
        %v5168 = vsub.f32 %v4720, %v5084
        %v5169 = vsub.f32 %v4916, %v5084
        %v5170 = vsub.f32 %v4722, %v5085
        %v5171 = vsub.f32 %v4918, %v5085
        %v5172 = vsub.f32 %v4725, %v5086
        %v5173 = vsub.f32 %v4921, %v5086
        %v5174 = vsub.f32 %v4727, %v5087
        %v5175 = vsub.f32 %v4923, %v5087
        %v5176 = vsub.f32 %v4730, %v5088
        %v5177 = vsub.f32 %v4926, %v5088
        %v5178 = vsub.f32 %v4732, %v5089
        %v5179 = vsub.f32 %v4928, %v5089
        %v5180 = vsub.f32 %v4735, %v5090
        %v5181 = vsub.f32 %v4931, %v5090
        %v5182 = vsub.f32 %v4737, %v5091
        %v5183 = vsub.f32 %v4933, %v5091
        %v5184 = vsub.f32 %v4740, %v5092
        %v5185 = vsub.f32 %v4936, %v5092
        %v5186 = vsub.f32 %v4742, %v5093
        %v5187 = vsub.f32 %v4938, %v5093
        %v5188 = vsub.f32 %v4745, %v5094
        %v5189 = vsub.f32 %v4941, %v5094
        %v5190 = vsub.f32 %v4747, %v5095
        %v5191 = vsub.f32 %v4943, %v5095
        %v5192 = vadd.f32 %v5144, 1e-05
        %v5193 = vadd.f32 %v5145, 1e-05
        %v5194 = vadd.f32 %v5146, 1e-05
        %v5195 = vadd.f32 %v5147, 1e-05
        %v5196 = vadd.f32 %v5148, 1e-05
        %v5197 = vadd.f32 %v5149, 1e-05
        %v5198 = vadd.f32 %v5150, 1e-05
        %v5199 = vadd.f32 %v5151, 1e-05
        %v5200 = vadd.f32 %v5152, 1e-05
        %v5201 = vadd.f32 %v5153, 1e-05
        %v5202 = vadd.f32 %v5154, 1e-05
        %v5203 = vadd.f32 %v5155, 1e-05
        %v5204 = vadd.f32 %v5156, 1e-05
        %v5205 = vadd.f32 %v5157, 1e-05
        %v5206 = vadd.f32 %v5158, 1e-05
        %v5207 = vadd.f32 %v5159, 1e-05
        %v5208 = vrsqrt.pop %v5192
        %v5209 = vmul.f32 %v5208, %v5192
        %v5210 = vmul.f32 %v5209, %v5208
        %v5211 = vmul.f32 0.5, %v5210
        %v5212 = vsub.f32 1.5, %v5211
        %v5213 = vmul.f32 %v5208, %v5212
        %vm5214 = vweird.f32 %v5192
        %vm5215 = vweird.f32 %v5208
        %vm5216 = vmor %vm5214, %vm5215
        %v5217 = vsel %vm5216, %v5208, %v5213
        %v5218 = vrsqrt.pop %v5193
        %v5219 = vmul.f32 %v5218, %v5193
        %v5220 = vmul.f32 %v5219, %v5218
        %v5221 = vmul.f32 0.5, %v5220
        %v5222 = vsub.f32 1.5, %v5221
        %v5223 = vmul.f32 %v5218, %v5222
        %vm5224 = vweird.f32 %v5193
        %vm5225 = vweird.f32 %v5218
        %vm5226 = vmor %vm5224, %vm5225
        %v5227 = vsel %vm5226, %v5218, %v5223
        %v5228 = vrsqrt.pop %v5194
        %v5229 = vmul.f32 %v5228, %v5194
        %v5230 = vmul.f32 %v5229, %v5228
        %v5231 = vmul.f32 0.5, %v5230
        %v5232 = vsub.f32 1.5, %v5231
        %v5233 = vmul.f32 %v5228, %v5232
        %vm5234 = vweird.f32 %v5194
        %vm5235 = vweird.f32 %v5228
        %vm5236 = vmor %vm5234, %vm5235
        %v5237 = vsel %vm5236, %v5228, %v5233
        %v5238 = vrsqrt.pop %v5195
        %v5239 = vmul.f32 %v5238, %v5195
        %v5240 = vmul.f32 %v5239, %v5238
        %v5241 = vmul.f32 0.5, %v5240
        %v5242 = vsub.f32 1.5, %v5241
        %v5243 = vmul.f32 %v5238, %v5242
        %vm5244 = vweird.f32 %v5195
        %vm5245 = vweird.f32 %v5238
        %vm5246 = vmor %vm5244, %vm5245
        %v5247 = vsel %vm5246, %v5238, %v5243
        %v5248 = vrsqrt.pop %v5196
        %v5249 = vmul.f32 %v5248, %v5196
        %v5250 = vmul.f32 %v5249, %v5248
        %v5251 = vmul.f32 0.5, %v5250
        %v5252 = vsub.f32 1.5, %v5251
        %v5253 = vmul.f32 %v5248, %v5252
        %vm5254 = vweird.f32 %v5196
        %vm5255 = vweird.f32 %v5248
        %vm5256 = vmor %vm5254, %vm5255
        %v5257 = vsel %vm5256, %v5248, %v5253
        %v5258 = vrsqrt.pop %v5197
        %v5259 = vmul.f32 %v5258, %v5197
        %v5260 = vmul.f32 %v5259, %v5258
        %v5261 = vmul.f32 0.5, %v5260
        %v5262 = vsub.f32 1.5, %v5261
        %v5263 = vmul.f32 %v5258, %v5262
        %vm5264 = vweird.f32 %v5197
        %vm5265 = vweird.f32 %v5258
        %vm5266 = vmor %vm5264, %vm5265
        %v5267 = vsel %vm5266, %v5258, %v5263
        %v5268 = vrsqrt.pop %v5198
        %v5269 = vmul.f32 %v5268, %v5198
        %v5270 = vmul.f32 %v5269, %v5268
        %v5271 = vmul.f32 0.5, %v5270
        %v5272 = vsub.f32 1.5, %v5271
        %v5273 = vmul.f32 %v5268, %v5272
        %vm5274 = vweird.f32 %v5198
        %vm5275 = vweird.f32 %v5268
        %vm5276 = vmor %vm5274, %vm5275
        %v5277 = vsel %vm5276, %v5268, %v5273
        %v5278 = vrsqrt.pop %v5199
        %v5279 = vmul.f32 %v5278, %v5199
        %v5280 = vmul.f32 %v5279, %v5278
        %v5281 = vmul.f32 0.5, %v5280
        %v5282 = vsub.f32 1.5, %v5281
        %v5283 = vmul.f32 %v5278, %v5282
        %vm5284 = vweird.f32 %v5199
        %vm5285 = vweird.f32 %v5278
        %vm5286 = vmor %vm5284, %vm5285
        %v5287 = vsel %vm5286, %v5278, %v5283
        %v5288 = vrsqrt.pop %v5200
        %v5289 = vmul.f32 %v5288, %v5200
        %v5290 = vmul.f32 %v5289, %v5288
        %v5291 = vmul.f32 0.5, %v5290
        %v5292 = vsub.f32 1.5, %v5291
        %v5293 = vmul.f32 %v5288, %v5292
        %vm5294 = vweird.f32 %v5200
        %vm5295 = vweird.f32 %v5288
        %vm5296 = vmor %vm5294, %vm5295
        %v5297 = vsel %vm5296, %v5288, %v5293
        %v5298 = vrsqrt.pop %v5201
        %v5299 = vmul.f32 %v5298, %v5201
        %v5300 = vmul.f32 %v5299, %v5298
        %v5301 = vmul.f32 0.5, %v5300
        %v5302 = vsub.f32 1.5, %v5301
        %v5303 = vmul.f32 %v5298, %v5302
        %vm5304 = vweird.f32 %v5201
        %vm5305 = vweird.f32 %v5298
        %vm5306 = vmor %vm5304, %vm5305
        %v5307 = vsel %vm5306, %v5298, %v5303
        %v5308 = vrsqrt.pop %v5202
        %v5309 = vmul.f32 %v5308, %v5202
        %v5310 = vmul.f32 %v5309, %v5308
        %v5311 = vmul.f32 0.5, %v5310
        %v5312 = vsub.f32 1.5, %v5311
        %v5313 = vmul.f32 %v5308, %v5312
        %vm5314 = vweird.f32 %v5202
        %vm5315 = vweird.f32 %v5308
        %vm5316 = vmor %vm5314, %vm5315
        %v5317 = vsel %vm5316, %v5308, %v5313
        %v5318 = vrsqrt.pop %v5203
        %v5319 = vmul.f32 %v5318, %v5203
        %v5320 = vmul.f32 %v5319, %v5318
        %v5321 = vmul.f32 0.5, %v5320
        %v5322 = vsub.f32 1.5, %v5321
        %v5323 = vmul.f32 %v5318, %v5322
        %vm5324 = vweird.f32 %v5203
        %vm5325 = vweird.f32 %v5318
        %vm5326 = vmor %vm5324, %vm5325
        %v5327 = vsel %vm5326, %v5318, %v5323
        %v5328 = vrsqrt.pop %v5204
        %v5329 = vmul.f32 %v5328, %v5204
        %v5330 = vmul.f32 %v5329, %v5328
        %v5331 = vmul.f32 0.5, %v5330
        %v5332 = vsub.f32 1.5, %v5331
        %v5333 = vmul.f32 %v5328, %v5332
        %vm5334 = vweird.f32 %v5204
        %vm5335 = vweird.f32 %v5328
        %vm5336 = vmor %vm5334, %vm5335
        %v5337 = vsel %vm5336, %v5328, %v5333
        %v5338 = vrsqrt.pop %v5205
        %v5339 = vmul.f32 %v5338, %v5205
        %v5340 = vmul.f32 %v5339, %v5338
        %v5341 = vmul.f32 0.5, %v5340
        %v5342 = vsub.f32 1.5, %v5341
        %v5343 = vmul.f32 %v5338, %v5342
        %vm5344 = vweird.f32 %v5205
        %vm5345 = vweird.f32 %v5338
        %vm5346 = vmor %vm5344, %vm5345
        %v5347 = vsel %vm5346, %v5338, %v5343
        %v5348 = vrsqrt.pop %v5206
        %v5349 = vmul.f32 %v5348, %v5206
        %v5350 = vmul.f32 %v5349, %v5348
        %v5351 = vmul.f32 0.5, %v5350
        %v5352 = vsub.f32 1.5, %v5351
        %v5353 = vmul.f32 %v5348, %v5352
        %vm5354 = vweird.f32 %v5206
        %vm5355 = vweird.f32 %v5348
        %vm5356 = vmor %vm5354, %vm5355
        %v5357 = vsel %vm5356, %v5348, %v5353
        %v5358 = vrsqrt.pop %v5207
        %v5359 = vmul.f32 %v5358, %v5207
        %v5360 = vmul.f32 %v5359, %v5358
        %v5361 = vmul.f32 0.5, %v5360
        %v5362 = vsub.f32 1.5, %v5361
        %v5363 = vmul.f32 %v5358, %v5362
        %vm5364 = vweird.f32 %v5207
        %vm5365 = vweird.f32 %v5358
        %vm5366 = vmor %vm5364, %vm5365
        %v5367 = vsel %vm5366, %v5358, %v5363
        %v5368 = vmul.f32 %v5160, %v5217
        %v5369 = vmul.f32 %v5161, %v5217
        %v5370 = vmul.f32 %v5162, %v5227
        %v5371 = vmul.f32 %v5163, %v5227
        %v5372 = vmul.f32 %v5164, %v5237
        %v5373 = vmul.f32 %v5165, %v5237
        %v5374 = vmul.f32 %v5166, %v5247
        %v5375 = vmul.f32 %v5167, %v5247
        %v5376 = vmul.f32 %v5168, %v5257
        %v5377 = vmul.f32 %v5169, %v5257
        %v5378 = vmul.f32 %v5170, %v5267
        %v5379 = vmul.f32 %v5171, %v5267
        %v5380 = vmul.f32 %v5172, %v5277
        %v5381 = vmul.f32 %v5173, %v5277
        %v5382 = vmul.f32 %v5174, %v5287
        %v5383 = vmul.f32 %v5175, %v5287
        %v5384 = vmul.f32 %v5176, %v5297
        %v5385 = vmul.f32 %v5177, %v5297
        %v5386 = vmul.f32 %v5178, %v5307
        %v5387 = vmul.f32 %v5179, %v5307
        %v5388 = vmul.f32 %v5180, %v5317
        %v5389 = vmul.f32 %v5181, %v5317
        %v5390 = vmul.f32 %v5182, %v5327
        %v5391 = vmul.f32 %v5183, %v5327
        %v5392 = vmul.f32 %v5184, %v5337
        %v5393 = vmul.f32 %v5185, %v5337
        %v5394 = vmul.f32 %v5186, %v5347
        %v5395 = vmul.f32 %v5187, %v5347
        %v5396 = vmul.f32 %v5188, %v5357
        %v5397 = vmul.f32 %v5189, %v5357
        %v5398 = vmul.f32 %v5190, %v5367
        %v5399 = vmul.f32 %v5191, %v5367
        %v5401 = vperm.slane %v405, 0
        %v5402 = vperm.slane %v405, 1
        %v5405 = vmul.f32 %v5368, %v5401
        %v5406 = vmul.f32 %v5369, %v5402
        %v5407 = vmul.f32 %v5370, %v5401
        %v5408 = vmul.f32 %v5371, %v5402
        %v5409 = vmul.f32 %v5372, %v5401
        %v5410 = vmul.f32 %v5373, %v5402
        %v5411 = vmul.f32 %v5374, %v5401
        %v5412 = vmul.f32 %v5375, %v5402
        %v5413 = vmul.f32 %v5376, %v5401
        %v5414 = vmul.f32 %v5377, %v5402
        %v5415 = vmul.f32 %v5378, %v5401
        %v5416 = vmul.f32 %v5379, %v5402
        %v5417 = vmul.f32 %v5380, %v5401
        %v5418 = vmul.f32 %v5381, %v5402
        %v5419 = vmul.f32 %v5382, %v5401
        %v5420 = vmul.f32 %v5383, %v5402
        %v5421 = vmul.f32 %v5384, %v5401
        %v5422 = vmul.f32 %v5385, %v5402
        %v5423 = vmul.f32 %v5386, %v5401
        %v5424 = vmul.f32 %v5387, %v5402
        %v5425 = vmul.f32 %v5388, %v5401
        %v5426 = vmul.f32 %v5389, %v5402
        %v5427 = vmul.f32 %v5390, %v5401
        %v5428 = vmul.f32 %v5391, %v5402
        %v5429 = vmul.f32 %v5392, %v5401
        %v5430 = vmul.f32 %v5393, %v5402
        %v5431 = vmul.f32 %v5394, %v5401
        %v5432 = vmul.f32 %v5395, %v5402
        %v5433 = vmul.f32 %v5396, %v5401
        %v5434 = vmul.f32 %v5397, %v5402
        %v5435 = vmul.f32 %v5398, %v5401
        %v5436 = vmul.f32 %v5399, %v5402
        %v5438 = vperm.slane %v406, 0
        %v5439 = vperm.slane %v406, 1
        %v5442 = vadd.f32 %v5405, %v5438
        %v5443 = vadd.f32 %v5406, %v5439
        %v5444 = vadd.f32 %v5407, %v5438
        %v5445 = vadd.f32 %v5408, %v5439
        %v5446 = vadd.f32 %v5409, %v5438
        %v5447 = vadd.f32 %v5410, %v5439
        %v5448 = vadd.f32 %v5411, %v5438
        %v5449 = vadd.f32 %v5412, %v5439
        %v5450 = vadd.f32 %v5413, %v5438
        %v5451 = vadd.f32 %v5414, %v5439
        %v5452 = vadd.f32 %v5415, %v5438
        %v5453 = vadd.f32 %v5416, %v5439
        %v5454 = vadd.f32 %v5417, %v5438
        %v5455 = vadd.f32 %v5418, %v5439
        %v5456 = vadd.f32 %v5419, %v5438
        %v5457 = vadd.f32 %v5420, %v5439
        %v5458 = vadd.f32 %v5421, %v5438
        %v5459 = vadd.f32 %v5422, %v5439
        %v5460 = vadd.f32 %v5423, %v5438
        %v5461 = vadd.f32 %v5424, %v5439
        %v5462 = vadd.f32 %v5425, %v5438
        %v5463 = vadd.f32 %v5426, %v5439
        %v5464 = vadd.f32 %v5427, %v5438
        %v5465 = vadd.f32 %v5428, %v5439
        %v5466 = vadd.f32 %v5429, %v5438
        %v5467 = vadd.f32 %v5430, %v5439
        %v5468 = vadd.f32 %v5431, %v5438
        %v5469 = vadd.f32 %v5432, %v5439
        %v5470 = vadd.f32 %v5433, %v5438
        %v5471 = vadd.f32 %v5434, %v5439
        %v5472 = vadd.f32 %v5435, %v5438
        %v5473 = vadd.f32 %v5436, %v5439
        %v5474 = vmax.f32 %v5442, 0.0
        %v5475 = vmax.f32 %v5443, 0.0
        %v5476 = vmax.f32 %v5444, 0.0
        %v5477 = vmax.f32 %v5445, 0.0
        %v5478 = vmax.f32 %v5446, 0.0
        %v5479 = vmax.f32 %v5447, 0.0
        %v5480 = vmax.f32 %v5448, 0.0
        %v5481 = vmax.f32 %v5449, 0.0
        %v5482 = vmax.f32 %v5450, 0.0
        %v5483 = vmax.f32 %v5451, 0.0
        %v5484 = vmax.f32 %v5452, 0.0
        %v5485 = vmax.f32 %v5453, 0.0
        %v5486 = vmax.f32 %v5454, 0.0
        %v5487 = vmax.f32 %v5455, 0.0
        %v5488 = vmax.f32 %v5456, 0.0
        %v5489 = vmax.f32 %v5457, 0.0
        %v5490 = vmax.f32 %v5458, 0.0
        %v5491 = vmax.f32 %v5459, 0.0
        %v5492 = vmax.f32 %v5460, 0.0
        %v5493 = vmax.f32 %v5461, 0.0
        %v5494 = vmax.f32 %v5462, 0.0
        %v5495 = vmax.f32 %v5463, 0.0
        %v5496 = vmax.f32 %v5464, 0.0
        %v5497 = vmax.f32 %v5465, 0.0
        %v5498 = vmax.f32 %v5466, 0.0
        %v5499 = vmax.f32 %v5467, 0.0
        %v5500 = vmax.f32 %v5468, 0.0
        %v5501 = vmax.f32 %v5469, 0.0
        %v5502 = vmax.f32 %v5470, 0.0
        %v5503 = vmax.f32 %v5471, 0.0
        %v5504 = vmax.f32 %v5472, 0.0
        %v5505 = vmax.f32 %v5473, 0.0
        %v5506 = vpack.c.bf16 %v5476, %v5474
        %v5507 = vpack.c.bf16 %v5477, %v5475
        %v5508 = vpack.c.bf16 %v5480, %v5478
        %v5509 = vpack.c.bf16 %v5481, %v5479
        %v5510 = vpack.c.bf16 %v5484, %v5482
        %v5511 = vpack.c.bf16 %v5485, %v5483
        %v5512 = vpack.c.bf16 %v5488, %v5486
        %v5513 = vpack.c.bf16 %v5489, %v5487
        %v5514 = vpack.c.bf16 %v5492, %v5490
        %v5515 = vpack.c.bf16 %v5493, %v5491
        %v5516 = vpack.c.bf16 %v5496, %v5494
        %v5517 = vpack.c.bf16 %v5497, %v5495
        %v5518 = vpack.c.bf16 %v5500, %v5498
        %v5519 = vpack.c.bf16 %v5501, %v5499
        %v5520 = vpack.c.bf16 %v5504, %v5502
        %v5521 = vpack.c.bf16 %v5505, %v5503
        %v5522 = vld [vmem:[#allocation10] sm:$0xff]
        %v5523 = vld [vmem:[#allocation10 + $0x8] sm:$0xff]
        %v5524 = vld [vmem:[#allocation10 + $0x10] sm:$0xff]
        %v5525 = vld [vmem:[#allocation10 + $0x18] sm:$0xff]
        %v5526 = vld [vmem:[#allocation10 + $0x20] sm:$0xff]
        %v5527 = vld [vmem:[#allocation10 + $0x28] sm:$0xff]
        %v5528 = vld [vmem:[#allocation10 + $0x30] sm:$0xff]
        %v5529 = vld [vmem:[#allocation10 + $0x38] sm:$0xff]
        %v5530 = vld [vmem:[#allocation10 + $0x40] sm:$0xff]
        %v5531 = vld [vmem:[#allocation10 + $0x48] sm:$0xff]
        %v5532 = vld [vmem:[#allocation10 + $0x50] sm:$0xff]
        %v5533 = vld [vmem:[#allocation10 + $0x58] sm:$0xff]
        %v5534 = vld [vmem:[#allocation10 + $0x60] sm:$0xff]
        %v5535 = vld [vmem:[#allocation10 + $0x68] sm:$0xff]
        %v5536 = vld [vmem:[#allocation10 + $0x70] sm:$0xff]
        %v5537 = vld [vmem:[#allocation10 + $0x78] sm:$0xff]
        %v5538 = vld [vmem:[#allocation10 + $0x80] sm:$0xff]
        %v5539 = vld [vmem:[#allocation10 + $0x88] sm:$0xff]
        %v5540 = vld [vmem:[#allocation10 + $0x90] sm:$0xff]
        %v5541 = vld [vmem:[#allocation10 + $0x98] sm:$0xff]
        %v5542 = vld [vmem:[#allocation10 + $0xa0] sm:$0xff]
        %v5543 = vld [vmem:[#allocation10 + $0xa8] sm:$0xff]
        %v5544 = vld [vmem:[#allocation10 + $0xb0] sm:$0xff]
        %v5545 = vld [vmem:[#allocation10 + $0xb8] sm:$0xff]
        %v5546 = vld [vmem:[#allocation10 + $0xc0] sm:$0xff]
        %v5547 = vld [vmem:[#allocation10 + $0xc8] sm:$0xff]
        %v5548 = vld [vmem:[#allocation10 + $0xd0] sm:$0xff]
        %v5549 = vld [vmem:[#allocation10 + $0xd8] sm:$0xff]
        %v5550 = vld [vmem:[#allocation10 + $0xe0] sm:$0xff]
        %v5551 = vld [vmem:[#allocation10 + $0xe8] sm:$0xff]
        %v5552 = vld [vmem:[#allocation10 + $0xf0] sm:$0xff]
        %v5553 = vld [vmem:[#allocation10 + $0xf8] sm:$0xff]
        %v5555 = vperm.slane %v407, 0
        %v5556 = vperm.slane %v407, 1
        %v5591 = vunpack.c.l.b16 %v5522
        %v5592 = vunpack.c.h.b16 %v5522
        %v5593 = vunpack.c.l.b16 %v5523
        %v5594 = vunpack.c.h.b16 %v5523
        %v5595 = vunpack.c.l.b16 %v5524
        %v5596 = vunpack.c.h.b16 %v5524
        %v5597 = vunpack.c.l.b16 %v5525
        %v5598 = vunpack.c.h.b16 %v5525
        %v5599 = vunpack.c.l.b16 %v5526
        %v5600 = vunpack.c.h.b16 %v5526
        %v5601 = vunpack.c.l.b16 %v5527
        %v5602 = vunpack.c.h.b16 %v5527
        %v5603 = vunpack.c.l.b16 %v5528
        %v5604 = vunpack.c.h.b16 %v5528
        %v5605 = vunpack.c.l.b16 %v5529
        %v5606 = vunpack.c.h.b16 %v5529
        %v5607 = vunpack.c.l.b16 %v5530
        %v5608 = vunpack.c.h.b16 %v5530
        %v5609 = vunpack.c.l.b16 %v5531
        %v5610 = vunpack.c.h.b16 %v5531
        %v5611 = vunpack.c.l.b16 %v5532
        %v5612 = vunpack.c.h.b16 %v5532
        %v5613 = vunpack.c.l.b16 %v5533
        %v5614 = vunpack.c.h.b16 %v5533
        %v5615 = vunpack.c.l.b16 %v5534
        %v5616 = vunpack.c.h.b16 %v5534
        %v5617 = vunpack.c.l.b16 %v5535
        %v5618 = vunpack.c.h.b16 %v5535
        %v5619 = vunpack.c.l.b16 %v5536
        %v5620 = vunpack.c.h.b16 %v5536
        %v5621 = vunpack.c.l.b16 %v5537
        %v5622 = vunpack.c.h.b16 %v5537
        %v5623 = vunpack.c.l.b16 %v5538
        %v5624 = vunpack.c.h.b16 %v5538
        %v5625 = vunpack.c.l.b16 %v5539
        %v5626 = vunpack.c.h.b16 %v5539
        %v5627 = vunpack.c.l.b16 %v5540
        %v5628 = vunpack.c.h.b16 %v5540
        %v5629 = vunpack.c.l.b16 %v5541
        %v5630 = vunpack.c.h.b16 %v5541
        %v5631 = vunpack.c.l.b16 %v5542
        %v5632 = vunpack.c.h.b16 %v5542
        %v5633 = vunpack.c.l.b16 %v5543
        %v5634 = vunpack.c.h.b16 %v5543
        %v5635 = vunpack.c.l.b16 %v5544
        %v5636 = vunpack.c.h.b16 %v5544
        %v5637 = vunpack.c.l.b16 %v5545
        %v5638 = vunpack.c.h.b16 %v5545
        %v5639 = vunpack.c.l.b16 %v5546
        %v5640 = vunpack.c.h.b16 %v5546
        %v5641 = vunpack.c.l.b16 %v5547
        %v5642 = vunpack.c.h.b16 %v5547
        %v5643 = vunpack.c.l.b16 %v5548
        %v5644 = vunpack.c.h.b16 %v5548
        %v5645 = vunpack.c.l.b16 %v5549
        %v5646 = vunpack.c.h.b16 %v5549
        %v5647 = vunpack.c.l.b16 %v5550
        %v5648 = vunpack.c.h.b16 %v5550
        %v5649 = vunpack.c.l.b16 %v5551
        %v5650 = vunpack.c.h.b16 %v5551
        %v5651 = vunpack.c.l.b16 %v5552
        %v5652 = vunpack.c.h.b16 %v5552
        %v5653 = vunpack.c.l.b16 %v5553
        %v5654 = vunpack.c.h.b16 %v5553
        %v5655 = vpack.c.b16 %v5593, %v5591
        %v5656 = vpack.c.b16 %v5594, %v5592
        %v5657 = vpack.c.b16 %v5597, %v5595
        %v5658 = vpack.c.b16 %v5598, %v5596
        %v5659 = vpack.c.b16 %v5601, %v5599
        %v5660 = vpack.c.b16 %v5602, %v5600
        %v5661 = vpack.c.b16 %v5605, %v5603
        %v5662 = vpack.c.b16 %v5606, %v5604
        %v5663 = vpack.c.b16 %v5609, %v5607
        %v5664 = vpack.c.b16 %v5610, %v5608
        %v5665 = vpack.c.b16 %v5613, %v5611
        %v5666 = vpack.c.b16 %v5614, %v5612
        %v5667 = vpack.c.b16 %v5617, %v5615
        %v5668 = vpack.c.b16 %v5618, %v5616
        %v5669 = vpack.c.b16 %v5621, %v5619
        %v5670 = vpack.c.b16 %v5622, %v5620
        %v5671 = vpack.c.b16 %v5625, %v5623
        %v5672 = vpack.c.b16 %v5626, %v5624
        %v5673 = vpack.c.b16 %v5629, %v5627
        %v5674 = vpack.c.b16 %v5630, %v5628
        %v5675 = vpack.c.b16 %v5633, %v5631
        %v5676 = vpack.c.b16 %v5634, %v5632
        %v5677 = vpack.c.b16 %v5637, %v5635
        %v5678 = vpack.c.b16 %v5638, %v5636
        %v5679 = vpack.c.b16 %v5641, %v5639
        %v5680 = vpack.c.b16 %v5642, %v5640
        %v5681 = vpack.c.b16 %v5645, %v5643
        %v5682 = vpack.c.b16 %v5646, %v5644
        %v5683 = vpack.c.b16 %v5649, %v5647
        %v5684 = vpack.c.b16 %v5650, %v5648
        %v5685 = vpack.c.b16 %v5653, %v5651
        %v5686 = vpack.c.b16 %v5654, %v5652
        %5719 = vmatpush.bf16.msra.mxu0 %v5669
        %5720 = vmatpush.bf16.msra.mxu0 %v5667
        %5721 = vmatpush.bf16.msra.mxu0 %v5665
        %5722 = vmatpush.bf16.msra.mxu0 %v5663
        %5723 = vmatpush.bf16.msra.mxu0 %v5661
        %5724 = vmatpush.bf16.msra.mxu0 %v5659
        %5725 = vmatpush.bf16.msra.mxu0 %v5657
        %5726 = vmatpush.bf16.msra.mxu0 %v5655
        %5727 = vmatmul.bf16.gmra.mxu0 %v5506
        %v5728 = vpop.f32.mrf.mxu0
        %v5729 = vadd.f32 %v5555, %v5728
        %v5730 = vpop.f32.mrf.mxu0
        %v5731 = vadd.f32 %v5555, %v5730
        %5732 = vmatmul.bf16.gmra.mxu0 %v5508
        %v5733 = vpop.f32.mrf.mxu0
        %v5734 = vadd.f32 %v5555, %v5733
        %v5735 = vpop.f32.mrf.mxu0
        %v5736 = vadd.f32 %v5555, %v5735
        %5737 = vmatmul.bf16.gmra.mxu0 %v5510
        %v5738 = vpop.f32.mrf.mxu0
        %v5739 = vadd.f32 %v5555, %v5738
        %v5740 = vpop.f32.mrf.mxu0
        %v5741 = vadd.f32 %v5555, %v5740
        %5742 = vmatmul.bf16.gmra.mxu0 %v5512
        %v5743 = vpop.f32.mrf.mxu0
        %v5744 = vadd.f32 %v5555, %v5743
        %v5745 = vpop.f32.mrf.mxu0
        %v5746 = vadd.f32 %v5555, %v5745
        %5747 = vmatmul.bf16.gmra.mxu0 %v5514
        %v5748 = vpop.f32.mrf.mxu0
        %v5749 = vadd.f32 %v5555, %v5748
        %v5750 = vpop.f32.mrf.mxu0
        %v5751 = vadd.f32 %v5555, %v5750
        %5752 = vmatmul.bf16.gmra.mxu0 %v5516
        %v5753 = vpop.f32.mrf.mxu0
        %v5754 = vadd.f32 %v5555, %v5753
        %v5755 = vpop.f32.mrf.mxu0
        %v5756 = vadd.f32 %v5555, %v5755
        %5757 = vmatmul.bf16.gmra.mxu0 %v5518
        %v5758 = vpop.f32.mrf.mxu0
        %v5759 = vadd.f32 %v5555, %v5758
        %v5760 = vpop.f32.mrf.mxu0
        %v5761 = vadd.f32 %v5555, %v5760
        %5762 = vmatmul.bf16.gmra.mxu0 %v5520
        %v5763 = vpop.f32.mrf.mxu0
        %v5764 = vadd.f32 %v5555, %v5763
        %v5765 = vpop.f32.mrf.mxu0
        %v5766 = vadd.f32 %v5555, %v5765
        %5767 = vdwg.mxu0
        %5768 = vmatpush.bf16.msra.mxu0 %v5685
        %5769 = vmatpush.bf16.msra.mxu0 %v5683
        %5770 = vmatpush.bf16.msra.mxu0 %v5681
        %5771 = vmatpush.bf16.msra.mxu0 %v5679
        %5772 = vmatpush.bf16.msra.mxu0 %v5677
        %5773 = vmatpush.bf16.msra.mxu0 %v5675
        %5774 = vmatpush.bf16.msra.mxu0 %v5673
        %5775 = vmatpush.bf16.msra.mxu0 %v5671
        %5776 = vmatmul.bf16.gmra.mxu0 %v5507
        %v5777 = vpop.f32.mrf.mxu0
        %v5778 = vadd.f32 %v5729, %v5777
        %v5779 = vpop.f32.mrf.mxu0
        %v5780 = vadd.f32 %v5731, %v5779
        %5781 = vmatmul.bf16.gmra.mxu0 %v5509
        %v5782 = vpop.f32.mrf.mxu0
        %v5783 = vadd.f32 %v5734, %v5782
        %v5784 = vpop.f32.mrf.mxu0
        %v5785 = vadd.f32 %v5736, %v5784
        %5786 = vmatmul.bf16.gmra.mxu0 %v5511
        %v5787 = vpop.f32.mrf.mxu0
        %v5788 = vadd.f32 %v5739, %v5787
        %v5789 = vpop.f32.mrf.mxu0
        %v5790 = vadd.f32 %v5741, %v5789
        %5791 = vmatmul.bf16.gmra.mxu0 %v5513
        %v5792 = vpop.f32.mrf.mxu0
        %v5793 = vadd.f32 %v5744, %v5792
        %v5794 = vpop.f32.mrf.mxu0
        %v5795 = vadd.f32 %v5746, %v5794
        %5796 = vmatmul.bf16.gmra.mxu0 %v5515
        %v5797 = vpop.f32.mrf.mxu0
        %v5798 = vadd.f32 %v5749, %v5797
        %v5799 = vpop.f32.mrf.mxu0
        %v5800 = vadd.f32 %v5751, %v5799
        %5801 = vmatmul.bf16.gmra.mxu0 %v5517
        %v5802 = vpop.f32.mrf.mxu0
        %v5803 = vadd.f32 %v5754, %v5802
        %v5804 = vpop.f32.mrf.mxu0
        %v5805 = vadd.f32 %v5756, %v5804
        %5806 = vmatmul.bf16.gmra.mxu0 %v5519
        %v5807 = vpop.f32.mrf.mxu0
        %v5808 = vadd.f32 %v5759, %v5807
        %v5809 = vpop.f32.mrf.mxu0
        %v5810 = vadd.f32 %v5761, %v5809
        %5811 = vmatmul.bf16.gmra.mxu0 %v5521
        %v5812 = vpop.f32.mrf.mxu0
        %v5813 = vadd.f32 %v5764, %v5812
        %v5814 = vpop.f32.mrf.mxu0
        %v5815 = vadd.f32 %v5766, %v5814
        %5816 = vdwg.mxu0
        %5817 = vmatpush.bf16.msra.mxu0 %v5670
        %5818 = vmatpush.bf16.msra.mxu0 %v5668
        %5819 = vmatpush.bf16.msra.mxu0 %v5666
        %5820 = vmatpush.bf16.msra.mxu0 %v5664
        %5821 = vmatpush.bf16.msra.mxu0 %v5662
        %5822 = vmatpush.bf16.msra.mxu0 %v5660
        %5823 = vmatpush.bf16.msra.mxu0 %v5658
        %5824 = vmatpush.bf16.msra.mxu0 %v5656
        %5825 = vmatmul.bf16.gmra.mxu0 %v5506
        %v5826 = vpop.f32.mrf.mxu0
        %v5827 = vadd.f32 %v5556, %v5826
        %v5828 = vpop.f32.mrf.mxu0
        %v5829 = vadd.f32 %v5556, %v5828
        %5830 = vmatmul.bf16.gmra.mxu0 %v5508
        %v5831 = vpop.f32.mrf.mxu0
        %v5832 = vadd.f32 %v5556, %v5831
        %v5833 = vpop.f32.mrf.mxu0
        %v5834 = vadd.f32 %v5556, %v5833
        %5835 = vmatmul.bf16.gmra.mxu0 %v5510
        %v5836 = vpop.f32.mrf.mxu0
        %v5837 = vadd.f32 %v5556, %v5836
        %v5838 = vpop.f32.mrf.mxu0
        %v5839 = vadd.f32 %v5556, %v5838
        %5840 = vmatmul.bf16.gmra.mxu0 %v5512
        %v5841 = vpop.f32.mrf.mxu0
        %v5842 = vadd.f32 %v5556, %v5841
        %v5843 = vpop.f32.mrf.mxu0
        %v5844 = vadd.f32 %v5556, %v5843
        %5845 = vmatmul.bf16.gmra.mxu0 %v5514
        %v5846 = vpop.f32.mrf.mxu0
        %v5847 = vadd.f32 %v5556, %v5846
        %v5848 = vpop.f32.mrf.mxu0
        %v5849 = vadd.f32 %v5556, %v5848
        %5850 = vmatmul.bf16.gmra.mxu0 %v5516
        %v5851 = vpop.f32.mrf.mxu0
        %v5852 = vadd.f32 %v5556, %v5851
        %v5853 = vpop.f32.mrf.mxu0
        %v5854 = vadd.f32 %v5556, %v5853
        %5855 = vmatmul.bf16.gmra.mxu0 %v5518
        %v5856 = vpop.f32.mrf.mxu0
        %v5857 = vadd.f32 %v5556, %v5856
        %v5858 = vpop.f32.mrf.mxu0
        %v5859 = vadd.f32 %v5556, %v5858
        %5860 = vmatmul.bf16.gmra.mxu0 %v5520
        %v5861 = vpop.f32.mrf.mxu0
        %v5862 = vadd.f32 %v5556, %v5861
        %v5863 = vpop.f32.mrf.mxu0
        %v5864 = vadd.f32 %v5556, %v5863
        %5865 = vdwg.mxu0
        %5866 = vmatpush.bf16.msra.mxu0 %v5686
        %5867 = vmatpush.bf16.msra.mxu0 %v5684
        %5868 = vmatpush.bf16.msra.mxu0 %v5682
        %5869 = vmatpush.bf16.msra.mxu0 %v5680
        %5870 = vmatpush.bf16.msra.mxu0 %v5678
        %5871 = vmatpush.bf16.msra.mxu0 %v5676
        %5872 = vmatpush.bf16.msra.mxu0 %v5674
        %5873 = vmatpush.bf16.msra.mxu0 %v5672
        %5874 = vmatmul.bf16.gmra.mxu0 %v5507
        %v5875 = vpop.f32.mrf.mxu0
        %v5876 = vadd.f32 %v5827, %v5875
        %v5877 = vpop.f32.mrf.mxu0
        %v5878 = vadd.f32 %v5829, %v5877
        %5879 = vmatmul.bf16.gmra.mxu0 %v5509
        %v5880 = vpop.f32.mrf.mxu0
        %v5881 = vadd.f32 %v5832, %v5880
        %v5882 = vpop.f32.mrf.mxu0
        %v5883 = vadd.f32 %v5834, %v5882
        %5884 = vmatmul.bf16.gmra.mxu0 %v5511
        %v5885 = vpop.f32.mrf.mxu0
        %v5886 = vadd.f32 %v5837, %v5885
        %v5887 = vpop.f32.mrf.mxu0
        %v5888 = vadd.f32 %v5839, %v5887
        %5889 = vmatmul.bf16.gmra.mxu0 %v5513
        %v5890 = vpop.f32.mrf.mxu0
        %v5891 = vadd.f32 %v5842, %v5890
        %v5892 = vpop.f32.mrf.mxu0
        %v5893 = vadd.f32 %v5844, %v5892
        %5894 = vmatmul.bf16.gmra.mxu0 %v5515
        %v5895 = vpop.f32.mrf.mxu0
        %v5896 = vadd.f32 %v5847, %v5895
        %v5897 = vpop.f32.mrf.mxu0
        %v5898 = vadd.f32 %v5849, %v5897
        %5899 = vmatmul.bf16.gmra.mxu0 %v5517
        %v5900 = vpop.f32.mrf.mxu0
        %v5901 = vadd.f32 %v5852, %v5900
        %v5902 = vpop.f32.mrf.mxu0
        %v5903 = vadd.f32 %v5854, %v5902
        %5904 = vmatmul.bf16.gmra.mxu0 %v5519
        %v5905 = vpop.f32.mrf.mxu0
        %v5906 = vadd.f32 %v5857, %v5905
        %v5907 = vpop.f32.mrf.mxu0
        %v5908 = vadd.f32 %v5859, %v5907
        %5909 = vmatmul.bf16.gmra.mxu0 %v5521
        %v5910 = vpop.f32.mrf.mxu0
        %v5911 = vadd.f32 %v5862, %v5910
        %v5912 = vpop.f32.mrf.mxu0
        %v5913 = vadd.f32 %v5864, %v5912
        %5914 = vdwg.mxu0
        %v5915 = vmax.f32 %v5778, 0.0
        %v5916 = vmax.f32 %v5876, 0.0
        %v5917 = vmax.f32 %v5780, 0.0
        %v5918 = vmax.f32 %v5878, 0.0
        %v5919 = vmax.f32 %v5783, 0.0
        %v5920 = vmax.f32 %v5881, 0.0
        %v5921 = vmax.f32 %v5785, 0.0
        %v5922 = vmax.f32 %v5883, 0.0
        %v5923 = vmax.f32 %v5788, 0.0
        %v5924 = vmax.f32 %v5886, 0.0
        %v5925 = vmax.f32 %v5790, 0.0
        %v5926 = vmax.f32 %v5888, 0.0
        %v5927 = vmax.f32 %v5793, 0.0
        %v5928 = vmax.f32 %v5891, 0.0
        %v5929 = vmax.f32 %v5795, 0.0
        %v5930 = vmax.f32 %v5893, 0.0
        %v5931 = vmax.f32 %v5798, 0.0
        %v5932 = vmax.f32 %v5896, 0.0
        %v5933 = vmax.f32 %v5800, 0.0
        %v5934 = vmax.f32 %v5898, 0.0
        %v5935 = vmax.f32 %v5803, 0.0
        %v5936 = vmax.f32 %v5901, 0.0
        %v5937 = vmax.f32 %v5805, 0.0
        %v5938 = vmax.f32 %v5903, 0.0
        %v5939 = vmax.f32 %v5808, 0.0
        %v5940 = vmax.f32 %v5906, 0.0
        %v5941 = vmax.f32 %v5810, 0.0
        %v5942 = vmax.f32 %v5908, 0.0
        %v5943 = vmax.f32 %v5813, 0.0
        %v5944 = vmax.f32 %v5911, 0.0
        %v5945 = vmax.f32 %v5815, 0.0
        %v5946 = vmax.f32 %v5913, 0.0
        %v5947 = vadd.f32 %v5915, %v5916
        %5948 = vadd.xlane.f32.xlu0 %v5947
        %v5949 = vpop.xlane.xlu0 %5948
        %v5950 = vadd.f32 %v5917, %v5918
        %5951 = vadd.xlane.f32.xlu0 %v5950
        %v5952 = vpop.xlane.xlu0 %5951
        %v5953 = vadd.f32 %v5919, %v5920
        %5954 = vadd.xlane.f32.xlu0 %v5953
        %v5955 = vpop.xlane.xlu0 %5954
        %v5956 = vadd.f32 %v5921, %v5922
        %5957 = vadd.xlane.f32.xlu0 %v5956
        %v5958 = vpop.xlane.xlu0 %5957
        %v5959 = vadd.f32 %v5923, %v5924
        %5960 = vadd.xlane.f32.xlu0 %v5959
        %v5961 = vpop.xlane.xlu0 %5960
        %v5962 = vadd.f32 %v5925, %v5926
        %5963 = vadd.xlane.f32.xlu0 %v5962
        %v5964 = vpop.xlane.xlu0 %5963
        %v5965 = vadd.f32 %v5927, %v5928
        %5966 = vadd.xlane.f32.xlu0 %v5965
        %v5967 = vpop.xlane.xlu0 %5966
        %v5968 = vadd.f32 %v5929, %v5930
        %5969 = vadd.xlane.f32.xlu0 %v5968
        %v5970 = vpop.xlane.xlu0 %5969
        %v5971 = vadd.f32 %v5931, %v5932
        %5972 = vadd.xlane.f32.xlu0 %v5971
        %v5973 = vpop.xlane.xlu0 %5972
        %v5974 = vadd.f32 %v5933, %v5934
        %5975 = vadd.xlane.f32.xlu0 %v5974
        %v5976 = vpop.xlane.xlu0 %5975
        %v5977 = vadd.f32 %v5935, %v5936
        %5978 = vadd.xlane.f32.xlu0 %v5977
        %v5979 = vpop.xlane.xlu0 %5978
        %v5980 = vadd.f32 %v5937, %v5938
        %5981 = vadd.xlane.f32.xlu0 %v5980
        %v5982 = vpop.xlane.xlu0 %5981
        %v5983 = vadd.f32 %v5939, %v5940
        %5984 = vadd.xlane.f32.xlu0 %v5983
        %v5985 = vpop.xlane.xlu0 %5984
        %v5986 = vadd.f32 %v5941, %v5942
        %5987 = vadd.xlane.f32.xlu0 %v5986
        %v5988 = vpop.xlane.xlu0 %5987
        %v5989 = vadd.f32 %v5943, %v5944
        %5990 = vadd.xlane.f32.xlu0 %v5989
        %v5991 = vpop.xlane.xlu0 %5990
        %v5992 = vadd.f32 %v5945, %v5946
        %5993 = vadd.xlane.f32.xlu0 %v5992
        %v5994 = vpop.xlane.xlu0 %5993
        %v5995 = vmul.f32 %v5915, %v5915
        %v5996 = vmul.f32 %v5916, %v5916
        %v5997 = vmul.f32 %v5917, %v5917
        %v5998 = vmul.f32 %v5918, %v5918
        %v5999 = vmul.f32 %v5919, %v5919
        %v6000 = vmul.f32 %v5920, %v5920
        %v6001 = vmul.f32 %v5921, %v5921
        %v6002 = vmul.f32 %v5922, %v5922
        %v6003 = vmul.f32 %v5923, %v5923
        %v6004 = vmul.f32 %v5924, %v5924
        %v6005 = vmul.f32 %v5925, %v5925
        %v6006 = vmul.f32 %v5926, %v5926
        %v6007 = vmul.f32 %v5927, %v5927
        %v6008 = vmul.f32 %v5928, %v5928
        %v6009 = vmul.f32 %v5929, %v5929
        %v6010 = vmul.f32 %v5930, %v5930
        %v6011 = vmul.f32 %v5931, %v5931
        %v6012 = vmul.f32 %v5932, %v5932
        %v6013 = vmul.f32 %v5933, %v5933
        %v6014 = vmul.f32 %v5934, %v5934
        %v6015 = vmul.f32 %v5935, %v5935
        %v6016 = vmul.f32 %v5936, %v5936
        %v6017 = vmul.f32 %v5937, %v5937
        %v6018 = vmul.f32 %v5938, %v5938
        %v6019 = vmul.f32 %v5939, %v5939
        %v6020 = vmul.f32 %v5940, %v5940
        %v6021 = vmul.f32 %v5941, %v5941
        %v6022 = vmul.f32 %v5942, %v5942
        %v6023 = vmul.f32 %v5943, %v5943
        %v6024 = vmul.f32 %v5944, %v5944
        %v6025 = vmul.f32 %v5945, %v5945
        %v6026 = vmul.f32 %v5946, %v5946
        %v6027 = vadd.f32 %v5995, %v5996
        %6028 = vadd.xlane.f32.xlu0 %v6027
        %v6029 = vpop.xlane.xlu0 %6028
        %v6030 = vadd.f32 %v5997, %v5998
        %6031 = vadd.xlane.f32.xlu0 %v6030
        %v6032 = vpop.xlane.xlu0 %6031
        %v6033 = vadd.f32 %v5999, %v6000
        %6034 = vadd.xlane.f32.xlu0 %v6033
        %v6035 = vpop.xlane.xlu0 %6034
        %v6036 = vadd.f32 %v6001, %v6002
        %6037 = vadd.xlane.f32.xlu0 %v6036
        %v6038 = vpop.xlane.xlu0 %6037
        %v6039 = vadd.f32 %v6003, %v6004
        %6040 = vadd.xlane.f32.xlu0 %v6039
        %v6041 = vpop.xlane.xlu0 %6040
        %v6042 = vadd.f32 %v6005, %v6006
        %6043 = vadd.xlane.f32.xlu0 %v6042
        %v6044 = vpop.xlane.xlu0 %6043
        %v6045 = vadd.f32 %v6007, %v6008
        %6046 = vadd.xlane.f32.xlu0 %v6045
        %v6047 = vpop.xlane.xlu0 %6046
        %v6048 = vadd.f32 %v6009, %v6010
        %6049 = vadd.xlane.f32.xlu0 %v6048
        %v6050 = vpop.xlane.xlu0 %6049
        %v6051 = vadd.f32 %v6011, %v6012
        %6052 = vadd.xlane.f32.xlu0 %v6051
        %v6053 = vpop.xlane.xlu0 %6052
        %v6054 = vadd.f32 %v6013, %v6014
        %6055 = vadd.xlane.f32.xlu0 %v6054
        %v6056 = vpop.xlane.xlu0 %6055
        %v6057 = vadd.f32 %v6015, %v6016
        %6058 = vadd.xlane.f32.xlu0 %v6057
        %v6059 = vpop.xlane.xlu0 %6058
        %v6060 = vadd.f32 %v6017, %v6018
        %6061 = vadd.xlane.f32.xlu0 %v6060
        %v6062 = vpop.xlane.xlu0 %6061
        %v6063 = vadd.f32 %v6019, %v6020
        %6064 = vadd.xlane.f32.xlu0 %v6063
        %v6065 = vpop.xlane.xlu0 %6064
        %v6066 = vadd.f32 %v6021, %v6022
        %6067 = vadd.xlane.f32.xlu0 %v6066
        %v6068 = vpop.xlane.xlu0 %6067
        %v6069 = vadd.f32 %v6023, %v6024
        %6070 = vadd.xlane.f32.xlu0 %v6069
        %v6071 = vpop.xlane.xlu0 %6070
        %v6072 = vadd.f32 %v6025, %v6026
        %6073 = vadd.xlane.f32.xlu0 %v6072
        %v6074 = vpop.xlane.xlu0 %6073
        %v6075 = vmul.f32 %v5949, %v5079
        %v6076 = vmul.f32 %v5952, %v5079
        %v6077 = vmul.f32 %v5955, %v5079
        %v6078 = vmul.f32 %v5958, %v5079
        %v6079 = vmul.f32 %v5961, %v5079
        %v6080 = vmul.f32 %v5964, %v5079
        %v6081 = vmul.f32 %v5967, %v5079
        %v6082 = vmul.f32 %v5970, %v5079
        %v6083 = vmul.f32 %v5973, %v5079
        %v6084 = vmul.f32 %v5976, %v5079
        %v6085 = vmul.f32 %v5979, %v5079
        %v6086 = vmul.f32 %v5982, %v5079
        %v6087 = vmul.f32 %v5985, %v5079
        %v6088 = vmul.f32 %v5988, %v5079
        %v6089 = vmul.f32 %v5991, %v5079
        %v6090 = vmul.f32 %v5994, %v5079
        %v6091 = vmul.f32 %v6029, %v5079
        %v6092 = vmul.f32 %v6032, %v5079
        %v6093 = vmul.f32 %v6035, %v5079
        %v6094 = vmul.f32 %v6038, %v5079
        %v6095 = vmul.f32 %v6041, %v5079
        %v6096 = vmul.f32 %v6044, %v5079
        %v6097 = vmul.f32 %v6047, %v5079
        %v6098 = vmul.f32 %v6050, %v5079
        %v6099 = vmul.f32 %v6053, %v5079
        %v6100 = vmul.f32 %v6056, %v5079
        %v6101 = vmul.f32 %v6059, %v5079
        %v6102 = vmul.f32 %v6062, %v5079
        %v6103 = vmul.f32 %v6065, %v5079
        %v6104 = vmul.f32 %v6068, %v5079
        %v6105 = vmul.f32 %v6071, %v5079
        %v6106 = vmul.f32 %v6074, %v5079
        %v6107 = vmul.f32 %v6075, %v6075
        %v6108 = vmul.f32 %v6076, %v6076
        %v6109 = vmul.f32 %v6077, %v6077
        %v6110 = vmul.f32 %v6078, %v6078
        %v6111 = vmul.f32 %v6079, %v6079
        %v6112 = vmul.f32 %v6080, %v6080
        %v6113 = vmul.f32 %v6081, %v6081
        %v6114 = vmul.f32 %v6082, %v6082
        %v6115 = vmul.f32 %v6083, %v6083
        %v6116 = vmul.f32 %v6084, %v6084
        %v6117 = vmul.f32 %v6085, %v6085
        %v6118 = vmul.f32 %v6086, %v6086
        %v6119 = vmul.f32 %v6087, %v6087
        %v6120 = vmul.f32 %v6088, %v6088
        %v6121 = vmul.f32 %v6089, %v6089
        %v6122 = vmul.f32 %v6090, %v6090
        %v6123 = vsub.f32 %v6091, %v6107
        %v6124 = vsub.f32 %v6092, %v6108
        %v6125 = vsub.f32 %v6093, %v6109
        %v6126 = vsub.f32 %v6094, %v6110
        %v6127 = vsub.f32 %v6095, %v6111
        %v6128 = vsub.f32 %v6096, %v6112
        %v6129 = vsub.f32 %v6097, %v6113
        %v6130 = vsub.f32 %v6098, %v6114
        %v6131 = vsub.f32 %v6099, %v6115
        %v6132 = vsub.f32 %v6100, %v6116
        %v6133 = vsub.f32 %v6101, %v6117
        %v6134 = vsub.f32 %v6102, %v6118
        %v6135 = vsub.f32 %v6103, %v6119
        %v6136 = vsub.f32 %v6104, %v6120
        %v6137 = vsub.f32 %v6105, %v6121
        %v6138 = vsub.f32 %v6106, %v6122
        %v6139 = vmax.f32 %v6123, 0.0
        %v6140 = vmax.f32 %v6124, 0.0
        %v6141 = vmax.f32 %v6125, 0.0
        %v6142 = vmax.f32 %v6126, 0.0
        %v6143 = vmax.f32 %v6127, 0.0
        %v6144 = vmax.f32 %v6128, 0.0
        %v6145 = vmax.f32 %v6129, 0.0
        %v6146 = vmax.f32 %v6130, 0.0
        %v6147 = vmax.f32 %v6131, 0.0
        %v6148 = vmax.f32 %v6132, 0.0
        %v6149 = vmax.f32 %v6133, 0.0
        %v6150 = vmax.f32 %v6134, 0.0
        %v6151 = vmax.f32 %v6135, 0.0
        %v6152 = vmax.f32 %v6136, 0.0
        %v6153 = vmax.f32 %v6137, 0.0
        %v6154 = vmax.f32 %v6138, 0.0
        %v6155 = vsub.f32 %v5915, %v6075
        %v6156 = vsub.f32 %v5916, %v6075
        %v6157 = vsub.f32 %v5917, %v6076
        %v6158 = vsub.f32 %v5918, %v6076
        %v6159 = vsub.f32 %v5919, %v6077
        %v6160 = vsub.f32 %v5920, %v6077
        %v6161 = vsub.f32 %v5921, %v6078
        %v6162 = vsub.f32 %v5922, %v6078
        %v6163 = vsub.f32 %v5923, %v6079
        %v6164 = vsub.f32 %v5924, %v6079
        %v6165 = vsub.f32 %v5925, %v6080
        %v6166 = vsub.f32 %v5926, %v6080
        %v6167 = vsub.f32 %v5927, %v6081
        %v6168 = vsub.f32 %v5928, %v6081
        %v6169 = vsub.f32 %v5929, %v6082
        %v6170 = vsub.f32 %v5930, %v6082
        %v6171 = vsub.f32 %v5931, %v6083
        %v6172 = vsub.f32 %v5932, %v6083
        %v6173 = vsub.f32 %v5933, %v6084
        %v6174 = vsub.f32 %v5934, %v6084
        %v6175 = vsub.f32 %v5935, %v6085
        %v6176 = vsub.f32 %v5936, %v6085
        %v6177 = vsub.f32 %v5937, %v6086
        %v6178 = vsub.f32 %v5938, %v6086
        %v6179 = vsub.f32 %v5939, %v6087
        %v6180 = vsub.f32 %v5940, %v6087
        %v6181 = vsub.f32 %v5941, %v6088
        %v6182 = vsub.f32 %v5942, %v6088
        %v6183 = vsub.f32 %v5943, %v6089
        %v6184 = vsub.f32 %v5944, %v6089
        %v6185 = vsub.f32 %v5945, %v6090
        %v6186 = vsub.f32 %v5946, %v6090
        %v6187 = vadd.f32 %v6139, 1e-05
        %v6188 = vadd.f32 %v6140, 1e-05
        %v6189 = vadd.f32 %v6141, 1e-05
        %v6190 = vadd.f32 %v6142, 1e-05
        %v6191 = vadd.f32 %v6143, 1e-05
        %v6192 = vadd.f32 %v6144, 1e-05
        %v6193 = vadd.f32 %v6145, 1e-05
        %v6194 = vadd.f32 %v6146, 1e-05
        %v6195 = vadd.f32 %v6147, 1e-05
        %v6196 = vadd.f32 %v6148, 1e-05
        %v6197 = vadd.f32 %v6149, 1e-05
        %v6198 = vadd.f32 %v6150, 1e-05
        %v6199 = vadd.f32 %v6151, 1e-05
        %v6200 = vadd.f32 %v6152, 1e-05
        %v6201 = vadd.f32 %v6153, 1e-05
        %v6202 = vadd.f32 %v6154, 1e-05
        %v6203 = vrsqrt.pop %v6187
        %v6204 = vmul.f32 %v6203, %v6187
        %v6205 = vmul.f32 %v6204, %v6203
        %v6206 = vmul.f32 0.5, %v6205
        %v6207 = vsub.f32 1.5, %v6206
        %v6208 = vmul.f32 %v6203, %v6207
        %vm6209 = vweird.f32 %v6187
        %vm6210 = vweird.f32 %v6203
        %vm6211 = vmor %vm6209, %vm6210
        %v6212 = vsel %vm6211, %v6203, %v6208
        %v6213 = vrsqrt.pop %v6188
        %v6214 = vmul.f32 %v6213, %v6188
        %v6215 = vmul.f32 %v6214, %v6213
        %v6216 = vmul.f32 0.5, %v6215
        %v6217 = vsub.f32 1.5, %v6216
        %v6218 = vmul.f32 %v6213, %v6217
        %vm6219 = vweird.f32 %v6188
        %vm6220 = vweird.f32 %v6213
        %vm6221 = vmor %vm6219, %vm6220
        %v6222 = vsel %vm6221, %v6213, %v6218
        %v6223 = vrsqrt.pop %v6189
        %v6224 = vmul.f32 %v6223, %v6189
        %v6225 = vmul.f32 %v6224, %v6223
        %v6226 = vmul.f32 0.5, %v6225
        %v6227 = vsub.f32 1.5, %v6226
        %v6228 = vmul.f32 %v6223, %v6227
        %vm6229 = vweird.f32 %v6189
        %vm6230 = vweird.f32 %v6223
        %vm6231 = vmor %vm6229, %vm6230
        %v6232 = vsel %vm6231, %v6223, %v6228
        %v6233 = vrsqrt.pop %v6190
        %v6234 = vmul.f32 %v6233, %v6190
        %v6235 = vmul.f32 %v6234, %v6233
        %v6236 = vmul.f32 0.5, %v6235
        %v6237 = vsub.f32 1.5, %v6236
        %v6238 = vmul.f32 %v6233, %v6237
        %vm6239 = vweird.f32 %v6190
        %vm6240 = vweird.f32 %v6233
        %vm6241 = vmor %vm6239, %vm6240
        %v6242 = vsel %vm6241, %v6233, %v6238
        %v6243 = vrsqrt.pop %v6191
        %v6244 = vmul.f32 %v6243, %v6191
        %v6245 = vmul.f32 %v6244, %v6243
        %v6246 = vmul.f32 0.5, %v6245
        %v6247 = vsub.f32 1.5, %v6246
        %v6248 = vmul.f32 %v6243, %v6247
        %vm6249 = vweird.f32 %v6191
        %vm6250 = vweird.f32 %v6243
        %vm6251 = vmor %vm6249, %vm6250
        %v6252 = vsel %vm6251, %v6243, %v6248
        %v6253 = vrsqrt.pop %v6192
        %v6254 = vmul.f32 %v6253, %v6192
        %v6255 = vmul.f32 %v6254, %v6253
        %v6256 = vmul.f32 0.5, %v6255
        %v6257 = vsub.f32 1.5, %v6256
        %v6258 = vmul.f32 %v6253, %v6257
        %vm6259 = vweird.f32 %v6192
        %vm6260 = vweird.f32 %v6253
        %vm6261 = vmor %vm6259, %vm6260
        %v6262 = vsel %vm6261, %v6253, %v6258
        %v6263 = vrsqrt.pop %v6193
        %v6264 = vmul.f32 %v6263, %v6193
        %v6265 = vmul.f32 %v6264, %v6263
        %v6266 = vmul.f32 0.5, %v6265
        %v6267 = vsub.f32 1.5, %v6266
        %v6268 = vmul.f32 %v6263, %v6267
        %vm6269 = vweird.f32 %v6193
        %vm6270 = vweird.f32 %v6263
        %vm6271 = vmor %vm6269, %vm6270
        %v6272 = vsel %vm6271, %v6263, %v6268
        %v6273 = vrsqrt.pop %v6194
        %v6274 = vmul.f32 %v6273, %v6194
        %v6275 = vmul.f32 %v6274, %v6273
        %v6276 = vmul.f32 0.5, %v6275
        %v6277 = vsub.f32 1.5, %v6276
        %v6278 = vmul.f32 %v6273, %v6277
        %vm6279 = vweird.f32 %v6194
        %vm6280 = vweird.f32 %v6273
        %vm6281 = vmor %vm6279, %vm6280
        %v6282 = vsel %vm6281, %v6273, %v6278
        %v6283 = vrsqrt.pop %v6195
        %v6284 = vmul.f32 %v6283, %v6195
        %v6285 = vmul.f32 %v6284, %v6283
        %v6286 = vmul.f32 0.5, %v6285
        %v6287 = vsub.f32 1.5, %v6286
        %v6288 = vmul.f32 %v6283, %v6287
        %vm6289 = vweird.f32 %v6195
        %vm6290 = vweird.f32 %v6283
        %vm6291 = vmor %vm6289, %vm6290
        %v6292 = vsel %vm6291, %v6283, %v6288
        %v6293 = vrsqrt.pop %v6196
        %v6294 = vmul.f32 %v6293, %v6196
        %v6295 = vmul.f32 %v6294, %v6293
        %v6296 = vmul.f32 0.5, %v6295
        %v6297 = vsub.f32 1.5, %v6296
        %v6298 = vmul.f32 %v6293, %v6297
        %vm6299 = vweird.f32 %v6196
        %vm6300 = vweird.f32 %v6293
        %vm6301 = vmor %vm6299, %vm6300
        %v6302 = vsel %vm6301, %v6293, %v6298
        %v6303 = vrsqrt.pop %v6197
        %v6304 = vmul.f32 %v6303, %v6197
        %v6305 = vmul.f32 %v6304, %v6303
        %v6306 = vmul.f32 0.5, %v6305
        %v6307 = vsub.f32 1.5, %v6306
        %v6308 = vmul.f32 %v6303, %v6307
        %vm6309 = vweird.f32 %v6197
        %vm6310 = vweird.f32 %v6303
        %vm6311 = vmor %vm6309, %vm6310
        %v6312 = vsel %vm6311, %v6303, %v6308
        %v6313 = vrsqrt.pop %v6198
        %v6314 = vmul.f32 %v6313, %v6198
        %v6315 = vmul.f32 %v6314, %v6313
        %v6316 = vmul.f32 0.5, %v6315
        %v6317 = vsub.f32 1.5, %v6316
        %v6318 = vmul.f32 %v6313, %v6317
        %vm6319 = vweird.f32 %v6198
        %vm6320 = vweird.f32 %v6313
        %vm6321 = vmor %vm6319, %vm6320
        %v6322 = vsel %vm6321, %v6313, %v6318
        %v6323 = vrsqrt.pop %v6199
        %v6324 = vmul.f32 %v6323, %v6199
        %v6325 = vmul.f32 %v6324, %v6323
        %v6326 = vmul.f32 0.5, %v6325
        %v6327 = vsub.f32 1.5, %v6326
        %v6328 = vmul.f32 %v6323, %v6327
        %vm6329 = vweird.f32 %v6199
        %vm6330 = vweird.f32 %v6323
        %vm6331 = vmor %vm6329, %vm6330
        %v6332 = vsel %vm6331, %v6323, %v6328
        %v6333 = vrsqrt.pop %v6200
        %v6334 = vmul.f32 %v6333, %v6200
        %v6335 = vmul.f32 %v6334, %v6333
        %v6336 = vmul.f32 0.5, %v6335
        %v6337 = vsub.f32 1.5, %v6336
        %v6338 = vmul.f32 %v6333, %v6337
        %vm6339 = vweird.f32 %v6200
        %vm6340 = vweird.f32 %v6333
        %vm6341 = vmor %vm6339, %vm6340
        %v6342 = vsel %vm6341, %v6333, %v6338
        %v6343 = vrsqrt.pop %v6201
        %v6344 = vmul.f32 %v6343, %v6201
        %v6345 = vmul.f32 %v6344, %v6343
        %v6346 = vmul.f32 0.5, %v6345
        %v6347 = vsub.f32 1.5, %v6346
        %v6348 = vmul.f32 %v6343, %v6347
        %vm6349 = vweird.f32 %v6201
        %vm6350 = vweird.f32 %v6343
        %vm6351 = vmor %vm6349, %vm6350
        %v6352 = vsel %vm6351, %v6343, %v6348
        %v6353 = vrsqrt.pop %v6202
        %v6354 = vmul.f32 %v6353, %v6202
        %v6355 = vmul.f32 %v6354, %v6353
        %v6356 = vmul.f32 0.5, %v6355
        %v6357 = vsub.f32 1.5, %v6356
        %v6358 = vmul.f32 %v6353, %v6357
        %vm6359 = vweird.f32 %v6202
        %vm6360 = vweird.f32 %v6353
        %vm6361 = vmor %vm6359, %vm6360
        %v6362 = vsel %vm6361, %v6353, %v6358
        %v6363 = vmul.f32 %v6155, %v6212
        %v6364 = vmul.f32 %v6156, %v6212
        %v6365 = vmul.f32 %v6157, %v6222
        %v6366 = vmul.f32 %v6158, %v6222
        %v6367 = vmul.f32 %v6159, %v6232
        %v6368 = vmul.f32 %v6160, %v6232
        %v6369 = vmul.f32 %v6161, %v6242
        %v6370 = vmul.f32 %v6162, %v6242
        %v6371 = vmul.f32 %v6163, %v6252
        %v6372 = vmul.f32 %v6164, %v6252
        %v6373 = vmul.f32 %v6165, %v6262
        %v6374 = vmul.f32 %v6166, %v6262
        %v6375 = vmul.f32 %v6167, %v6272
        %v6376 = vmul.f32 %v6168, %v6272
        %v6377 = vmul.f32 %v6169, %v6282
        %v6378 = vmul.f32 %v6170, %v6282
        %v6379 = vmul.f32 %v6171, %v6292
        %v6380 = vmul.f32 %v6172, %v6292
        %v6381 = vmul.f32 %v6173, %v6302
        %v6382 = vmul.f32 %v6174, %v6302
        %v6383 = vmul.f32 %v6175, %v6312
        %v6384 = vmul.f32 %v6176, %v6312
        %v6385 = vmul.f32 %v6177, %v6322
        %v6386 = vmul.f32 %v6178, %v6322
        %v6387 = vmul.f32 %v6179, %v6332
        %v6388 = vmul.f32 %v6180, %v6332
        %v6389 = vmul.f32 %v6181, %v6342
        %v6390 = vmul.f32 %v6182, %v6342
        %v6391 = vmul.f32 %v6183, %v6352
        %v6392 = vmul.f32 %v6184, %v6352
        %v6393 = vmul.f32 %v6185, %v6362
        %v6394 = vmul.f32 %v6186, %v6362
        %v6396 = vperm.slane %v408, 0
        %v6397 = vperm.slane %v408, 1
        %v6400 = vmul.f32 %v6363, %v6396
        %v6401 = vmul.f32 %v6364, %v6397
        %v6402 = vmul.f32 %v6365, %v6396
        %v6403 = vmul.f32 %v6366, %v6397
        %v6404 = vmul.f32 %v6367, %v6396
        %v6405 = vmul.f32 %v6368, %v6397
        %v6406 = vmul.f32 %v6369, %v6396
        %v6407 = vmul.f32 %v6370, %v6397
        %v6408 = vmul.f32 %v6371, %v6396
        %v6409 = vmul.f32 %v6372, %v6397
        %v6410 = vmul.f32 %v6373, %v6396
        %v6411 = vmul.f32 %v6374, %v6397
        %v6412 = vmul.f32 %v6375, %v6396
        %v6413 = vmul.f32 %v6376, %v6397
        %v6414 = vmul.f32 %v6377, %v6396
        %v6415 = vmul.f32 %v6378, %v6397
        %v6416 = vmul.f32 %v6379, %v6396
        %v6417 = vmul.f32 %v6380, %v6397
        %v6418 = vmul.f32 %v6381, %v6396
        %v6419 = vmul.f32 %v6382, %v6397
        %v6420 = vmul.f32 %v6383, %v6396
        %v6421 = vmul.f32 %v6384, %v6397
        %v6422 = vmul.f32 %v6385, %v6396
        %v6423 = vmul.f32 %v6386, %v6397
        %v6424 = vmul.f32 %v6387, %v6396
        %v6425 = vmul.f32 %v6388, %v6397
        %v6426 = vmul.f32 %v6389, %v6396
        %v6427 = vmul.f32 %v6390, %v6397
        %v6428 = vmul.f32 %v6391, %v6396
        %v6429 = vmul.f32 %v6392, %v6397
        %v6430 = vmul.f32 %v6393, %v6396
        %v6431 = vmul.f32 %v6394, %v6397
        %v6433 = vperm.slane %v409, 0
        %v6434 = vperm.slane %v409, 1
        %v6437 = vadd.f32 %v6400, %v6433
        %v6438 = vadd.f32 %v6401, %v6434
        %v6439 = vadd.f32 %v6402, %v6433
        %v6440 = vadd.f32 %v6403, %v6434
        %v6441 = vadd.f32 %v6404, %v6433
        %v6442 = vadd.f32 %v6405, %v6434
        %v6443 = vadd.f32 %v6406, %v6433
        %v6444 = vadd.f32 %v6407, %v6434
        %v6445 = vadd.f32 %v6408, %v6433
        %v6446 = vadd.f32 %v6409, %v6434
        %v6447 = vadd.f32 %v6410, %v6433
        %v6448 = vadd.f32 %v6411, %v6434
        %v6449 = vadd.f32 %v6412, %v6433
        %v6450 = vadd.f32 %v6413, %v6434
        %v6451 = vadd.f32 %v6414, %v6433
        %v6452 = vadd.f32 %v6415, %v6434
        %v6453 = vadd.f32 %v6416, %v6433
        %v6454 = vadd.f32 %v6417, %v6434
        %v6455 = vadd.f32 %v6418, %v6433
        %v6456 = vadd.f32 %v6419, %v6434
        %v6457 = vadd.f32 %v6420, %v6433
        %v6458 = vadd.f32 %v6421, %v6434
        %v6459 = vadd.f32 %v6422, %v6433
        %v6460 = vadd.f32 %v6423, %v6434
        %v6461 = vadd.f32 %v6424, %v6433
        %v6462 = vadd.f32 %v6425, %v6434
        %v6463 = vadd.f32 %v6426, %v6433
        %v6464 = vadd.f32 %v6427, %v6434
        %v6465 = vadd.f32 %v6428, %v6433
        %v6466 = vadd.f32 %v6429, %v6434
        %v6467 = vadd.f32 %v6430, %v6433
        %v6468 = vadd.f32 %v6431, %v6434
        %v6469 = vadd.f32 %v6437, %v5474
        %v6470 = vadd.f32 %v6438, %v5475
        %v6471 = vadd.f32 %v6439, %v5476
        %v6472 = vadd.f32 %v6440, %v5477
        %v6473 = vadd.f32 %v6441, %v5478
        %v6474 = vadd.f32 %v6442, %v5479
        %v6475 = vadd.f32 %v6443, %v5480
        %v6476 = vadd.f32 %v6444, %v5481
        %v6477 = vadd.f32 %v6445, %v5482
        %v6478 = vadd.f32 %v6446, %v5483
        %v6479 = vadd.f32 %v6447, %v5484
        %v6480 = vadd.f32 %v6448, %v5485
        %v6481 = vadd.f32 %v6449, %v5486
        %v6482 = vadd.f32 %v6450, %v5487
        %v6483 = vadd.f32 %v6451, %v5488
        %v6484 = vadd.f32 %v6452, %v5489
        %v6485 = vadd.f32 %v6453, %v5490
        %v6486 = vadd.f32 %v6454, %v5491
        %v6487 = vadd.f32 %v6455, %v5492
        %v6488 = vadd.f32 %v6456, %v5493
        %v6489 = vadd.f32 %v6457, %v5494
        %v6490 = vadd.f32 %v6458, %v5495
        %v6491 = vadd.f32 %v6459, %v5496
        %v6492 = vadd.f32 %v6460, %v5497
        %v6493 = vadd.f32 %v6461, %v5498
        %v6494 = vadd.f32 %v6462, %v5499
        %v6495 = vadd.f32 %v6463, %v5500
        %v6496 = vadd.f32 %v6464, %v5501
        %v6497 = vadd.f32 %v6465, %v5502
        %v6498 = vadd.f32 %v6466, %v5503
        %v6499 = vadd.f32 %v6467, %v5504
        %v6500 = vadd.f32 %v6468, %v5505
        %v6501 = vpack.c.bf16 %v6471, %v6469
        %v6502 = vpack.c.bf16 %v6472, %v6470
        %v6503 = vpack.c.bf16 %v6475, %v6473
        %v6504 = vpack.c.bf16 %v6476, %v6474
        %v6505 = vpack.c.bf16 %v6479, %v6477
        %v6506 = vpack.c.bf16 %v6480, %v6478
        %v6507 = vpack.c.bf16 %v6483, %v6481
        %v6508 = vpack.c.bf16 %v6484, %v6482
        %v6509 = vpack.c.bf16 %v6487, %v6485
        %v6510 = vpack.c.bf16 %v6488, %v6486
        %v6511 = vpack.c.bf16 %v6491, %v6489
        %v6512 = vpack.c.bf16 %v6492, %v6490
        %v6513 = vpack.c.bf16 %v6495, %v6493
        %v6514 = vpack.c.bf16 %v6496, %v6494
        %v6515 = vpack.c.bf16 %v6499, %v6497
        %v6516 = vpack.c.bf16 %v6500, %v6498
        %v6517 = vld [vmem:[#allocation11] sm:$0xf]
        %v6518 = vld [vmem:[#allocation11 + $0x4] sm:$0xf]
        %v6519 = vld [vmem:[#allocation11 + $0x8] sm:$0xf]
        %v6520 = vld [vmem:[#allocation11 + $0xc] sm:$0xf]
        %v6521 = vld [vmem:[#allocation11 + $0x10] sm:$0xf]
        %v6522 = vld [vmem:[#allocation11 + $0x14] sm:$0xf]
        %v6523 = vld [vmem:[#allocation11 + $0x18] sm:$0xf]
        %v6524 = vld [vmem:[#allocation11 + $0x1c] sm:$0xf]
        %v6525 = vld [vmem:[#allocation11 + $0x20] sm:$0xf]
        %v6526 = vld [vmem:[#allocation11 + $0x24] sm:$0xf]
        %v6527 = vld [vmem:[#allocation11 + $0x28] sm:$0xf]
        %v6528 = vld [vmem:[#allocation11 + $0x2c] sm:$0xf]
        %v6529 = vld [vmem:[#allocation11 + $0x30] sm:$0xf]
        %v6530 = vld [vmem:[#allocation11 + $0x34] sm:$0xf]
        %v6531 = vld [vmem:[#allocation11 + $0x38] sm:$0xf]
        %v6532 = vld [vmem:[#allocation11 + $0x3c] sm:$0xf]
        %v6533 = vld [vmem:[#allocation11 + $0x40] sm:$0xf]
        %v6534 = vld [vmem:[#allocation11 + $0x44] sm:$0xf]
        %v6535 = vld [vmem:[#allocation11 + $0x48] sm:$0xf]
        %v6536 = vld [vmem:[#allocation11 + $0x4c] sm:$0xf]
        %v6537 = vld [vmem:[#allocation11 + $0x50] sm:$0xf]
        %v6538 = vld [vmem:[#allocation11 + $0x54] sm:$0xf]
        %v6539 = vld [vmem:[#allocation11 + $0x58] sm:$0xf]
        %v6540 = vld [vmem:[#allocation11 + $0x5c] sm:$0xf]
        %v6541 = vld [vmem:[#allocation11 + $0x60] sm:$0xf]
        %v6542 = vld [vmem:[#allocation11 + $0x64] sm:$0xf]
        %v6543 = vld [vmem:[#allocation11 + $0x68] sm:$0xf]
        %v6544 = vld [vmem:[#allocation11 + $0x6c] sm:$0xf]
        %v6545 = vld [vmem:[#allocation11 + $0x70] sm:$0xf]
        %v6546 = vld [vmem:[#allocation11 + $0x74] sm:$0xf]
        %v6547 = vld [vmem:[#allocation11 + $0x78] sm:$0xf]
        %v6548 = vld [vmem:[#allocation11 + $0x7c] sm:$0xf]
        %v6550 = vperm.slane %v410, 0
        %v6584 = vunpack.c.l.b16 %v6517
        %v6585 = vunpack.c.l.b16 %v6518
        %v6586 = vunpack.c.l.b16 %v6519
        %v6587 = vunpack.c.l.b16 %v6520
        %v6588 = vunpack.c.l.b16 %v6521
        %v6589 = vunpack.c.l.b16 %v6522
        %v6590 = vunpack.c.l.b16 %v6523
        %v6591 = vunpack.c.l.b16 %v6524
        %v6592 = vunpack.c.l.b16 %v6525
        %v6593 = vunpack.c.l.b16 %v6526
        %v6594 = vunpack.c.l.b16 %v6527
        %v6595 = vunpack.c.l.b16 %v6528
        %v6596 = vunpack.c.l.b16 %v6529
        %v6597 = vunpack.c.l.b16 %v6530
        %v6598 = vunpack.c.l.b16 %v6531
        %v6599 = vunpack.c.l.b16 %v6532
        %v6600 = vunpack.c.l.b16 %v6533
        %v6601 = vunpack.c.l.b16 %v6534
        %v6602 = vunpack.c.l.b16 %v6535
        %v6603 = vunpack.c.l.b16 %v6536
        %v6604 = vunpack.c.l.b16 %v6537
        %v6605 = vunpack.c.l.b16 %v6538
        %v6606 = vunpack.c.l.b16 %v6539
        %v6607 = vunpack.c.l.b16 %v6540
        %v6608 = vunpack.c.l.b16 %v6541
        %v6609 = vunpack.c.l.b16 %v6542
        %v6610 = vunpack.c.l.b16 %v6543
        %v6611 = vunpack.c.l.b16 %v6544
        %v6612 = vunpack.c.l.b16 %v6545
        %v6613 = vunpack.c.l.b16 %v6546
        %v6614 = vunpack.c.l.b16 %v6547
        %v6615 = vunpack.c.l.b16 %v6548
        %v6616 = vpack.c.b16 %v6585, %v6584
        %v6617 = vpack.c.b16 %v6587, %v6586
        %v6618 = vpack.c.b16 %v6589, %v6588
        %v6619 = vpack.c.b16 %v6591, %v6590
        %v6620 = vpack.c.b16 %v6593, %v6592
        %v6621 = vpack.c.b16 %v6595, %v6594
        %v6622 = vpack.c.b16 %v6597, %v6596
        %v6623 = vpack.c.b16 %v6599, %v6598
        %v6624 = vpack.c.b16 %v6601, %v6600
        %v6625 = vpack.c.b16 %v6603, %v6602
        %v6626 = vpack.c.b16 %v6605, %v6604
        %v6627 = vpack.c.b16 %v6607, %v6606
        %v6628 = vpack.c.b16 %v6609, %v6608
        %v6629 = vpack.c.b16 %v6611, %v6610
        %v6630 = vpack.c.b16 %v6613, %v6612
        %v6631 = vpack.c.b16 %v6615, %v6614
        %6648 = vmatpush.bf16.msra.mxu0 %v6623
        %6649 = vmatpush.bf16.msra.mxu0 %v6622
        %6650 = vmatpush.bf16.msra.mxu0 %v6621
        %6651 = vmatpush.bf16.msra.mxu0 %v6620
        %6652 = vmatpush.bf16.msra.mxu0 %v6619
        %6653 = vmatpush.bf16.msra.mxu0 %v6618
        %6654 = vmatpush.bf16.msra.mxu0 %v6617
        %6655 = vmatpush.bf16.msra.mxu0 %v6616
        %6656 = vmatmul.bf16.gmra.mxu0 %v6501
        %v6657 = vpop.f32.mrf.mxu0
        %v6658 = vadd.f32 %v6550, %v6657
        %v6659 = vpop.f32.mrf.mxu0
        %v6660 = vadd.f32 %v6550, %v6659
        %6661 = vmatmul.bf16.gmra.mxu0 %v6503
        %v6662 = vpop.f32.mrf.mxu0
        %v6663 = vadd.f32 %v6550, %v6662
        %v6664 = vpop.f32.mrf.mxu0
        %v6665 = vadd.f32 %v6550, %v6664
        %6666 = vmatmul.bf16.gmra.mxu0 %v6505
        %v6667 = vpop.f32.mrf.mxu0
        %v6668 = vadd.f32 %v6550, %v6667
        %v6669 = vpop.f32.mrf.mxu0
        %v6670 = vadd.f32 %v6550, %v6669
        %6671 = vmatmul.bf16.gmra.mxu0 %v6507
        %v6672 = vpop.f32.mrf.mxu0
        %v6673 = vadd.f32 %v6550, %v6672
        %v6674 = vpop.f32.mrf.mxu0
        %v6675 = vadd.f32 %v6550, %v6674
        %6676 = vmatmul.bf16.gmra.mxu0 %v6509
        %v6677 = vpop.f32.mrf.mxu0
        %v6678 = vadd.f32 %v6550, %v6677
        %v6679 = vpop.f32.mrf.mxu0
        %v6680 = vadd.f32 %v6550, %v6679
        %6681 = vmatmul.bf16.gmra.mxu0 %v6511
        %v6682 = vpop.f32.mrf.mxu0
        %v6683 = vadd.f32 %v6550, %v6682
        %v6684 = vpop.f32.mrf.mxu0
        %v6685 = vadd.f32 %v6550, %v6684
        %6686 = vmatmul.bf16.gmra.mxu0 %v6513
        %v6687 = vpop.f32.mrf.mxu0
        %v6688 = vadd.f32 %v6550, %v6687
        %v6689 = vpop.f32.mrf.mxu0
        %v6690 = vadd.f32 %v6550, %v6689
        %6691 = vmatmul.bf16.gmra.mxu0 %v6515
        %v6692 = vpop.f32.mrf.mxu0
        %v6693 = vadd.f32 %v6550, %v6692
        %v6694 = vpop.f32.mrf.mxu0
        %v6695 = vadd.f32 %v6550, %v6694
        %6696 = vdwg.mxu0
        %6697 = vmatpush.bf16.msra.mxu0 %v6631
        %6698 = vmatpush.bf16.msra.mxu0 %v6630
        %6699 = vmatpush.bf16.msra.mxu0 %v6629
        %6700 = vmatpush.bf16.msra.mxu0 %v6628
        %6701 = vmatpush.bf16.msra.mxu0 %v6627
        %6702 = vmatpush.bf16.msra.mxu0 %v6626
        %6703 = vmatpush.bf16.msra.mxu0 %v6625
        %6704 = vmatpush.bf16.msra.mxu0 %v6624
        %6705 = vmatmul.bf16.gmra.mxu0 %v6502
        %v6706 = vpop.f32.mrf.mxu0
        %v6707 = vadd.f32 %v6658, %v6706
        %v6708 = vpop.f32.mrf.mxu0
        %v6709 = vadd.f32 %v6660, %v6708
        %6710 = vmatmul.bf16.gmra.mxu0 %v6504
        %v6711 = vpop.f32.mrf.mxu0
        %v6712 = vadd.f32 %v6663, %v6711
        %v6713 = vpop.f32.mrf.mxu0
        %v6714 = vadd.f32 %v6665, %v6713
        %6715 = vmatmul.bf16.gmra.mxu0 %v6506
        %v6716 = vpop.f32.mrf.mxu0
        %v6717 = vadd.f32 %v6668, %v6716
        %v6718 = vpop.f32.mrf.mxu0
        %v6719 = vadd.f32 %v6670, %v6718
        %6720 = vmatmul.bf16.gmra.mxu0 %v6508
        %v6721 = vpop.f32.mrf.mxu0
        %v6722 = vadd.f32 %v6673, %v6721
        %v6723 = vpop.f32.mrf.mxu0
        %v6724 = vadd.f32 %v6675, %v6723
        %6725 = vmatmul.bf16.gmra.mxu0 %v6510
        %v6726 = vpop.f32.mrf.mxu0
        %v6727 = vadd.f32 %v6678, %v6726
        %v6728 = vpop.f32.mrf.mxu0
        %v6729 = vadd.f32 %v6680, %v6728
        %6730 = vmatmul.bf16.gmra.mxu0 %v6512
        %v6731 = vpop.f32.mrf.mxu0
        %v6732 = vadd.f32 %v6683, %v6731
        %v6733 = vpop.f32.mrf.mxu0
        %v6734 = vadd.f32 %v6685, %v6733
        %6735 = vmatmul.bf16.gmra.mxu0 %v6514
        %v6736 = vpop.f32.mrf.mxu0
        %v6737 = vadd.f32 %v6688, %v6736
        %v6738 = vpop.f32.mrf.mxu0
        %v6739 = vadd.f32 %v6690, %v6738
        %6740 = vmatmul.bf16.gmra.mxu0 %v6516
        %v6741 = vpop.f32.mrf.mxu0
        %v6742 = vadd.f32 %v6693, %v6741
        %v6743 = vpop.f32.mrf.mxu0
        %v6744 = vadd.f32 %v6695, %v6743
        %6745 = vdwg.mxu0
        %6746 = vst [vmem:[%s395] sm:$0xff] %v6707
        %6747 = vst [vmem:[%s395 + $0x8] sm:$0xff] %v6709
        %6748 = vst [vmem:[%s395 + $0x10] sm:$0xff] %v6712
        %6749 = vst [vmem:[%s395 + $0x18] sm:$0xff] %v6714
        %6750 = vst [vmem:[%s395 + $0x20] sm:$0xff] %v6717
        %6751 = vst [vmem:[%s395 + $0x28] sm:$0xff] %v6719
        %6752 = vst [vmem:[%s395 + $0x30] sm:$0xff] %v6722
        %6753 = vst [vmem:[%s395 + $0x38] sm:$0xff] %v6724
        %6754 = vst [vmem:[%s395 + $0x40] sm:$0xff] %v6727
        %6755 = vst [vmem:[%s395 + $0x48] sm:$0xff] %v6729
        %6756 = vst [vmem:[%s395 + $0x50] sm:$0xff] %v6732
        %6757 = vst [vmem:[%s395 + $0x58] sm:$0xff] %v6734
        %6758 = vst [vmem:[%s395 + $0x60] sm:$0xff] %v6737
        %6759 = vst [vmem:[%s395 + $0x68] sm:$0xff] %v6739
        %6760 = vst [vmem:[%s395 + $0x70] sm:$0xff] %v6742
        %6761 = vst [vmem:[%s395 + $0x78] sm:$0xff] %v6744
        %s6762 = sand.u32 %s187, 1
        %s6763 = scalar_lea.sflag [#allocation4], %s6762
        %s6764 = sand.u32 %s187, 1
        %s6765 = smul.addr %s6764, 128
        %s6766 = scalar_lea.vmem [#allocation14], %s6765
        // Predicated region
        $region77: #{tpu_custom_call.1} parent=47 // pred_check
          %p6767 = pneg %p197
        $region78: #{tpu_custom_call.1} parent=47 // pred_check_branch
          %6769 = sbr.rel (%p6767) target = $region80
        $region79: #{tpu_custom_call.1} parent=47 // pred_region
          %s6770 = smul.u32 16, %s27
          %6772 = vsyncadd %s6763, 0
          %s6773 = smul.addr %s6770, 8
          %s6774 = scalar_lea.hbm %s7, %s6773
          %s6775 = sshll.u32 %s6766, 4
          %s6776 = int_to_ptr.vmem [resolvable:$true] %s6775
          %s6777 = sshll.u32 %s6774, 4
          %s6778 = int_to_ptr.hbm [resolvable:$true] %s6777
          %6783 = dma.vmem_to_hbm [thread:$0]  %s6776, 2048, %s6778, %s6763, 128, 128, 8
        $region80: #{tpu_custom_call.1} parent=47 // pred_fallthru
          _
      $region48: #{tpu_custom_call.1} parent=5 // pred_fallthru
        _
      %p6784 = scmp.le.s32.totalorder 2, %s22
      // Predicated region
      $region81: #{tpu_custom_call.1} parent=5 // pred_check
        %p6785 = pneg %p6784
      $region82: #{tpu_custom_call.1} parent=5 // pred_check_branch
        %6787 = sbr.rel (%p6785) target = $region84
      $region83: #{tpu_custom_call.1} parent=5 // pred_region
        %s6788 = ssub.s32 %s22, 2
        // Predicated region
        $region85: #{tpu_custom_call.1} parent=83 // pred_check
          %p6789 = pneg %p203
        $region86: #{tpu_custom_call.1} parent=83 // pred_check_branch
          %6791 = sbr.rel (%p6789) target = $region88
        $region87: #{tpu_custom_call.1} parent=83 // pred_region
          %s6792 = sand.u32 %s188, 1
          %s6793 = scalar_lea.sflag [#allocation4], %s6792
          %s6794 = sand.u32 %s188, 1
          %s6795 = smul.addr %s6794, 128
          %s6796 = scalar_lea.vmem [#allocation14], %s6795
          %6798 = dma.done %s6793, 2048
        $region88: #{tpu_custom_call.1} parent=83 // pred_fallthru
          _
      $region84: #{tpu_custom_call.1} parent=5 // pred_fallthru
        _
    $region6: #{tpu_custom_call.1} parent=1 // loop_footer
      %s26 = sadd.s32 1, %s22
    $region7: #{tpu_custom_call.1} parent=1 // loop_footer_branch
      %21 = sbr.rel target = $region3
    $region8: #{tpu_custom_call.1} parent=1 // loop_exit
      _
    %6799 = vsyncpa [#allocation3], 1
    %s6800 = scalar_lea.sflag [#allocation3], 1
    %6801 = vsyncpa %s6800, 1
    %6802 = vsyncpa [#allocation6], 1
    %6803 = vsyncpa [#allocation9], 1
    %6804 = vsyncpa [#allocation12], 1
    %6805 = vsyncpa [#allocation4], 1
    %s6806 = scalar_lea.sflag [#allocation4], 1
    %6807 = vsyncpa %s6806, 1

</llo_original>
